<compile_context>
chip_gen: v7x
topology: tpu7x:2x2x1
jax: 0.10.0
libtpu: 0.0.40
codegen_flags: <defaults>
</compile_context>

<pallas_src>
import jax
import jax.numpy as jnp
from jax import lax
from jax.experimental import pallas as pl
from jax.experimental.pallas import tpu as pltpu

# ----------------------------- problem sizes --------------------------------
M = 3            # num_metapath
N = 16           # nodes per graph sample (src set == dst set)
D_IN = 32        # in_size
H = 2            # layer_num_heads
F = 16           # out_size per head
HF = H * F       # 32, flattened per-node embedding
HID = 128        # SemanticAttention hidden size (DGL default) -> lane-dense
G = M * H        # 6 (metapath, head) groups
GP = 8           # padded group count for the folded el/er columns
NEG_SLOPE = 0.2  # GATConv leaky_relu negative slope (DGL default)
NEG_INF = -1e30

SPG = 4          # graph samples per grid step -> output lanes SPG*HF = 128
MD = M * D_IN    # 96
XW = MD + M * N  # 144 = [h (96) | adj (48)] per node row
PROWS = MD + HF + 3   # 131 parameter-slab rows


# --------------------------- fused HANLayer kernel ---------------------------
def han_kernel(x_ref, p_ref, o_ref):
    # ---- parameter slab (shared across batch), sliced once ----
    p = p_ref[...]                                  # (131, 128)
    w_aug = p[0:MD, :]                              # (96, 128): [W_blkdiag | Wl | Wr | 0]
    w1 = p[MD:MD + HF, :]                           # (32, 128) semantic proj weight
    b1 = p[MD + HF:MD + HF + 1, :]                  # (1, 128)  semantic proj bias
    w2r = p[MD + HF + 1:MD + HF + 2, :]             # (1, 128)  semantic w2^T
    bias_all = p[MD + HF + 2:MD + HF + 3, :]        # (1, 128)  GAT biases, lanes m*HF..

    # ---- per-grid-step data: SPG samples stacked along sublanes ----
    x = x_ref[0]                                    # (SPG*N, 144)
    h_all = x[:, 0:MD]                              # (64, 96)  node features
    adj_all = x[:, MD:XW]                           # (64, 48)  adj[v, m*N+u] in {0,1}

    # One lane-dense bf16 MXU op: fc projection AND all attention scores
    # (attn_l / attn_r were folded into w_aug columns 96.. in the wrapper).
    zext = jnp.dot(h_all.astype(jnp.bfloat16), w_aug.astype(jnp.bfloat16),
                   preferred_element_type=jnp.float32)          # (64, 128)
    z_all = zext[:, 0:MD]                           # (64, 96): group g lanes [g*F,(g+1)*F)
    el_all = zext[:, MD:MD + GP]                    # (64, 8):  el[u, g] = <z_u, a_l>
    er_all = zext[:, MD + GP:MD + 2 * GP]           # (64, 8):  er[v, g] = <z_v, a_r>

    # Re-orient el so the node index sits on lanes: el_t[g, s*N+u] = el_all[s*N+u, g].
    # Done as a single tiny q@k.T-style dot (same dimension-number pattern as the
    # MXU-friendly transposed-RHS matmul), replacing 24 per-head MXU broadcasts.
    ri = lax.broadcasted_iota(jnp.int32, (GP, GP), 0)
    ci = lax.broadcasted_iota(jnp.int32, (GP, GP), 1)
    eye_g = (ri == ci).astype(jnp.float32)          # (8, 8)
    el_t = lax.dot_general(eye_g, el_all, (((1,), (1,)), ((), ())),
                           preferred_element_type=jnp.float32)   # (8, 64)

    # ---- GATConv per (sample, metapath): edge softmax + aggregation ----
    rst_blocks = []                                 # SPG*M blocks of (N, HF), order (s, m)
    for s in range(SPG):                            # unrolled: SPG = 4
        r0 = s * N
        z_s = z_all[r0:r0 + N, :]                   # (16, 96)
        er_s = er_all[r0:r0 + N, :]                 # (16, 8)
        adj_s = adj_all[r0:r0 + N, :]               # (16, 48)
        el_s = el_t[:, r0:r0 + N]                   # (8, 16)
        for m in range(M):                          # unrolled: M = 3
            edge = adj_s[:, m * N:(m + 1) * N] > 0.0            # (16, 16) [dst v, src u]
            head_outs = []
            for hd in range(H):                     # unrolled: H = 2
                g = m * H + hd
                zh = z_s[:, g * F:(g + 1) * F]                  # (16, 16)
                e = er_s[:, g:g + 1] + el_s[g:g + 1, :]         # (16,1)+(1,16) -> (16,16)
                e = jnp.where(e > 0, e, NEG_SLOPE * e)          # leaky_relu
                e = jnp.where(edge, e, NEG_INF)                 # mask non-edges
                e_max = jnp.max(e, axis=-1, keepdims=True)
                pexp = jnp.where(edge, jnp.exp(e - e_max), 0.0)
                denom = jnp.sum(pexp, axis=-1, keepdims=True)
                # zero in-degree -> alpha = 0 (allow_zero_in_degree=True semantics)
                alpha = pexp * pl.reciprocal(jnp.maximum(denom, 1e-30), approx=True)
                head_outs.append(jnp.dot(alpha, zh, preferred_element_type=jnp.float32))
            rst = jnp.concatenate(head_outs, axis=-1)           # flatten(1): (16, 32)
            rst = rst + bias_all[:, m * HF:(m + 1) * HF]
            # ELU (overflow-safe: exp only sees clamped negatives)
            rst = jnp.where(rst > 0, rst, jnp.exp(jnp.minimum(rst, 0.0)) - 1.0)
            rst_blocks.append(rst)

    # ---- SemanticAttention, hoisted: ONE matmul + ONE tanh for all blocks ----
    slab = jnp.concatenate(rst_blocks, axis=0)                   # (SPG*M*N, HF) = (192, 32)
    proj = jnp.tanh(jnp.dot(slab.astype(jnp.bfloat16), w1.astype(jnp.bfloat16),
                            preferred_element_type=jnp.float32) + b1)   # (192, 128)
    tcol = jnp.sum(proj * w2r, axis=-1, keepdims=True) * (1.0 / N)      # (192, 1)

    # per-sample metapath softmax + weighted sum, packed lane-dense output
    sample_outs = []
    for s in range(SPG):
        scores = [jnp.sum(tcol[(s * M + m) * N:(s * M + m + 1) * N, :],
                          axis=0, keepdims=True) for m in range(M)]     # (1,1) each
        smax = scores[0]
        for m in range(1, M):
            smax = jnp.maximum(smax, scores[m])
        exps = [jnp.exp(sc - smax) for sc in scores]
        tot = exps[0]
        for m in range(1, M):
            tot = tot + exps[m]
        inv = pl.reciprocal(tot, approx=True)
        acc = (exps[0] * inv) * rst_blocks[s * M + 0]
        for m in range(1, M):
            acc = acc + (exps[m] * inv) * rst_blocks[s * M + m]
        sample_outs.append(acc)                                  # (16, 32)

    # lane-dense store: (16, SPG*HF) = (16, 128), one unmasked full-width write
    o_ref[0] = jnp.concatenate(sample_outs, axis=-1)


# --------------------------------- wrapper -----------------------------------
def _pack_params(W, attn_l, attn_r, bias, w1, b1, w2):
    """All HANLayer parameters -> one lane-dense (131, 128) f32 slab."""
    # block-diagonal fc weight (per-metapath GATConv fc)
    W_bd = jnp.zeros((MD, M * HF), jnp.float32)
    for m in range(M):
        W_bd = W_bd.at[m * D_IN:(m + 1) * D_IN, m * HF:(m + 1) * HF].set(W[m])
    # fold attn_l / attn_r into the fc weight: Wl[:, g] = W[:, g-block] @ a_l[g]
    w3 = W_bd.reshape(MD, G, F)
    Wl = jnp.einsum('dgf,gf->dg', w3, attn_l.reshape(G, F))      # (96, 6)
    Wr = jnp.einsum('dgf,gf->dg', w3, attn_r.reshape(G, F))      # (96, 6)
    pad_g = jnp.zeros((MD, GP - G), jnp.float32)
    pad_rest = jnp.zeros((MD, HID - MD - 2 * GP), jnp.float32)
    w_aug = jnp.concatenate([W_bd, Wl, pad_g, Wr, pad_g, pad_rest], axis=1)  # (96, 128)
    bias_row = jnp.concatenate(
        [bias.reshape(1, M * HF), jnp.zeros((1, HID - M * HF), jnp.float32)], axis=1)
    return jnp.concatenate(
        [w_aug, w1, b1.reshape(1, HID), w2.reshape(1, HID), bias_row], axis=0)  # (131, 128)


@jax.jit
def han_layer_batched(h_stack, adj, W, attn_l, attn_r, bias, w1, b1, w2):
    """h_stack: (B, M, N, D_IN), adj: (B, M, N, N) -> (B, N, HF)."""
    B = h_stack.shape[0]
    assert B % SPG == 0, "batch must be a multiple of SPG"
    Bg = B // SPG

    P = _pack_params(W, attn_l, attn_r, bias, w1, b1, w2)
    # per-sample data slab: [h_0 | h_1 | h_2 | adj_0 | adj_1 | adj_2] per node row
    h_cat = jnp.transpose(h_stack, (0, 2, 1, 3)).reshape(B, N, MD)
    adj_cat = jnp.transpose(adj, (0, 2, 1, 3)).reshape(B, N, M * N)
    X = jnp.concatenate([h_cat, adj_cat], axis=-1).reshape(Bg, SPG * N, XW)

    out_pack = pl.pallas_call(
        han_kernel,
        out_shape=jax.ShapeDtypeStruct((Bg, N, SPG * HF), jnp.float32),
        grid=(Bg,),
        in_specs=[
            pl.BlockSpec((1, SPG * N, XW), lambda i: (i, 0, 0)),   # per-step sample data
            pl.BlockSpec((PROWS, HID), lambda i: (0, 0)),          # shared parameter slab
        ],
        out_specs=pl.BlockSpec((1, N, SPG * HF), lambda i: (i, 0, 0)),
        compiler_params=pltpu.CompilerParams(
            dimension_semantics=("parallel",),       # batch axis shards across TCs (v7x)
            vmem_limit_bytes=32 * 1024 * 1024,       # explicit, well under v7x 64 MiB
        ),
    )(X, P)

    # unpack lane-dense output (Bg, N, SPG*HF) -> (B, N, HF)  (layout plumbing only)
    return out_pack.reshape(Bg, N, SPG, HF).transpose(0, 2, 1, 3).reshape(B, N, HF)


# ----------------------------------- main -------------------------------------
if __name__ == "__main__":
    key = jax.random.PRNGKey(0)
    keys = jax.random.split(key, 10)

    B = 16  # batch of independent graph samples (amortizes the per-call floor)
    h_stack = jax.random.normal(keys[0], (B, M, N, D_IN), jnp.float32)
    adj = jax.random.bernoulli(keys[1], 0.4, (B, M, N, N)).astype(jnp.float32)

    # GATConv parameters (one set per metapath)
    W = 0.1 * jax.random.normal(keys[2], (M, D_IN, HF), jnp.float32)
    attn_l = 0.1 * jax.random.normal(keys[3], (M, H, F), jnp.float32)
    attn_r = 0.1 * jax.random.normal(keys[4], (M, H, F), jnp.float32)
    bias = 0.1 * jax.random.normal(keys[5], (M, HF), jnp.float32)

    # SemanticAttention: Linear(HF, HID) + Tanh + Linear(HID, 1, bias=False)
    w1 = 0.1 * jax.random.normal(keys[6], (HF, HID), jnp.float32)
    b1 = 0.1 * jax.random.normal(keys[7], (HID,), jnp.float32)
    w2 = 0.1 * jax.random.normal(keys[8], (HID, 1), jnp.float32)

    out = han_layer_batched(h_stack, adj, W, attn_l, attn_r, bias, w1, b1, w2)
    out = jax.block_until_ready(out)
    assert out.shape == (B, N, HF) and out.dtype == jnp.float32
    assert bool(jnp.isfinite(out).all())
    print("KERNEL_OK")
</pallas_src>

<mosaic_0001>
module attributes {stable_mosaic.version = 11 : i64} {
  func.func @han_kernel(%arg0: i32, %arg1: memref<1x64x144xf32, #tpu.memory_space<vmem>>, %arg2: memref<131x128xf32, #tpu.memory_space<vmem>>, %arg3: memref<1x16x128xf32, #tpu.memory_space<vmem>>) attributes {dimension_semantics = [#tpu.dimension_semantics<parallel>], iteration_bounds = array<i64: 4>, scalar_prefetch = 0 : i64, scratch_operands = 0 : i64, tpu.core_type = #tpu.core_type<tc>, window_params = [{transform_indices = @transform_0, window_bounds = array<i64: 1, 64, 144>}, {pipeline_mode = #tpu.pipeline_mode<synchronous>, transform_indices = @transform_1, window_bounds = array<i64: 131, 128>}, {transform_indices = @transform_2, window_bounds = array<i64: 1, 16, 128>}]} {
    %c0 = arith.constant 0 : index
    %c0_0 = arith.constant 0 : index
    %0 = vector.load %arg2[%c0, %c0_0] : memref<131x128xf32, #tpu.memory_space<vmem>>, vector<131x128xf32>
    %1 = vector.extract_strided_slice %0 {offsets = [0, 0], sizes = [96, 128], strides = [1, 1]} : vector<131x128xf32> to vector<96x128xf32>
    %2 = vector.extract_strided_slice %0 {offsets = [96, 0], sizes = [32, 128], strides = [1, 1]} : vector<131x128xf32> to vector<32x128xf32>
    %3 = vector.extract_strided_slice %0 {offsets = [128, 0], sizes = [1, 128], strides = [1, 1]} : vector<131x128xf32> to vector<1x128xf32>
    %4 = vector.extract_strided_slice %0 {offsets = [129, 0], sizes = [1, 128], strides = [1, 1]} : vector<131x128xf32> to vector<1x128xf32>
    %5 = vector.extract_strided_slice %0 {offsets = [130, 0], sizes = [1, 128], strides = [1, 1]} : vector<131x128xf32> to vector<1x128xf32>
    %c0_1 = arith.constant 0 : index
    %c0_2 = arith.constant 0 : index
    %c0_3 = arith.constant 0 : index
    %6 = vector.load %arg1[%c0_1, %c0_2, %c0_3] : memref<1x64x144xf32, #tpu.memory_space<vmem>>, vector<1x64x144xf32>
    %7 = vector.shape_cast %6 : vector<1x64x144xf32> to vector<64x144xf32>
    %8 = vector.extract_strided_slice %7 {offsets = [0, 0], sizes = [64, 96], strides = [1, 1]} : vector<64x144xf32> to vector<64x96xf32>
    %9 = vector.extract_strided_slice %7 {offsets = [0, 96], sizes = [64, 48], strides = [1, 1]} : vector<64x144xf32> to vector<64x48xf32>
    %10 = arith.truncf %8 : vector<64x96xf32> to vector<64x96xbf16>
    %11 = arith.truncf %1 : vector<96x128xf32> to vector<96x128xbf16>
    %cst = arith.constant dense<0.000000e+00> : vector<64x128xf32>
    %12 = tpu.matmul %10, %11, %cst {dimension_numbers = #tpu.dot_dimension_numbers<[1], [0], [0], [1], [0, 0, 1, 1], [], []>} : vector<64x96xbf16>, vector<96x128xbf16>, vector<64x128xf32> -> vector<64x128xf32>
    %13 = vector.extract_strided_slice %12 {offsets = [0, 0], sizes = [64, 96], strides = [1, 1]} : vector<64x128xf32> to vector<64x96xf32>
    %14 = vector.extract_strided_slice %12 {offsets = [0, 96], sizes = [64, 8], strides = [1, 1]} : vector<64x128xf32> to vector<64x8xf32>
    %15 = vector.extract_strided_slice %12 {offsets = [0, 104], sizes = [64, 8], strides = [1, 1]} : vector<64x128xf32> to vector<64x8xf32>
    %16 = tpu.iota {dimensions = array<i32: 0>} : vector<8x8xi32>
    %17 = tpu.iota {dimensions = array<i32: 1>} : vector<8x8xi32>
    %18 = arith.cmpi eq, %16, %17 : vector<8x8xi32>
    %19 = arith.extui %18 : vector<8x8xi1> to vector<8x8xi32>
    %20 = arith.sitofp %19 : vector<8x8xi32> to vector<8x8xf32>
    %cst_4 = arith.constant dense<0.000000e+00> : vector<8x64xf32>
    %21 = tpu.matmul %20, %14, %cst_4 {dimension_numbers = #tpu.dot_dimension_numbers<[1], [1], [0], [0], [0, 0, 1, 0], [], []>} : vector<8x8xf32>, vector<64x8xf32>, vector<8x64xf32> -> vector<8x64xf32>
    %22 = vector.extract_strided_slice %13 {offsets = [0, 0], sizes = [16, 96], strides = [1, 1]} : vector<64x96xf32> to vector<16x96xf32>
    %23 = vector.extract_strided_slice %15 {offsets = [0, 0], sizes = [16, 8], strides = [1, 1]} : vector<64x8xf32> to vector<16x8xf32>
    %24 = vector.extract_strided_slice %9 {offsets = [0, 0], sizes = [16, 48], strides = [1, 1]} : vector<64x48xf32> to vector<16x48xf32>
    %25 = vector.extract_strided_slice %21 {offsets = [0, 0], sizes = [8, 16], strides = [1, 1]} : vector<8x64xf32> to vector<8x16xf32>
    %26 = vector.extract_strided_slice %24 {offsets = [0, 0], sizes = [16, 16], strides = [1, 1]} : vector<16x48xf32> to vector<16x16xf32>
    %cst_5 = arith.constant 0.000000e+00 : f32
    %27 = vector.broadcast %cst_5 : f32 to vector<16x16xf32>
    %28 = arith.cmpf ogt, %26, %27 : vector<16x16xf32>
    %29 = vector.extract_strided_slice %22 {offsets = [0, 0], sizes = [16, 16], strides = [1, 1]} : vector<16x96xf32> to vector<16x16xf32>
    %30 = vector.extract_strided_slice %23 {offsets = [0, 0], sizes = [16, 1], strides = [1, 1]} : vector<16x8xf32> to vector<16x1xf32>
    %31 = vector.extract_strided_slice %25 {offsets = [0, 0], sizes = [1, 16], strides = [1, 1]} : vector<8x16xf32> to vector<1x16xf32>
    %32 = vector.broadcast %30 : vector<16x1xf32> to vector<16x16xf32>
    %33 = vector.broadcast %31 : vector<1x16xf32> to vector<16x16xf32>
    %34 = arith.addf %32, %33 : vector<16x16xf32>
    %cst_6 = arith.constant 0.000000e+00 : f32
    %35 = vector.broadcast %cst_6 : f32 to vector<16x16xf32>
    %36 = arith.cmpf ogt, %34, %35 : vector<16x16xf32>
    %cst_7 = arith.constant 2.000000e-01 : f32
    %37 = vector.broadcast %cst_7 : f32 to vector<16x16xf32>
    %38 = arith.mulf %37, %34 : vector<16x16xf32>
    %39 = arith.select %36, %34, %38 : vector<16x16xi1>, vector<16x16xf32>
    %cst_8 = arith.constant -1.000000e+30 : f32
    %40 = vector.broadcast %cst_8 : f32 to vector<16x16xf32>
    %41 = arith.select %28, %39, %40 : vector<16x16xi1>, vector<16x16xf32>
    %cst_9 = arith.constant dense<0xFF800000> : vector<16xf32>
    %42 = vector.multi_reduction <maximumf>, %41, %cst_9 [1] : vector<16x16xf32> to vector<16xf32>
    %43 = vector.shape_cast %42 : vector<16xf32> to vector<16x1xf32>
    %44 = vector.broadcast %43 : vector<16x1xf32> to vector<16x16xf32>
    %45 = arith.subf %41, %44 : vector<16x16xf32>
    %46 = math.exp %45 : vector<16x16xf32>
    %cst_10 = arith.constant 0.000000e+00 : f32
    %47 = vector.broadcast %cst_10 : f32 to vector<16x16xf32>
    %48 = arith.select %28, %46, %47 : vector<16x16xi1>, vector<16x16xf32>
    %cst_11 = arith.constant dense<0.000000e+00> : vector<16xf32>
    %49 = vector.multi_reduction <add>, %48, %cst_11 [1] : vector<16x16xf32> to vector<16xf32>
    %50 = vector.shape_cast %49 : vector<16xf32> to vector<16x1xf32>
    %cst_12 = arith.constant 1.000000e-30 : f32
    %51 = vector.broadcast %cst_12 : f32 to vector<16x1xf32>
    %52 = arith.maximumf %50, %51 : vector<16x1xf32>
    %53 = tpu.reciprocal %52 {approx = true} : vector<16x1xf32> -> vector<16x1xf32>
    %54 = vector.broadcast %53 : vector<16x1xf32> to vector<16x16xf32>
    %55 = arith.mulf %48, %54 : vector<16x16xf32>
    %cst_13 = arith.constant dense<0.000000e+00> : vector<16x16xf32>
    %56 = tpu.matmul %55, %29, %cst_13 {dimension_numbers = #tpu.dot_dimension_numbers<[1], [0], [0], [1], [0, 0, 1, 1], [], []>} : vector<16x16xf32>, vector<16x16xf32>, vector<16x16xf32> -> vector<16x16xf32>
    %57 = vector.extract_strided_slice %22 {offsets = [0, 16], sizes = [16, 16], strides = [1, 1]} : vector<16x96xf32> to vector<16x16xf32>
    %58 = vector.extract_strided_slice %23 {offsets = [0, 1], sizes = [16, 1], strides = [1, 1]} : vector<16x8xf32> to vector<16x1xf32>
    %59 = vector.extract_strided_slice %25 {offsets = [1, 0], sizes = [1, 16], strides = [1, 1]} : vector<8x16xf32> to vector<1x16xf32>
    %60 = vector.broadcast %58 : vector<16x1xf32> to vector<16x16xf32>
    %61 = vector.broadcast %59 : vector<1x16xf32> to vector<16x16xf32>
    %62 = arith.addf %60, %61 : vector<16x16xf32>
    %cst_14 = arith.constant 0.000000e+00 : f32
    %63 = vector.broadcast %cst_14 : f32 to vector<16x16xf32>
    %64 = arith.cmpf ogt, %62, %63 : vector<16x16xf32>
    %cst_15 = arith.constant 2.000000e-01 : f32
    %65 = vector.broadcast %cst_15 : f32 to vector<16x16xf32>
    %66 = arith.mulf %65, %62 : vector<16x16xf32>
    %67 = arith.select %64, %62, %66 : vector<16x16xi1>, vector<16x16xf32>
    %cst_16 = arith.constant -1.000000e+30 : f32
    %68 = vector.broadcast %cst_16 : f32 to vector<16x16xf32>
    %69 = arith.select %28, %67, %68 : vector<16x16xi1>, vector<16x16xf32>
    %cst_17 = arith.constant dense<0xFF800000> : vector<16xf32>
    %70 = vector.multi_reduction <maximumf>, %69, %cst_17 [1] : vector<16x16xf32> to vector<16xf32>
    %71 = vector.shape_cast %70 : vector<16xf32> to vector<16x1xf32>
    %72 = vector.broadcast %71 : vector<16x1xf32> to vector<16x16xf32>
    %73 = arith.subf %69, %72 : vector<16x16xf32>
    %74 = math.exp %73 : vector<16x16xf32>
    %cst_18 = arith.constant 0.000000e+00 : f32
    %75 = vector.broadcast %cst_18 : f32 to vector<16x16xf32>
    %76 = arith.select %28, %74, %75 : vector<16x16xi1>, vector<16x16xf32>
    %cst_19 = arith.constant dense<0.000000e+00> : vector<16xf32>
    %77 = vector.multi_reduction <add>, %76, %cst_19 [1] : vector<16x16xf32> to vector<16xf32>
    %78 = vector.shape_cast %77 : vector<16xf32> to vector<16x1xf32>
    %cst_20 = arith.constant 1.000000e-30 : f32
    %79 = vector.broadcast %cst_20 : f32 to vector<16x1xf32>
    %80 = arith.maximumf %78, %79 : vector<16x1xf32>
    %81 = tpu.reciprocal %80 {approx = true} : vector<16x1xf32> -> vector<16x1xf32>
    %82 = vector.broadcast %81 : vector<16x1xf32> to vector<16x16xf32>
    %83 = arith.mulf %76, %82 : vector<16x16xf32>
    %cst_21 = arith.constant dense<0.000000e+00> : vector<16x16xf32>
    %84 = tpu.matmul %83, %57, %cst_21 {dimension_numbers = #tpu.dot_dimension_numbers<[1], [0], [0], [1], [0, 0, 1, 1], [], []>} : vector<16x16xf32>, vector<16x16xf32>, vector<16x16xf32> -> vector<16x16xf32>
    %85 = tpu.concatenate %56, %84 in 1 : vector<16x16xf32>, vector<16x16xf32> -> vector<16x32xf32>
    %86 = vector.extract_strided_slice %5 {offsets = [0, 0], sizes = [1, 32], strides = [1, 1]} : vector<1x128xf32> to vector<1x32xf32>
    %87 = vector.broadcast %86 : vector<1x32xf32> to vector<16x32xf32>
    %88 = arith.addf %85, %87 : vector<16x32xf32>
    %cst_22 = arith.constant 0.000000e+00 : f32
    %89 = vector.broadcast %cst_22 : f32 to vector<16x32xf32>
    %90 = arith.cmpf ogt, %88, %89 : vector<16x32xf32>
    %cst_23 = arith.constant 0.000000e+00 : f32
    %91 = vector.broadcast %cst_23 : f32 to vector<16x32xf32>
    %92 = arith.minimumf %88, %91 : vector<16x32xf32>
    %93 = math.exp %92 : vector<16x32xf32>
    %cst_24 = arith.constant 1.000000e+00 : f32
    %94 = vector.broadcast %cst_24 : f32 to vector<16x32xf32>
    %95 = arith.subf %93, %94 : vector<16x32xf32>
    %96 = arith.select %90, %88, %95 : vector<16x32xi1>, vector<16x32xf32>
    %97 = vector.extract_strided_slice %24 {offsets = [0, 16], sizes = [16, 16], strides = [1, 1]} : vector<16x48xf32> to vector<16x16xf32>
    %cst_25 = arith.constant 0.000000e+00 : f32
    %98 = vector.broadcast %cst_25 : f32 to vector<16x16xf32>
    %99 = arith.cmpf ogt, %97, %98 : vector<16x16xf32>
    %100 = vector.extract_strided_slice %22 {offsets = [0, 32], sizes = [16, 16], strides = [1, 1]} : vector<16x96xf32> to vector<16x16xf32>
    %101 = vector.extract_strided_slice %23 {offsets = [0, 2], sizes = [16, 1], strides = [1, 1]} : vector<16x8xf32> to vector<16x1xf32>
    %102 = vector.extract_strided_slice %25 {offsets = [2, 0], sizes = [1, 16], strides = [1, 1]} : vector<8x16xf32> to vector<1x16xf32>
    %103 = vector.broadcast %101 : vector<16x1xf32> to vector<16x16xf32>
    %104 = vector.broadcast %102 : vector<1x16xf32> to vector<16x16xf32>
    %105 = arith.addf %103, %104 : vector<16x16xf32>
    %cst_26 = arith.constant 0.000000e+00 : f32
    %106 = vector.broadcast %cst_26 : f32 to vector<16x16xf32>
    %107 = arith.cmpf ogt, %105, %106 : vector<16x16xf32>
    %cst_27 = arith.constant 2.000000e-01 : f32
    %108 = vector.broadcast %cst_27 : f32 to vector<16x16xf32>
    %109 = arith.mulf %108, %105 : vector<16x16xf32>
    %110 = arith.select %107, %105, %109 : vector<16x16xi1>, vector<16x16xf32>
    %cst_28 = arith.constant -1.000000e+30 : f32
    %111 = vector.broadcast %cst_28 : f32 to vector<16x16xf32>
    %112 = arith.select %99, %110, %111 : vector<16x16xi1>, vector<16x16xf32>
    %cst_29 = arith.constant dense<0xFF800000> : vector<16xf32>
    %113 = vector.multi_reduction <maximumf>, %112, %cst_29 [1] : vector<16x16xf32> to vector<16xf32>
    %114 = vector.shape_cast %113 : vector<16xf32> to vector<16x1xf32>
    %115 = vector.broadcast %114 : vector<16x1xf32> to vector<16x16xf32>
    %116 = arith.subf %112, %115 : vector<16x16xf32>
    %117 = math.exp %116 : vector<16x16xf32>
    %cst_30 = arith.constant 0.000000e+00 : f32
    %118 = vector.broadcast %cst_30 : f32 to vector<16x16xf32>
    %119 = arith.select %99, %117, %118 : vector<16x16xi1>, vector<16x16xf32>
    %cst_31 = arith.constant dense<0.000000e+00> : vector<16xf32>
    %120 = vector.multi_reduction <add>, %119, %cst_31 [1] : vector<16x16xf32> to vector<16xf32>
    %121 = vector.shape_cast %120 : vector<16xf32> to vector<16x1xf32>
    %cst_32 = arith.constant 1.000000e-30 : f32
    %122 = vector.broadcast %cst_32 : f32 to vector<16x1xf32>
    %123 = arith.maximumf %121, %122 : vector<16x1xf32>
    %124 = tpu.reciprocal %123 {approx = true} : vector<16x1xf32> -> vector<16x1xf32>
    %125 = vector.broadcast %124 : vector<16x1xf32> to vector<16x16xf32>
    %126 = arith.mulf %119, %125 : vector<16x16xf32>
    %cst_33 = arith.constant dense<0.000000e+00> : vector<16x16xf32>
    %127 = tpu.matmul %126, %100, %cst_33 {dimension_numbers = #tpu.dot_dimension_numbers<[1], [0], [0], [1], [0, 0, 1, 1], [], []>} : vector<16x16xf32>, vector<16x16xf32>, vector<16x16xf32> -> vector<16x16xf32>
    %128 = vector.extract_strided_slice %22 {offsets = [0, 48], sizes = [16, 16], strides = [1, 1]} : vector<16x96xf32> to vector<16x16xf32>
    %129 = vector.extract_strided_slice %23 {offsets = [0, 3], sizes = [16, 1], strides = [1, 1]} : vector<16x8xf32> to vector<16x1xf32>
    %130 = vector.extract_strided_slice %25 {offsets = [3, 0], sizes = [1, 16], strides = [1, 1]} : vector<8x16xf32> to vector<1x16xf32>
    %131 = vector.broadcast %129 : vector<16x1xf32> to vector<16x16xf32>
    %132 = vector.broadcast %130 : vector<1x16xf32> to vector<16x16xf32>
    %133 = arith.addf %131, %132 : vector<16x16xf32>
    %cst_34 = arith.constant 0.000000e+00 : f32
    %134 = vector.broadcast %cst_34 : f32 to vector<16x16xf32>
    %135 = arith.cmpf ogt, %133, %134 : vector<16x16xf32>
    %cst_35 = arith.constant 2.000000e-01 : f32
    %136 = vector.broadcast %cst_35 : f32 to vector<16x16xf32>
    %137 = arith.mulf %136, %133 : vector<16x16xf32>
    %138 = arith.select %135, %133, %137 : vector<16x16xi1>, vector<16x16xf32>
    %cst_36 = arith.constant -1.000000e+30 : f32
    %139 = vector.broadcast %cst_36 : f32 to vector<16x16xf32>
    %140 = arith.select %99, %138, %139 : vector<16x16xi1>, vector<16x16xf32>
    %cst_37 = arith.constant dense<0xFF800000> : vector<16xf32>
    %141 = vector.multi_reduction <maximumf>, %140, %cst_37 [1] : vector<16x16xf32> to vector<16xf32>
    %142 = vector.shape_cast %141 : vector<16xf32> to vector<16x1xf32>
    %143 = vector.broadcast %142 : vector<16x1xf32> to vector<16x16xf32>
    %144 = arith.subf %140, %143 : vector<16x16xf32>
    %145 = math.exp %144 : vector<16x16xf32>
    %cst_38 = arith.constant 0.000000e+00 : f32
    %146 = vector.broadcast %cst_38 : f32 to vector<16x16xf32>
    %147 = arith.select %99, %145, %146 : vector<16x16xi1>, vector<16x16xf32>
    %cst_39 = arith.constant dense<0.000000e+00> : vector<16xf32>
    %148 = vector.multi_reduction <add>, %147, %cst_39 [1] : vector<16x16xf32> to vector<16xf32>
    %149 = vector.shape_cast %148 : vector<16xf32> to vector<16x1xf32>
    %cst_40 = arith.constant 1.000000e-30 : f32
    %150 = vector.broadcast %cst_40 : f32 to vector<16x1xf32>
    %151 = arith.maximumf %149, %150 : vector<16x1xf32>
    %152 = tpu.reciprocal %151 {approx = true} : vector<16x1xf32> -> vector<16x1xf32>
    %153 = vector.broadcast %152 : vector<16x1xf32> to vector<16x16xf32>
    %154 = arith.mulf %147, %153 : vector<16x16xf32>
    %cst_41 = arith.constant dense<0.000000e+00> : vector<16x16xf32>
    %155 = tpu.matmul %154, %128, %cst_41 {dimension_numbers = #tpu.dot_dimension_numbers<[1], [0], [0], [1], [0, 0, 1, 1], [], []>} : vector<16x16xf32>, vector<16x16xf32>, vector<16x16xf32> -> vector<16x16xf32>
    %156 = tpu.concatenate %127, %155 in 1 : vector<16x16xf32>, vector<16x16xf32> -> vector<16x32xf32>
    %157 = vector.extract_strided_slice %5 {offsets = [0, 32], sizes = [1, 32], strides = [1, 1]} : vector<1x128xf32> to vector<1x32xf32>
    %158 = vector.broadcast %157 : vector<1x32xf32> to vector<16x32xf32>
    %159 = arith.addf %156, %158 : vector<16x32xf32>
    %cst_42 = arith.constant 0.000000e+00 : f32
    %160 = vector.broadcast %cst_42 : f32 to vector<16x32xf32>
    %161 = arith.cmpf ogt, %159, %160 : vector<16x32xf32>
    %cst_43 = arith.constant 0.000000e+00 : f32
    %162 = vector.broadcast %cst_43 : f32 to vector<16x32xf32>
    %163 = arith.minimumf %159, %162 : vector<16x32xf32>
    %164 = math.exp %163 : vector<16x32xf32>
    %cst_44 = arith.constant 1.000000e+00 : f32
    %165 = vector.broadcast %cst_44 : f32 to vector<16x32xf32>
    %166 = arith.subf %164, %165 : vector<16x32xf32>
    %167 = arith.select %161, %159, %166 : vector<16x32xi1>, vector<16x32xf32>
    %168 = vector.extract_strided_slice %24 {offsets = [0, 32], sizes = [16, 16], strides = [1, 1]} : vector<16x48xf32> to vector<16x16xf32>
    %cst_45 = arith.constant 0.000000e+00 : f32
    %169 = vector.broadcast %cst_45 : f32 to vector<16x16xf32>
    %170 = arith.cmpf ogt, %168, %169 : vector<16x16xf32>
    %171 = vector.extract_strided_slice %22 {offsets = [0, 64], sizes = [16, 16], strides = [1, 1]} : vector<16x96xf32> to vector<16x16xf32>
    %172 = vector.extract_strided_slice %23 {offsets = [0, 4], sizes = [16, 1], strides = [1, 1]} : vector<16x8xf32> to vector<16x1xf32>
    %173 = vector.extract_strided_slice %25 {offsets = [4, 0], sizes = [1, 16], strides = [1, 1]} : vector<8x16xf32> to vector<1x16xf32>
    %174 = vector.broadcast %172 : vector<16x1xf32> to vector<16x16xf32>
    %175 = vector.broadcast %173 : vector<1x16xf32> to vector<16x16xf32>
    %176 = arith.addf %174, %175 : vector<16x16xf32>
    %cst_46 = arith.constant 0.000000e+00 : f32
    %177 = vector.broadcast %cst_46 : f32 to vector<16x16xf32>
    %178 = arith.cmpf ogt, %176, %177 : vector<16x16xf32>
    %cst_47 = arith.constant 2.000000e-01 : f32
    %179 = vector.broadcast %cst_47 : f32 to vector<16x16xf32>
    %180 = arith.mulf %179, %176 : vector<16x16xf32>
    %181 = arith.select %178, %176, %180 : vector<16x16xi1>, vector<16x16xf32>
    %cst_48 = arith.constant -1.000000e+30 : f32
    %182 = vector.broadcast %cst_48 : f32 to vector<16x16xf32>
    %183 = arith.select %170, %181, %182 : vector<16x16xi1>, vector<16x16xf32>
    %cst_49 = arith.constant dense<0xFF800000> : vector<16xf32>
    %184 = vector.multi_reduction <maximumf>, %183, %cst_49 [1] : vector<16x16xf32> to vector<16xf32>
    %185 = vector.shape_cast %184 : vector<16xf32> to vector<16x1xf32>
    %186 = vector.broadcast %185 : vector<16x1xf32> to vector<16x16xf32>
    %187 = arith.subf %183, %186 : vector<16x16xf32>
    %188 = math.exp %187 : vector<16x16xf32>
    %cst_50 = arith.constant 0.000000e+00 : f32
    %189 = vector.broadcast %cst_50 : f32 to vector<16x16xf32>
    %190 = arith.select %170, %188, %189 : vector<16x16xi1>, vector<16x16xf32>
    %cst_51 = arith.constant dense<0.000000e+00> : vector<16xf32>
    %191 = vector.multi_reduction <add>, %190, %cst_51 [1] : vector<16x16xf32> to vector<16xf32>
    %192 = vector.shape_cast %191 : vector<16xf32> to vector<16x1xf32>
    %cst_52 = arith.constant 1.000000e-30 : f32
    %193 = vector.broadcast %cst_52 : f32 to vector<16x1xf32>
    %194 = arith.maximumf %192, %193 : vector<16x1xf32>
    %195 = tpu.reciprocal %194 {approx = true} : vector<16x1xf32> -> vector<16x1xf32>
    %196 = vector.broadcast %195 : vector<16x1xf32> to vector<16x16xf32>
    %197 = arith.mulf %190, %196 : vector<16x16xf32>
    %cst_53 = arith.constant dense<0.000000e+00> : vector<16x16xf32>
    %198 = tpu.matmul %197, %171, %cst_53 {dimension_numbers = #tpu.dot_dimension_numbers<[1], [0], [0], [1], [0, 0, 1, 1], [], []>} : vector<16x16xf32>, vector<16x16xf32>, vector<16x16xf32> -> vector<16x16xf32>
    %199 = vector.extract_strided_slice %22 {offsets = [0, 80], sizes = [16, 16], strides = [1, 1]} : vector<16x96xf32> to vector<16x16xf32>
    %200 = vector.extract_strided_slice %23 {offsets = [0, 5], sizes = [16, 1], strides = [1, 1]} : vector<16x8xf32> to vector<16x1xf32>
    %201 = vector.extract_strided_slice %25 {offsets = [5, 0], sizes = [1, 16], strides = [1, 1]} : vector<8x16xf32> to vector<1x16xf32>
    %202 = vector.broadcast %200 : vector<16x1xf32> to vector<16x16xf32>
    %203 = vector.broadcast %201 : vector<1x16xf32> to vector<16x16xf32>
    %204 = arith.addf %202, %203 : vector<16x16xf32>
    %cst_54 = arith.constant 0.000000e+00 : f32
    %205 = vector.broadcast %cst_54 : f32 to vector<16x16xf32>
    %206 = arith.cmpf ogt, %204, %205 : vector<16x16xf32>
    %cst_55 = arith.constant 2.000000e-01 : f32
    %207 = vector.broadcast %cst_55 : f32 to vector<16x16xf32>
    %208 = arith.mulf %207, %204 : vector<16x16xf32>
    %209 = arith.select %206, %204, %208 : vector<16x16xi1>, vector<16x16xf32>
    %cst_56 = arith.constant -1.000000e+30 : f32
    %210 = vector.broadcast %cst_56 : f32 to vector<16x16xf32>
    %211 = arith.select %170, %209, %210 : vector<16x16xi1>, vector<16x16xf32>
    %cst_57 = arith.constant dense<0xFF800000> : vector<16xf32>
    %212 = vector.multi_reduction <maximumf>, %211, %cst_57 [1] : vector<16x16xf32> to vector<16xf32>
    %213 = vector.shape_cast %212 : vector<16xf32> to vector<16x1xf32>
    %214 = vector.broadcast %213 : vector<16x1xf32> to vector<16x16xf32>
    %215 = arith.subf %211, %214 : vector<16x16xf32>
    %216 = math.exp %215 : vector<16x16xf32>
    %cst_58 = arith.constant 0.000000e+00 : f32
    %217 = vector.broadcast %cst_58 : f32 to vector<16x16xf32>
    %218 = arith.select %170, %216, %217 : vector<16x16xi1>, vector<16x16xf32>
    %cst_59 = arith.constant dense<0.000000e+00> : vector<16xf32>
    %219 = vector.multi_reduction <add>, %218, %cst_59 [1] : vector<16x16xf32> to vector<16xf32>
    %220 = vector.shape_cast %219 : vector<16xf32> to vector<16x1xf32>
    %cst_60 = arith.constant 1.000000e-30 : f32
    %221 = vector.broadcast %cst_60 : f32 to vector<16x1xf32>
    %222 = arith.maximumf %220, %221 : vector<16x1xf32>
    %223 = tpu.reciprocal %222 {approx = true} : vector<16x1xf32> -> vector<16x1xf32>
    %224 = vector.broadcast %223 : vector<16x1xf32> to vector<16x16xf32>
    %225 = arith.mulf %218, %224 : vector<16x16xf32>
    %cst_61 = arith.constant dense<0.000000e+00> : vector<16x16xf32>
    %226 = tpu.matmul %225, %199, %cst_61 {dimension_numbers = #tpu.dot_dimension_numbers<[1], [0], [0], [1], [0, 0, 1, 1], [], []>} : vector<16x16xf32>, vector<16x16xf32>, vector<16x16xf32> -> vector<16x16xf32>
    %227 = tpu.concatenate %198, %226 in 1 : vector<16x16xf32>, vector<16x16xf32> -> vector<16x32xf32>
    %228 = vector.extract_strided_slice %5 {offsets = [0, 64], sizes = [1, 32], strides = [1, 1]} : vector<1x128xf32> to vector<1x32xf32>
    %229 = vector.broadcast %228 : vector<1x32xf32> to vector<16x32xf32>
    %230 = arith.addf %227, %229 : vector<16x32xf32>
    %cst_62 = arith.constant 0.000000e+00 : f32
    %231 = vector.broadcast %cst_62 : f32 to vector<16x32xf32>
    %232 = arith.cmpf ogt, %230, %231 : vector<16x32xf32>
    %cst_63 = arith.constant 0.000000e+00 : f32
    %233 = vector.broadcast %cst_63 : f32 to vector<16x32xf32>
    %234 = arith.minimumf %230, %233 : vector<16x32xf32>
    %235 = math.exp %234 : vector<16x32xf32>
    %cst_64 = arith.constant 1.000000e+00 : f32
    %236 = vector.broadcast %cst_64 : f32 to vector<16x32xf32>
    %237 = arith.subf %235, %236 : vector<16x32xf32>
    %238 = arith.select %232, %230, %237 : vector<16x32xi1>, vector<16x32xf32>
    %239 = vector.extract_strided_slice %13 {offsets = [16, 0], sizes = [16, 96], strides = [1, 1]} : vector<64x96xf32> to vector<16x96xf32>
    %240 = vector.extract_strided_slice %15 {offsets = [16, 0], sizes = [16, 8], strides = [1, 1]} : vector<64x8xf32> to vector<16x8xf32>
    %241 = vector.extract_strided_slice %9 {offsets = [16, 0], sizes = [16, 48], strides = [1, 1]} : vector<64x48xf32> to vector<16x48xf32>
    %242 = vector.extract_strided_slice %21 {offsets = [0, 16], sizes = [8, 16], strides = [1, 1]} : vector<8x64xf32> to vector<8x16xf32>
    %243 = vector.extract_strided_slice %241 {offsets = [0, 0], sizes = [16, 16], strides = [1, 1]} : vector<16x48xf32> to vector<16x16xf32>
    %cst_65 = arith.constant 0.000000e+00 : f32
    %244 = vector.broadcast %cst_65 : f32 to vector<16x16xf32>
    %245 = arith.cmpf ogt, %243, %244 : vector<16x16xf32>
    %246 = vector.extract_strided_slice %239 {offsets = [0, 0], sizes = [16, 16], strides = [1, 1]} : vector<16x96xf32> to vector<16x16xf32>
    %247 = vector.extract_strided_slice %240 {offsets = [0, 0], sizes = [16, 1], strides = [1, 1]} : vector<16x8xf32> to vector<16x1xf32>
    %248 = vector.extract_strided_slice %242 {offsets = [0, 0], sizes = [1, 16], strides = [1, 1]} : vector<8x16xf32> to vector<1x16xf32>
    %249 = vector.broadcast %247 : vector<16x1xf32> to vector<16x16xf32>
    %250 = vector.broadcast %248 : vector<1x16xf32> to vector<16x16xf32>
    %251 = arith.addf %249, %250 : vector<16x16xf32>
    %cst_66 = arith.constant 0.000000e+00 : f32
    %252 = vector.broadcast %cst_66 : f32 to vector<16x16xf32>
    %253 = arith.cmpf ogt, %251, %252 : vector<16x16xf32>
    %cst_67 = arith.constant 2.000000e-01 : f32
    %254 = vector.broadcast %cst_67 : f32 to vector<16x16xf32>
    %255 = arith.mulf %254, %251 : vector<16x16xf32>
    %256 = arith.select %253, %251, %255 : vector<16x16xi1>, vector<16x16xf32>
    %cst_68 = arith.constant -1.000000e+30 : f32
    %257 = vector.broadcast %cst_68 : f32 to vector<16x16xf32>
    %258 = arith.select %245, %256, %257 : vector<16x16xi1>, vector<16x16xf32>
    %cst_69 = arith.constant dense<0xFF800000> : vector<16xf32>
    %259 = vector.multi_reduction <maximumf>, %258, %cst_69 [1] : vector<16x16xf32> to vector<16xf32>
    %260 = vector.shape_cast %259 : vector<16xf32> to vector<16x1xf32>
    %261 = vector.broadcast %260 : vector<16x1xf32> to vector<16x16xf32>
    %262 = arith.subf %258, %261 : vector<16x16xf32>
    %263 = math.exp %262 : vector<16x16xf32>
    %cst_70 = arith.constant 0.000000e+00 : f32
    %264 = vector.broadcast %cst_70 : f32 to vector<16x16xf32>
    %265 = arith.select %245, %263, %264 : vector<16x16xi1>, vector<16x16xf32>
    %cst_71 = arith.constant dense<0.000000e+00> : vector<16xf32>
    %266 = vector.multi_reduction <add>, %265, %cst_71 [1] : vector<16x16xf32> to vector<16xf32>
    %267 = vector.shape_cast %266 : vector<16xf32> to vector<16x1xf32>
    %cst_72 = arith.constant 1.000000e-30 : f32
    %268 = vector.broadcast %cst_72 : f32 to vector<16x1xf32>
    %269 = arith.maximumf %267, %268 : vector<16x1xf32>
    %270 = tpu.reciprocal %269 {approx = true} : vector<16x1xf32> -> vector<16x1xf32>
    %271 = vector.broadcast %270 : vector<16x1xf32> to vector<16x16xf32>
    %272 = arith.mulf %265, %271 : vector<16x16xf32>
    %cst_73 = arith.constant dense<0.000000e+00> : vector<16x16xf32>
    %273 = tpu.matmul %272, %246, %cst_73 {dimension_numbers = #tpu.dot_dimension_numbers<[1], [0], [0], [1], [0, 0, 1, 1], [], []>} : vector<16x16xf32>, vector<16x16xf32>, vector<16x16xf32> -> vector<16x16xf32>
    %274 = vector.extract_strided_slice %239 {offsets = [0, 16], sizes = [16, 16], strides = [1, 1]} : vector<16x96xf32> to vector<16x16xf32>
    %275 = vector.extract_strided_slice %240 {offsets = [0, 1], sizes = [16, 1], strides = [1, 1]} : vector<16x8xf32> to vector<16x1xf32>
    %276 = vector.extract_strided_slice %242 {offsets = [1, 0], sizes = [1, 16], strides = [1, 1]} : vector<8x16xf32> to vector<1x16xf32>
    %277 = vector.broadcast %275 : vector<16x1xf32> to vector<16x16xf32>
    %278 = vector.broadcast %276 : vector<1x16xf32> to vector<16x16xf32>
    %279 = arith.addf %277, %278 : vector<16x16xf32>
    %cst_74 = arith.constant 0.000000e+00 : f32
    %280 = vector.broadcast %cst_74 : f32 to vector<16x16xf32>
    %281 = arith.cmpf ogt, %279, %280 : vector<16x16xf32>
    %cst_75 = arith.constant 2.000000e-01 : f32
    %282 = vector.broadcast %cst_75 : f32 to vector<16x16xf32>
    %283 = arith.mulf %282, %279 : vector<16x16xf32>
    %284 = arith.select %281, %279, %283 : vector<16x16xi1>, vector<16x16xf32>
    %cst_76 = arith.constant -1.000000e+30 : f32
    %285 = vector.broadcast %cst_76 : f32 to vector<16x16xf32>
    %286 = arith.select %245, %284, %285 : vector<16x16xi1>, vector<16x16xf32>
    %cst_77 = arith.constant dense<0xFF800000> : vector<16xf32>
    %287 = vector.multi_reduction <maximumf>, %286, %cst_77 [1] : vector<16x16xf32> to vector<16xf32>
    %288 = vector.shape_cast %287 : vector<16xf32> to vector<16x1xf32>
    %289 = vector.broadcast %288 : vector<16x1xf32> to vector<16x16xf32>
    %290 = arith.subf %286, %289 : vector<16x16xf32>
    %291 = math.exp %290 : vector<16x16xf32>
    %cst_78 = arith.constant 0.000000e+00 : f32
    %292 = vector.broadcast %cst_78 : f32 to vector<16x16xf32>
    %293 = arith.select %245, %291, %292 : vector<16x16xi1>, vector<16x16xf32>
    %cst_79 = arith.constant dense<0.000000e+00> : vector<16xf32>
    %294 = vector.multi_reduction <add>, %293, %cst_79 [1] : vector<16x16xf32> to vector<16xf32>
    %295 = vector.shape_cast %294 : vector<16xf32> to vector<16x1xf32>
    %cst_80 = arith.constant 1.000000e-30 : f32
    %296 = vector.broadcast %cst_80 : f32 to vector<16x1xf32>
    %297 = arith.maximumf %295, %296 : vector<16x1xf32>
    %298 = tpu.reciprocal %297 {approx = true} : vector<16x1xf32> -> vector<16x1xf32>
    %299 = vector.broadcast %298 : vector<16x1xf32> to vector<16x16xf32>
    %300 = arith.mulf %293, %299 : vector<16x16xf32>
    %cst_81 = arith.constant dense<0.000000e+00> : vector<16x16xf32>
    %301 = tpu.matmul %300, %274, %cst_81 {dimension_numbers = #tpu.dot_dimension_numbers<[1], [0], [0], [1], [0, 0, 1, 1], [], []>} : vector<16x16xf32>, vector<16x16xf32>, vector<16x16xf32> -> vector<16x16xf32>
    %302 = tpu.concatenate %273, %301 in 1 : vector<16x16xf32>, vector<16x16xf32> -> vector<16x32xf32>
    %303 = vector.extract_strided_slice %5 {offsets = [0, 0], sizes = [1, 32], strides = [1, 1]} : vector<1x128xf32> to vector<1x32xf32>
    %304 = vector.broadcast %303 : vector<1x32xf32> to vector<16x32xf32>
    %305 = arith.addf %302, %304 : vector<16x32xf32>
    %cst_82 = arith.constant 0.000000e+00 : f32
    %306 = vector.broadcast %cst_82 : f32 to vector<16x32xf32>
    %307 = arith.cmpf ogt, %305, %306 : vector<16x32xf32>
    %cst_83 = arith.constant 0.000000e+00 : f32
    %308 = vector.broadcast %cst_83 : f32 to vector<16x32xf32>
    %309 = arith.minimumf %305, %308 : vector<16x32xf32>
    %310 = math.exp %309 : vector<16x32xf32>
    %cst_84 = arith.constant 1.000000e+00 : f32
    %311 = vector.broadcast %cst_84 : f32 to vector<16x32xf32>
    %312 = arith.subf %310, %311 : vector<16x32xf32>
    %313 = arith.select %307, %305, %312 : vector<16x32xi1>, vector<16x32xf32>
    %314 = vector.extract_strided_slice %241 {offsets = [0, 16], sizes = [16, 16], strides = [1, 1]} : vector<16x48xf32> to vector<16x16xf32>
    %cst_85 = arith.constant 0.000000e+00 : f32
    %315 = vector.broadcast %cst_85 : f32 to vector<16x16xf32>
    %316 = arith.cmpf ogt, %314, %315 : vector<16x16xf32>
    %317 = vector.extract_strided_slice %239 {offsets = [0, 32], sizes = [16, 16], strides = [1, 1]} : vector<16x96xf32> to vector<16x16xf32>
    %318 = vector.extract_strided_slice %240 {offsets = [0, 2], sizes = [16, 1], strides = [1, 1]} : vector<16x8xf32> to vector<16x1xf32>
    %319 = vector.extract_strided_slice %242 {offsets = [2, 0], sizes = [1, 16], strides = [1, 1]} : vector<8x16xf32> to vector<1x16xf32>
    %320 = vector.broadcast %318 : vector<16x1xf32> to vector<16x16xf32>
    %321 = vector.broadcast %319 : vector<1x16xf32> to vector<16x16xf32>
    %322 = arith.addf %320, %321 : vector<16x16xf32>
    %cst_86 = arith.constant 0.000000e+00 : f32
    %323 = vector.broadcast %cst_86 : f32 to vector<16x16xf32>
    %324 = arith.cmpf ogt, %322, %323 : vector<16x16xf32>
    %cst_87 = arith.constant 2.000000e-01 : f32
    %325 = vector.broadcast %cst_87 : f32 to vector<16x16xf32>
    %326 = arith.mulf %325, %322 : vector<16x16xf32>
    %327 = arith.select %324, %322, %326 : vector<16x16xi1>, vector<16x16xf32>
    %cst_88 = arith.constant -1.000000e+30 : f32
    %328 = vector.broadcast %cst_88 : f32 to vector<16x16xf32>
    %329 = arith.select %316, %327, %328 : vector<16x16xi1>, vector<16x16xf32>
    %cst_89 = arith.constant dense<0xFF800000> : vector<16xf32>
    %330 = vector.multi_reduction <maximumf>, %329, %cst_89 [1] : vector<16x16xf32> to vector<16xf32>
    %331 = vector.shape_cast %330 : vector<16xf32> to vector<16x1xf32>
    %332 = vector.broadcast %331 : vector<16x1xf32> to vector<16x16xf32>
    %333 = arith.subf %329, %332 : vector<16x16xf32>
    %334 = math.exp %333 : vector<16x16xf32>
    %cst_90 = arith.constant 0.000000e+00 : f32
    %335 = vector.broadcast %cst_90 : f32 to vector<16x16xf32>
    %336 = arith.select %316, %334, %335 : vector<16x16xi1>, vector<16x16xf32>
    %cst_91 = arith.constant dense<0.000000e+00> : vector<16xf32>
    %337 = vector.multi_reduction <add>, %336, %cst_91 [1] : vector<16x16xf32> to vector<16xf32>
    %338 = vector.shape_cast %337 : vector<16xf32> to vector<16x1xf32>
    %cst_92 = arith.constant 1.000000e-30 : f32
    %339 = vector.broadcast %cst_92 : f32 to vector<16x1xf32>
    %340 = arith.maximumf %338, %339 : vector<16x1xf32>
    %341 = tpu.reciprocal %340 {approx = true} : vector<16x1xf32> -> vector<16x1xf32>
    %342 = vector.broadcast %341 : vector<16x1xf32> to vector<16x16xf32>
    %343 = arith.mulf %336, %342 : vector<16x16xf32>
    %cst_93 = arith.constant dense<0.000000e+00> : vector<16x16xf32>
    %344 = tpu.matmul %343, %317, %cst_93 {dimension_numbers = #tpu.dot_dimension_numbers<[1], [0], [0], [1], [0, 0, 1, 1], [], []>} : vector<16x16xf32>, vector<16x16xf32>, vector<16x16xf32> -> vector<16x16xf32>
    %345 = vector.extract_strided_slice %239 {offsets = [0, 48], sizes = [16, 16], strides = [1, 1]} : vector<16x96xf32> to vector<16x16xf32>
    %346 = vector.extract_strided_slice %240 {offsets = [0, 3], sizes = [16, 1], strides = [1, 1]} : vector<16x8xf32> to vector<16x1xf32>
    %347 = vector.extract_strided_slice %242 {offsets = [3, 0], sizes = [1, 16], strides = [1, 1]} : vector<8x16xf32> to vector<1x16xf32>
    %348 = vector.broadcast %346 : vector<16x1xf32> to vector<16x16xf32>
    %349 = vector.broadcast %347 : vector<1x16xf32> to vector<16x16xf32>
    %350 = arith.addf %348, %349 : vector<16x16xf32>
    %cst_94 = arith.constant 0.000000e+00 : f32
    %351 = vector.broadcast %cst_94 : f32 to vector<16x16xf32>
    %352 = arith.cmpf ogt, %350, %351 : vector<16x16xf32>
    %cst_95 = arith.constant 2.000000e-01 : f32
    %353 = vector.broadcast %cst_95 : f32 to vector<16x16xf32>
    %354 = arith.mulf %353, %350 : vector<16x16xf32>
    %355 = arith.select %352, %350, %354 : vector<16x16xi1>, vector<16x16xf32>
    %cst_96 = arith.constant -1.000000e+30 : f32
    %356 = vector.broadcast %cst_96 : f32 to vector<16x16xf32>
    %357 = arith.select %316, %355, %356 : vector<16x16xi1>, vector<16x16xf32>
    %cst_97 = arith.constant dense<0xFF800000> : vector<16xf32>
    %358 = vector.multi_reduction <maximumf>, %357, %cst_97 [1] : vector<16x16xf32> to vector<16xf32>
    %359 = vector.shape_cast %358 : vector<16xf32> to vector<16x1xf32>
    %360 = vector.broadcast %359 : vector<16x1xf32> to vector<16x16xf32>
    %361 = arith.subf %357, %360 : vector<16x16xf32>
    %362 = math.exp %361 : vector<16x16xf32>
    %cst_98 = arith.constant 0.000000e+00 : f32
    %363 = vector.broadcast %cst_98 : f32 to vector<16x16xf32>
    %364 = arith.select %316, %362, %363 : vector<16x16xi1>, vector<16x16xf32>
    %cst_99 = arith.constant dense<0.000000e+00> : vector<16xf32>
    %365 = vector.multi_reduction <add>, %364, %cst_99 [1] : vector<16x16xf32> to vector<16xf32>
    %366 = vector.shape_cast %365 : vector<16xf32> to vector<16x1xf32>
    %cst_100 = arith.constant 1.000000e-30 : f32
    %367 = vector.broadcast %cst_100 : f32 to vector<16x1xf32>
    %368 = arith.maximumf %366, %367 : vector<16x1xf32>
    %369 = tpu.reciprocal %368 {approx = true} : vector<16x1xf32> -> vector<16x1xf32>
    %370 = vector.broadcast %369 : vector<16x1xf32> to vector<16x16xf32>
    %371 = arith.mulf %364, %370 : vector<16x16xf32>
    %cst_101 = arith.constant dense<0.000000e+00> : vector<16x16xf32>
    %372 = tpu.matmul %371, %345, %cst_101 {dimension_numbers = #tpu.dot_dimension_numbers<[1], [0], [0], [1], [0, 0, 1, 1], [], []>} : vector<16x16xf32>, vector<16x16xf32>, vector<16x16xf32> -> vector<16x16xf32>
    %373 = tpu.concatenate %344, %372 in 1 : vector<16x16xf32>, vector<16x16xf32> -> vector<16x32xf32>
    %374 = vector.extract_strided_slice %5 {offsets = [0, 32], sizes = [1, 32], strides = [1, 1]} : vector<1x128xf32> to vector<1x32xf32>
    %375 = vector.broadcast %374 : vector<1x32xf32> to vector<16x32xf32>
    %376 = arith.addf %373, %375 : vector<16x32xf32>
    %cst_102 = arith.constant 0.000000e+00 : f32
    %377 = vector.broadcast %cst_102 : f32 to vector<16x32xf32>
    %378 = arith.cmpf ogt, %376, %377 : vector<16x32xf32>
    %cst_103 = arith.constant 0.000000e+00 : f32
    %379 = vector.broadcast %cst_103 : f32 to vector<16x32xf32>
    %380 = arith.minimumf %376, %379 : vector<16x32xf32>
    %381 = math.exp %380 : vector<16x32xf32>
    %cst_104 = arith.constant 1.000000e+00 : f32
    %382 = vector.broadcast %cst_104 : f32 to vector<16x32xf32>
    %383 = arith.subf %381, %382 : vector<16x32xf32>
    %384 = arith.select %378, %376, %383 : vector<16x32xi1>, vector<16x32xf32>
    %385 = vector.extract_strided_slice %241 {offsets = [0, 32], sizes = [16, 16], strides = [1, 1]} : vector<16x48xf32> to vector<16x16xf32>
    %cst_105 = arith.constant 0.000000e+00 : f32
    %386 = vector.broadcast %cst_105 : f32 to vector<16x16xf32>
    %387 = arith.cmpf ogt, %385, %386 : vector<16x16xf32>
    %388 = vector.extract_strided_slice %239 {offsets = [0, 64], sizes = [16, 16], strides = [1, 1]} : vector<16x96xf32> to vector<16x16xf32>
    %389 = vector.extract_strided_slice %240 {offsets = [0, 4], sizes = [16, 1], strides = [1, 1]} : vector<16x8xf32> to vector<16x1xf32>
    %390 = vector.extract_strided_slice %242 {offsets = [4, 0], sizes = [1, 16], strides = [1, 1]} : vector<8x16xf32> to vector<1x16xf32>
    %391 = vector.broadcast %389 : vector<16x1xf32> to vector<16x16xf32>
    %392 = vector.broadcast %390 : vector<1x16xf32> to vector<16x16xf32>
    %393 = arith.addf %391, %392 : vector<16x16xf32>
    %cst_106 = arith.constant 0.000000e+00 : f32
    %394 = vector.broadcast %cst_106 : f32 to vector<16x16xf32>
    %395 = arith.cmpf ogt, %393, %394 : vector<16x16xf32>
    %cst_107 = arith.constant 2.000000e-01 : f32
    %396 = vector.broadcast %cst_107 : f32 to vector<16x16xf32>
    %397 = arith.mulf %396, %393 : vector<16x16xf32>
    %398 = arith.select %395, %393, %397 : vector<16x16xi1>, vector<16x16xf32>
    %cst_108 = arith.constant -1.000000e+30 : f32
    %399 = vector.broadcast %cst_108 : f32 to vector<16x16xf32>
    %400 = arith.select %387, %398, %399 : vector<16x16xi1>, vector<16x16xf32>
    %cst_109 = arith.constant dense<0xFF800000> : vector<16xf32>
    %401 = vector.multi_reduction <maximumf>, %400, %cst_109 [1] : vector<16x16xf32> to vector<16xf32>
    %402 = vector.shape_cast %401 : vector<16xf32> to vector<16x1xf32>
    %403 = vector.broadcast %402 : vector<16x1xf32> to vector<16x16xf32>
    %404 = arith.subf %400, %403 : vector<16x16xf32>
    %405 = math.exp %404 : vector<16x16xf32>
    %cst_110 = arith.constant 0.000000e+00 : f32
    %406 = vector.broadcast %cst_110 : f32 to vector<16x16xf32>
    %407 = arith.select %387, %405, %406 : vector<16x16xi1>, vector<16x16xf32>
    %cst_111 = arith.constant dense<0.000000e+00> : vector<16xf32>
    %408 = vector.multi_reduction <add>, %407, %cst_111 [1] : vector<16x16xf32> to vector<16xf32>
    %409 = vector.shape_cast %408 : vector<16xf32> to vector<16x1xf32>
    %cst_112 = arith.constant 1.000000e-30 : f32
    %410 = vector.broadcast %cst_112 : f32 to vector<16x1xf32>
    %411 = arith.maximumf %409, %410 : vector<16x1xf32>
    %412 = tpu.reciprocal %411 {approx = true} : vector<16x1xf32> -> vector<16x1xf32>
    %413 = vector.broadcast %412 : vector<16x1xf32> to vector<16x16xf32>
    %414 = arith.mulf %407, %413 : vector<16x16xf32>
    %cst_113 = arith.constant dense<0.000000e+00> : vector<16x16xf32>
    %415 = tpu.matmul %414, %388, %cst_113 {dimension_numbers = #tpu.dot_dimension_numbers<[1], [0], [0], [1], [0, 0, 1, 1], [], []>} : vector<16x16xf32>, vector<16x16xf32>, vector<16x16xf32> -> vector<16x16xf32>
    %416 = vector.extract_strided_slice %239 {offsets = [0, 80], sizes = [16, 16], strides = [1, 1]} : vector<16x96xf32> to vector<16x16xf32>
    %417 = vector.extract_strided_slice %240 {offsets = [0, 5], sizes = [16, 1], strides = [1, 1]} : vector<16x8xf32> to vector<16x1xf32>
    %418 = vector.extract_strided_slice %242 {offsets = [5, 0], sizes = [1, 16], strides = [1, 1]} : vector<8x16xf32> to vector<1x16xf32>
    %419 = vector.broadcast %417 : vector<16x1xf32> to vector<16x16xf32>
    %420 = vector.broadcast %418 : vector<1x16xf32> to vector<16x16xf32>
    %421 = arith.addf %419, %420 : vector<16x16xf32>
    %cst_114 = arith.constant 0.000000e+00 : f32
    %422 = vector.broadcast %cst_114 : f32 to vector<16x16xf32>
    %423 = arith.cmpf ogt, %421, %422 : vector<16x16xf32>
    %cst_115 = arith.constant 2.000000e-01 : f32
    %424 = vector.broadcast %cst_115 : f32 to vector<16x16xf32>
    %425 = arith.mulf %424, %421 : vector<16x16xf32>
    %426 = arith.select %423, %421, %425 : vector<16x16xi1>, vector<16x16xf32>
    %cst_116 = arith.constant -1.000000e+30 : f32
    %427 = vector.broadcast %cst_116 : f32 to vector<16x16xf32>
    %428 = arith.select %387, %426, %427 : vector<16x16xi1>, vector<16x16xf32>
    %cst_117 = arith.constant dense<0xFF800000> : vector<16xf32>
    %429 = vector.multi_reduction <maximumf>, %428, %cst_117 [1] : vector<16x16xf32> to vector<16xf32>
    %430 = vector.shape_cast %429 : vector<16xf32> to vector<16x1xf32>
    %431 = vector.broadcast %430 : vector<16x1xf32> to vector<16x16xf32>
    %432 = arith.subf %428, %431 : vector<16x16xf32>
    %433 = math.exp %432 : vector<16x16xf32>
    %cst_118 = arith.constant 0.000000e+00 : f32
    %434 = vector.broadcast %cst_118 : f32 to vector<16x16xf32>
    %435 = arith.select %387, %433, %434 : vector<16x16xi1>, vector<16x16xf32>
    %cst_119 = arith.constant dense<0.000000e+00> : vector<16xf32>
    %436 = vector.multi_reduction <add>, %435, %cst_119 [1] : vector<16x16xf32> to vector<16xf32>
    %437 = vector.shape_cast %436 : vector<16xf32> to vector<16x1xf32>
    %cst_120 = arith.constant 1.000000e-30 : f32
    %438 = vector.broadcast %cst_120 : f32 to vector<16x1xf32>
    %439 = arith.maximumf %437, %438 : vector<16x1xf32>
    %440 = tpu.reciprocal %439 {approx = true} : vector<16x1xf32> -> vector<16x1xf32>
    %441 = vector.broadcast %440 : vector<16x1xf32> to vector<16x16xf32>
    %442 = arith.mulf %435, %441 : vector<16x16xf32>
    %cst_121 = arith.constant dense<0.000000e+00> : vector<16x16xf32>
    %443 = tpu.matmul %442, %416, %cst_121 {dimension_numbers = #tpu.dot_dimension_numbers<[1], [0], [0], [1], [0, 0, 1, 1], [], []>} : vector<16x16xf32>, vector<16x16xf32>, vector<16x16xf32> -> vector<16x16xf32>
    %444 = tpu.concatenate %415, %443 in 1 : vector<16x16xf32>, vector<16x16xf32> -> vector<16x32xf32>
    %445 = vector.extract_strided_slice %5 {offsets = [0, 64], sizes = [1, 32], strides = [1, 1]} : vector<1x128xf32> to vector<1x32xf32>
    %446 = vector.broadcast %445 : vector<1x32xf32> to vector<16x32xf32>
    %447 = arith.addf %444, %446 : vector<16x32xf32>
    %cst_122 = arith.constant 0.000000e+00 : f32
    %448 = vector.broadcast %cst_122 : f32 to vector<16x32xf32>
    %449 = arith.cmpf ogt, %447, %448 : vector<16x32xf32>
    %cst_123 = arith.constant 0.000000e+00 : f32
    %450 = vector.broadcast %cst_123 : f32 to vector<16x32xf32>
    %451 = arith.minimumf %447, %450 : vector<16x32xf32>
    %452 = math.exp %451 : vector<16x32xf32>
    %cst_124 = arith.constant 1.000000e+00 : f32
    %453 = vector.broadcast %cst_124 : f32 to vector<16x32xf32>
    %454 = arith.subf %452, %453 : vector<16x32xf32>
    %455 = arith.select %449, %447, %454 : vector<16x32xi1>, vector<16x32xf32>
    %456 = vector.extract_strided_slice %13 {offsets = [32, 0], sizes = [16, 96], strides = [1, 1]} : vector<64x96xf32> to vector<16x96xf32>
    %457 = vector.extract_strided_slice %15 {offsets = [32, 0], sizes = [16, 8], strides = [1, 1]} : vector<64x8xf32> to vector<16x8xf32>
    %458 = vector.extract_strided_slice %9 {offsets = [32, 0], sizes = [16, 48], strides = [1, 1]} : vector<64x48xf32> to vector<16x48xf32>
    %459 = vector.extract_strided_slice %21 {offsets = [0, 32], sizes = [8, 16], strides = [1, 1]} : vector<8x64xf32> to vector<8x16xf32>
    %460 = vector.extract_strided_slice %458 {offsets = [0, 0], sizes = [16, 16], strides = [1, 1]} : vector<16x48xf32> to vector<16x16xf32>
    %cst_125 = arith.constant 0.000000e+00 : f32
    %461 = vector.broadcast %cst_125 : f32 to vector<16x16xf32>
    %462 = arith.cmpf ogt, %460, %461 : vector<16x16xf32>
    %463 = vector.extract_strided_slice %456 {offsets = [0, 0], sizes = [16, 16], strides = [1, 1]} : vector<16x96xf32> to vector<16x16xf32>
    %464 = vector.extract_strided_slice %457 {offsets = [0, 0], sizes = [16, 1], strides = [1, 1]} : vector<16x8xf32> to vector<16x1xf32>
    %465 = vector.extract_strided_slice %459 {offsets = [0, 0], sizes = [1, 16], strides = [1, 1]} : vector<8x16xf32> to vector<1x16xf32>
    %466 = vector.broadcast %464 : vector<16x1xf32> to vector<16x16xf32>
    %467 = vector.broadcast %465 : vector<1x16xf32> to vector<16x16xf32>
    %468 = arith.addf %466, %467 : vector<16x16xf32>
    %cst_126 = arith.constant 0.000000e+00 : f32
    %469 = vector.broadcast %cst_126 : f32 to vector<16x16xf32>
    %470 = arith.cmpf ogt, %468, %469 : vector<16x16xf32>
    %cst_127 = arith.constant 2.000000e-01 : f32
    %471 = vector.broadcast %cst_127 : f32 to vector<16x16xf32>
    %472 = arith.mulf %471, %468 : vector<16x16xf32>
    %473 = arith.select %470, %468, %472 : vector<16x16xi1>, vector<16x16xf32>
    %cst_128 = arith.constant -1.000000e+30 : f32
    %474 = vector.broadcast %cst_128 : f32 to vector<16x16xf32>
    %475 = arith.select %462, %473, %474 : vector<16x16xi1>, vector<16x16xf32>
    %cst_129 = arith.constant dense<0xFF800000> : vector<16xf32>
    %476 = vector.multi_reduction <maximumf>, %475, %cst_129 [1] : vector<16x16xf32> to vector<16xf32>
    %477 = vector.shape_cast %476 : vector<16xf32> to vector<16x1xf32>
    %478 = vector.broadcast %477 : vector<16x1xf32> to vector<16x16xf32>
    %479 = arith.subf %475, %478 : vector<16x16xf32>
    %480 = math.exp %479 : vector<16x16xf32>
    %cst_130 = arith.constant 0.000000e+00 : f32
    %481 = vector.broadcast %cst_130 : f32 to vector<16x16xf32>
    %482 = arith.select %462, %480, %481 : vector<16x16xi1>, vector<16x16xf32>
    %cst_131 = arith.constant dense<0.000000e+00> : vector<16xf32>
    %483 = vector.multi_reduction <add>, %482, %cst_131 [1] : vector<16x16xf32> to vector<16xf32>
    %484 = vector.shape_cast %483 : vector<16xf32> to vector<16x1xf32>
    %cst_132 = arith.constant 1.000000e-30 : f32
    %485 = vector.broadcast %cst_132 : f32 to vector<16x1xf32>
    %486 = arith.maximumf %484, %485 : vector<16x1xf32>
    %487 = tpu.reciprocal %486 {approx = true} : vector<16x1xf32> -> vector<16x1xf32>
    %488 = vector.broadcast %487 : vector<16x1xf32> to vector<16x16xf32>
    %489 = arith.mulf %482, %488 : vector<16x16xf32>
    %cst_133 = arith.constant dense<0.000000e+00> : vector<16x16xf32>
    %490 = tpu.matmul %489, %463, %cst_133 {dimension_numbers = #tpu.dot_dimension_numbers<[1], [0], [0], [1], [0, 0, 1, 1], [], []>} : vector<16x16xf32>, vector<16x16xf32>, vector<16x16xf32> -> vector<16x16xf32>
    %491 = vector.extract_strided_slice %456 {offsets = [0, 16], sizes = [16, 16], strides = [1, 1]} : vector<16x96xf32> to vector<16x16xf32>
    %492 = vector.extract_strided_slice %457 {offsets = [0, 1], sizes = [16, 1], strides = [1, 1]} : vector<16x8xf32> to vector<16x1xf32>
    %493 = vector.extract_strided_slice %459 {offsets = [1, 0], sizes = [1, 16], strides = [1, 1]} : vector<8x16xf32> to vector<1x16xf32>
    %494 = vector.broadcast %492 : vector<16x1xf32> to vector<16x16xf32>
    %495 = vector.broadcast %493 : vector<1x16xf32> to vector<16x16xf32>
    %496 = arith.addf %494, %495 : vector<16x16xf32>
    %cst_134 = arith.constant 0.000000e+00 : f32
    %497 = vector.broadcast %cst_134 : f32 to vector<16x16xf32>
    %498 = arith.cmpf ogt, %496, %497 : vector<16x16xf32>
    %cst_135 = arith.constant 2.000000e-01 : f32
    %499 = vector.broadcast %cst_135 : f32 to vector<16x16xf32>
    %500 = arith.mulf %499, %496 : vector<16x16xf32>
    %501 = arith.select %498, %496, %500 : vector<16x16xi1>, vector<16x16xf32>
    %cst_136 = arith.constant -1.000000e+30 : f32
    %502 = vector.broadcast %cst_136 : f32 to vector<16x16xf32>
    %503 = arith.select %462, %501, %502 : vector<16x16xi1>, vector<16x16xf32>
    %cst_137 = arith.constant dense<0xFF800000> : vector<16xf32>
    %504 = vector.multi_reduction <maximumf>, %503, %cst_137 [1] : vector<16x16xf32> to vector<16xf32>
    %505 = vector.shape_cast %504 : vector<16xf32> to vector<16x1xf32>
    %506 = vector.broadcast %505 : vector<16x1xf32> to vector<16x16xf32>
    %507 = arith.subf %503, %506 : vector<16x16xf32>
    %508 = math.exp %507 : vector<16x16xf32>
    %cst_138 = arith.constant 0.000000e+00 : f32
    %509 = vector.broadcast %cst_138 : f32 to vector<16x16xf32>
    %510 = arith.select %462, %508, %509 : vector<16x16xi1>, vector<16x16xf32>
    %cst_139 = arith.constant dense<0.000000e+00> : vector<16xf32>
    %511 = vector.multi_reduction <add>, %510, %cst_139 [1] : vector<16x16xf32> to vector<16xf32>
    %512 = vector.shape_cast %511 : vector<16xf32> to vector<16x1xf32>
    %cst_140 = arith.constant 1.000000e-30 : f32
    %513 = vector.broadcast %cst_140 : f32 to vector<16x1xf32>
    %514 = arith.maximumf %512, %513 : vector<16x1xf32>
    %515 = tpu.reciprocal %514 {approx = true} : vector<16x1xf32> -> vector<16x1xf32>
    %516 = vector.broadcast %515 : vector<16x1xf32> to vector<16x16xf32>
    %517 = arith.mulf %510, %516 : vector<16x16xf32>
    %cst_141 = arith.constant dense<0.000000e+00> : vector<16x16xf32>
    %518 = tpu.matmul %517, %491, %cst_141 {dimension_numbers = #tpu.dot_dimension_numbers<[1], [0], [0], [1], [0, 0, 1, 1], [], []>} : vector<16x16xf32>, vector<16x16xf32>, vector<16x16xf32> -> vector<16x16xf32>
    %519 = tpu.concatenate %490, %518 in 1 : vector<16x16xf32>, vector<16x16xf32> -> vector<16x32xf32>
    %520 = vector.extract_strided_slice %5 {offsets = [0, 0], sizes = [1, 32], strides = [1, 1]} : vector<1x128xf32> to vector<1x32xf32>
    %521 = vector.broadcast %520 : vector<1x32xf32> to vector<16x32xf32>
    %522 = arith.addf %519, %521 : vector<16x32xf32>
    %cst_142 = arith.constant 0.000000e+00 : f32
    %523 = vector.broadcast %cst_142 : f32 to vector<16x32xf32>
    %524 = arith.cmpf ogt, %522, %523 : vector<16x32xf32>
    %cst_143 = arith.constant 0.000000e+00 : f32
    %525 = vector.broadcast %cst_143 : f32 to vector<16x32xf32>
    %526 = arith.minimumf %522, %525 : vector<16x32xf32>
    %527 = math.exp %526 : vector<16x32xf32>
    %cst_144 = arith.constant 1.000000e+00 : f32
    %528 = vector.broadcast %cst_144 : f32 to vector<16x32xf32>
    %529 = arith.subf %527, %528 : vector<16x32xf32>
    %530 = arith.select %524, %522, %529 : vector<16x32xi1>, vector<16x32xf32>
    %531 = vector.extract_strided_slice %458 {offsets = [0, 16], sizes = [16, 16], strides = [1, 1]} : vector<16x48xf32> to vector<16x16xf32>
    %cst_145 = arith.constant 0.000000e+00 : f32
    %532 = vector.broadcast %cst_145 : f32 to vector<16x16xf32>
    %533 = arith.cmpf ogt, %531, %532 : vector<16x16xf32>
    %534 = vector.extract_strided_slice %456 {offsets = [0, 32], sizes = [16, 16], strides = [1, 1]} : vector<16x96xf32> to vector<16x16xf32>
    %535 = vector.extract_strided_slice %457 {offsets = [0, 2], sizes = [16, 1], strides = [1, 1]} : vector<16x8xf32> to vector<16x1xf32>
    %536 = vector.extract_strided_slice %459 {offsets = [2, 0], sizes = [1, 16], strides = [1, 1]} : vector<8x16xf32> to vector<1x16xf32>
    %537 = vector.broadcast %535 : vector<16x1xf32> to vector<16x16xf32>
    %538 = vector.broadcast %536 : vector<1x16xf32> to vector<16x16xf32>
    %539 = arith.addf %537, %538 : vector<16x16xf32>
    %cst_146 = arith.constant 0.000000e+00 : f32
    %540 = vector.broadcast %cst_146 : f32 to vector<16x16xf32>
    %541 = arith.cmpf ogt, %539, %540 : vector<16x16xf32>
    %cst_147 = arith.constant 2.000000e-01 : f32
    %542 = vector.broadcast %cst_147 : f32 to vector<16x16xf32>
    %543 = arith.mulf %542, %539 : vector<16x16xf32>
    %544 = arith.select %541, %539, %543 : vector<16x16xi1>, vector<16x16xf32>
    %cst_148 = arith.constant -1.000000e+30 : f32
    %545 = vector.broadcast %cst_148 : f32 to vector<16x16xf32>
    %546 = arith.select %533, %544, %545 : vector<16x16xi1>, vector<16x16xf32>
    %cst_149 = arith.constant dense<0xFF800000> : vector<16xf32>
    %547 = vector.multi_reduction <maximumf>, %546, %cst_149 [1] : vector<16x16xf32> to vector<16xf32>
    %548 = vector.shape_cast %547 : vector<16xf32> to vector<16x1xf32>
    %549 = vector.broadcast %548 : vector<16x1xf32> to vector<16x16xf32>
    %550 = arith.subf %546, %549 : vector<16x16xf32>
    %551 = math.exp %550 : vector<16x16xf32>
    %cst_150 = arith.constant 0.000000e+00 : f32
    %552 = vector.broadcast %cst_150 : f32 to vector<16x16xf32>
    %553 = arith.select %533, %551, %552 : vector<16x16xi1>, vector<16x16xf32>
    %cst_151 = arith.constant dense<0.000000e+00> : vector<16xf32>
    %554 = vector.multi_reduction <add>, %553, %cst_151 [1] : vector<16x16xf32> to vector<16xf32>
    %555 = vector.shape_cast %554 : vector<16xf32> to vector<16x1xf32>
    %cst_152 = arith.constant 1.000000e-30 : f32
    %556 = vector.broadcast %cst_152 : f32 to vector<16x1xf32>
    %557 = arith.maximumf %555, %556 : vector<16x1xf32>
    %558 = tpu.reciprocal %557 {approx = true} : vector<16x1xf32> -> vector<16x1xf32>
    %559 = vector.broadcast %558 : vector<16x1xf32> to vector<16x16xf32>
    %560 = arith.mulf %553, %559 : vector<16x16xf32>
    %cst_153 = arith.constant dense<0.000000e+00> : vector<16x16xf32>
    %561 = tpu.matmul %560, %534, %cst_153 {dimension_numbers = #tpu.dot_dimension_numbers<[1], [0], [0], [1], [0, 0, 1, 1], [], []>} : vector<16x16xf32>, vector<16x16xf32>, vector<16x16xf32> -> vector<16x16xf32>
    %562 = vector.extract_strided_slice %456 {offsets = [0, 48], sizes = [16, 16], strides = [1, 1]} : vector<16x96xf32> to vector<16x16xf32>
    %563 = vector.extract_strided_slice %457 {offsets = [0, 3], sizes = [16, 1], strides = [1, 1]} : vector<16x8xf32> to vector<16x1xf32>
    %564 = vector.extract_strided_slice %459 {offsets = [3, 0], sizes = [1, 16], strides = [1, 1]} : vector<8x16xf32> to vector<1x16xf32>
    %565 = vector.broadcast %563 : vector<16x1xf32> to vector<16x16xf32>
    %566 = vector.broadcast %564 : vector<1x16xf32> to vector<16x16xf32>
    %567 = arith.addf %565, %566 : vector<16x16xf32>
    %cst_154 = arith.constant 0.000000e+00 : f32
    %568 = vector.broadcast %cst_154 : f32 to vector<16x16xf32>
    %569 = arith.cmpf ogt, %567, %568 : vector<16x16xf32>
    %cst_155 = arith.constant 2.000000e-01 : f32
    %570 = vector.broadcast %cst_155 : f32 to vector<16x16xf32>
    %571 = arith.mulf %570, %567 : vector<16x16xf32>
    %572 = arith.select %569, %567, %571 : vector<16x16xi1>, vector<16x16xf32>
    %cst_156 = arith.constant -1.000000e+30 : f32
    %573 = vector.broadcast %cst_156 : f32 to vector<16x16xf32>
    %574 = arith.select %533, %572, %573 : vector<16x16xi1>, vector<16x16xf32>
    %cst_157 = arith.constant dense<0xFF800000> : vector<16xf32>
    %575 = vector.multi_reduction <maximumf>, %574, %cst_157 [1] : vector<16x16xf32> to vector<16xf32>
    %576 = vector.shape_cast %575 : vector<16xf32> to vector<16x1xf32>
    %577 = vector.broadcast %576 : vector<16x1xf32> to vector<16x16xf32>
    %578 = arith.subf %574, %577 : vector<16x16xf32>
    %579 = math.exp %578 : vector<16x16xf32>
    %cst_158 = arith.constant 0.000000e+00 : f32
    %580 = vector.broadcast %cst_158 : f32 to vector<16x16xf32>
    %581 = arith.select %533, %579, %580 : vector<16x16xi1>, vector<16x16xf32>
    %cst_159 = arith.constant dense<0.000000e+00> : vector<16xf32>
    %582 = vector.multi_reduction <add>, %581, %cst_159 [1] : vector<16x16xf32> to vector<16xf32>
    %583 = vector.shape_cast %582 : vector<16xf32> to vector<16x1xf32>
    %cst_160 = arith.constant 1.000000e-30 : f32
    %584 = vector.broadcast %cst_160 : f32 to vector<16x1xf32>
    %585 = arith.maximumf %583, %584 : vector<16x1xf32>
    %586 = tpu.reciprocal %585 {approx = true} : vector<16x1xf32> -> vector<16x1xf32>
    %587 = vector.broadcast %586 : vector<16x1xf32> to vector<16x16xf32>
    %588 = arith.mulf %581, %587 : vector<16x16xf32>
    %cst_161 = arith.constant dense<0.000000e+00> : vector<16x16xf32>
    %589 = tpu.matmul %588, %562, %cst_161 {dimension_numbers = #tpu.dot_dimension_numbers<[1], [0], [0], [1], [0, 0, 1, 1], [], []>} : vector<16x16xf32>, vector<16x16xf32>, vector<16x16xf32> -> vector<16x16xf32>
    %590 = tpu.concatenate %561, %589 in 1 : vector<16x16xf32>, vector<16x16xf32> -> vector<16x32xf32>
    %591 = vector.extract_strided_slice %5 {offsets = [0, 32], sizes = [1, 32], strides = [1, 1]} : vector<1x128xf32> to vector<1x32xf32>
    %592 = vector.broadcast %591 : vector<1x32xf32> to vector<16x32xf32>
    %593 = arith.addf %590, %592 : vector<16x32xf32>
    %cst_162 = arith.constant 0.000000e+00 : f32
    %594 = vector.broadcast %cst_162 : f32 to vector<16x32xf32>
    %595 = arith.cmpf ogt, %593, %594 : vector<16x32xf32>
    %cst_163 = arith.constant 0.000000e+00 : f32
    %596 = vector.broadcast %cst_163 : f32 to vector<16x32xf32>
    %597 = arith.minimumf %593, %596 : vector<16x32xf32>
    %598 = math.exp %597 : vector<16x32xf32>
    %cst_164 = arith.constant 1.000000e+00 : f32
    %599 = vector.broadcast %cst_164 : f32 to vector<16x32xf32>
    %600 = arith.subf %598, %599 : vector<16x32xf32>
    %601 = arith.select %595, %593, %600 : vector<16x32xi1>, vector<16x32xf32>
    %602 = vector.extract_strided_slice %458 {offsets = [0, 32], sizes = [16, 16], strides = [1, 1]} : vector<16x48xf32> to vector<16x16xf32>
    %cst_165 = arith.constant 0.000000e+00 : f32
    %603 = vector.broadcast %cst_165 : f32 to vector<16x16xf32>
    %604 = arith.cmpf ogt, %602, %603 : vector<16x16xf32>
    %605 = vector.extract_strided_slice %456 {offsets = [0, 64], sizes = [16, 16], strides = [1, 1]} : vector<16x96xf32> to vector<16x16xf32>
    %606 = vector.extract_strided_slice %457 {offsets = [0, 4], sizes = [16, 1], strides = [1, 1]} : vector<16x8xf32> to vector<16x1xf32>
    %607 = vector.extract_strided_slice %459 {offsets = [4, 0], sizes = [1, 16], strides = [1, 1]} : vector<8x16xf32> to vector<1x16xf32>
    %608 = vector.broadcast %606 : vector<16x1xf32> to vector<16x16xf32>
    %609 = vector.broadcast %607 : vector<1x16xf32> to vector<16x16xf32>
    %610 = arith.addf %608, %609 : vector<16x16xf32>
    %cst_166 = arith.constant 0.000000e+00 : f32
    %611 = vector.broadcast %cst_166 : f32 to vector<16x16xf32>
    %612 = arith.cmpf ogt, %610, %611 : vector<16x16xf32>
    %cst_167 = arith.constant 2.000000e-01 : f32
    %613 = vector.broadcast %cst_167 : f32 to vector<16x16xf32>
    %614 = arith.mulf %613, %610 : vector<16x16xf32>
    %615 = arith.select %612, %610, %614 : vector<16x16xi1>, vector<16x16xf32>
    %cst_168 = arith.constant -1.000000e+30 : f32
    %616 = vector.broadcast %cst_168 : f32 to vector<16x16xf32>
    %617 = arith.select %604, %615, %616 : vector<16x16xi1>, vector<16x16xf32>
    %cst_169 = arith.constant dense<0xFF800000> : vector<16xf32>
    %618 = vector.multi_reduction <maximumf>, %617, %cst_169 [1] : vector<16x16xf32> to vector<16xf32>
    %619 = vector.shape_cast %618 : vector<16xf32> to vector<16x1xf32>
    %620 = vector.broadcast %619 : vector<16x1xf32> to vector<16x16xf32>
    %621 = arith.subf %617, %620 : vector<16x16xf32>
    %622 = math.exp %621 : vector<16x16xf32>
    %cst_170 = arith.constant 0.000000e+00 : f32
    %623 = vector.broadcast %cst_170 : f32 to vector<16x16xf32>
    %624 = arith.select %604, %622, %623 : vector<16x16xi1>, vector<16x16xf32>
    %cst_171 = arith.constant dense<0.000000e+00> : vector<16xf32>
    %625 = vector.multi_reduction <add>, %624, %cst_171 [1] : vector<16x16xf32> to vector<16xf32>
    %626 = vector.shape_cast %625 : vector<16xf32> to vector<16x1xf32>
    %cst_172 = arith.constant 1.000000e-30 : f32
    %627 = vector.broadcast %cst_172 : f32 to vector<16x1xf32>
    %628 = arith.maximumf %626, %627 : vector<16x1xf32>
    %629 = tpu.reciprocal %628 {approx = true} : vector<16x1xf32> -> vector<16x1xf32>
    %630 = vector.broadcast %629 : vector<16x1xf32> to vector<16x16xf32>
    %631 = arith.mulf %624, %630 : vector<16x16xf32>
    %cst_173 = arith.constant dense<0.000000e+00> : vector<16x16xf32>
    %632 = tpu.matmul %631, %605, %cst_173 {dimension_numbers = #tpu.dot_dimension_numbers<[1], [0], [0], [1], [0, 0, 1, 1], [], []>} : vector<16x16xf32>, vector<16x16xf32>, vector<16x16xf32> -> vector<16x16xf32>
    %633 = vector.extract_strided_slice %456 {offsets = [0, 80], sizes = [16, 16], strides = [1, 1]} : vector<16x96xf32> to vector<16x16xf32>
    %634 = vector.extract_strided_slice %457 {offsets = [0, 5], sizes = [16, 1], strides = [1, 1]} : vector<16x8xf32> to vector<16x1xf32>
    %635 = vector.extract_strided_slice %459 {offsets = [5, 0], sizes = [1, 16], strides = [1, 1]} : vector<8x16xf32> to vector<1x16xf32>
    %636 = vector.broadcast %634 : vector<16x1xf32> to vector<16x16xf32>
    %637 = vector.broadcast %635 : vector<1x16xf32> to vector<16x16xf32>
    %638 = arith.addf %636, %637 : vector<16x16xf32>
    %cst_174 = arith.constant 0.000000e+00 : f32
    %639 = vector.broadcast %cst_174 : f32 to vector<16x16xf32>
    %640 = arith.cmpf ogt, %638, %639 : vector<16x16xf32>
    %cst_175 = arith.constant 2.000000e-01 : f32
    %641 = vector.broadcast %cst_175 : f32 to vector<16x16xf32>
    %642 = arith.mulf %641, %638 : vector<16x16xf32>
    %643 = arith.select %640, %638, %642 : vector<16x16xi1>, vector<16x16xf32>
    %cst_176 = arith.constant -1.000000e+30 : f32
    %644 = vector.broadcast %cst_176 : f32 to vector<16x16xf32>
    %645 = arith.select %604, %643, %644 : vector<16x16xi1>, vector<16x16xf32>
    %cst_177 = arith.constant dense<0xFF800000> : vector<16xf32>
    %646 = vector.multi_reduction <maximumf>, %645, %cst_177 [1] : vector<16x16xf32> to vector<16xf32>
    %647 = vector.shape_cast %646 : vector<16xf32> to vector<16x1xf32>
    %648 = vector.broadcast %647 : vector<16x1xf32> to vector<16x16xf32>
    %649 = arith.subf %645, %648 : vector<16x16xf32>
    %650 = math.exp %649 : vector<16x16xf32>
    %cst_178 = arith.constant 0.000000e+00 : f32
    %651 = vector.broadcast %cst_178 : f32 to vector<16x16xf32>
    %652 = arith.select %604, %650, %651 : vector<16x16xi1>, vector<16x16xf32>
    %cst_179 = arith.constant dense<0.000000e+00> : vector<16xf32>
    %653 = vector.multi_reduction <add>, %652, %cst_179 [1] : vector<16x16xf32> to vector<16xf32>
    %654 = vector.shape_cast %653 : vector<16xf32> to vector<16x1xf32>
    %cst_180 = arith.constant 1.000000e-30 : f32
    %655 = vector.broadcast %cst_180 : f32 to vector<16x1xf32>
    %656 = arith.maximumf %654, %655 : vector<16x1xf32>
    %657 = tpu.reciprocal %656 {approx = true} : vector<16x1xf32> -> vector<16x1xf32>
    %658 = vector.broadcast %657 : vector<16x1xf32> to vector<16x16xf32>
    %659 = arith.mulf %652, %658 : vector<16x16xf32>
    %cst_181 = arith.constant dense<0.000000e+00> : vector<16x16xf32>
    %660 = tpu.matmul %659, %633, %cst_181 {dimension_numbers = #tpu.dot_dimension_numbers<[1], [0], [0], [1], [0, 0, 1, 1], [], []>} : vector<16x16xf32>, vector<16x16xf32>, vector<16x16xf32> -> vector<16x16xf32>
    %661 = tpu.concatenate %632, %660 in 1 : vector<16x16xf32>, vector<16x16xf32> -> vector<16x32xf32>
    %662 = vector.extract_strided_slice %5 {offsets = [0, 64], sizes = [1, 32], strides = [1, 1]} : vector<1x128xf32> to vector<1x32xf32>
    %663 = vector.broadcast %662 : vector<1x32xf32> to vector<16x32xf32>
    %664 = arith.addf %661, %663 : vector<16x32xf32>
    %cst_182 = arith.constant 0.000000e+00 : f32
    %665 = vector.broadcast %cst_182 : f32 to vector<16x32xf32>
    %666 = arith.cmpf ogt, %664, %665 : vector<16x32xf32>
    %cst_183 = arith.constant 0.000000e+00 : f32
    %667 = vector.broadcast %cst_183 : f32 to vector<16x32xf32>
    %668 = arith.minimumf %664, %667 : vector<16x32xf32>
    %669 = math.exp %668 : vector<16x32xf32>
    %cst_184 = arith.constant 1.000000e+00 : f32
    %670 = vector.broadcast %cst_184 : f32 to vector<16x32xf32>
    %671 = arith.subf %669, %670 : vector<16x32xf32>
    %672 = arith.select %666, %664, %671 : vector<16x32xi1>, vector<16x32xf32>
    %673 = vector.extract_strided_slice %13 {offsets = [48, 0], sizes = [16, 96], strides = [1, 1]} : vector<64x96xf32> to vector<16x96xf32>
    %674 = vector.extract_strided_slice %15 {offsets = [48, 0], sizes = [16, 8], strides = [1, 1]} : vector<64x8xf32> to vector<16x8xf32>
    %675 = vector.extract_strided_slice %9 {offsets = [48, 0], sizes = [16, 48], strides = [1, 1]} : vector<64x48xf32> to vector<16x48xf32>
    %676 = vector.extract_strided_slice %21 {offsets = [0, 48], sizes = [8, 16], strides = [1, 1]} : vector<8x64xf32> to vector<8x16xf32>
    %677 = vector.extract_strided_slice %675 {offsets = [0, 0], sizes = [16, 16], strides = [1, 1]} : vector<16x48xf32> to vector<16x16xf32>
    %cst_185 = arith.constant 0.000000e+00 : f32
    %678 = vector.broadcast %cst_185 : f32 to vector<16x16xf32>
    %679 = arith.cmpf ogt, %677, %678 : vector<16x16xf32>
    %680 = vector.extract_strided_slice %673 {offsets = [0, 0], sizes = [16, 16], strides = [1, 1]} : vector<16x96xf32> to vector<16x16xf32>
    %681 = vector.extract_strided_slice %674 {offsets = [0, 0], sizes = [16, 1], strides = [1, 1]} : vector<16x8xf32> to vector<16x1xf32>
    %682 = vector.extract_strided_slice %676 {offsets = [0, 0], sizes = [1, 16], strides = [1, 1]} : vector<8x16xf32> to vector<1x16xf32>
    %683 = vector.broadcast %681 : vector<16x1xf32> to vector<16x16xf32>
    %684 = vector.broadcast %682 : vector<1x16xf32> to vector<16x16xf32>
    %685 = arith.addf %683, %684 : vector<16x16xf32>
    %cst_186 = arith.constant 0.000000e+00 : f32
    %686 = vector.broadcast %cst_186 : f32 to vector<16x16xf32>
    %687 = arith.cmpf ogt, %685, %686 : vector<16x16xf32>
    %cst_187 = arith.constant 2.000000e-01 : f32
    %688 = vector.broadcast %cst_187 : f32 to vector<16x16xf32>
    %689 = arith.mulf %688, %685 : vector<16x16xf32>
    %690 = arith.select %687, %685, %689 : vector<16x16xi1>, vector<16x16xf32>
    %cst_188 = arith.constant -1.000000e+30 : f32
    %691 = vector.broadcast %cst_188 : f32 to vector<16x16xf32>
    %692 = arith.select %679, %690, %691 : vector<16x16xi1>, vector<16x16xf32>
    %cst_189 = arith.constant dense<0xFF800000> : vector<16xf32>
    %693 = vector.multi_reduction <maximumf>, %692, %cst_189 [1] : vector<16x16xf32> to vector<16xf32>
    %694 = vector.shape_cast %693 : vector<16xf32> to vector<16x1xf32>
    %695 = vector.broadcast %694 : vector<16x1xf32> to vector<16x16xf32>
    %696 = arith.subf %692, %695 : vector<16x16xf32>
    %697 = math.exp %696 : vector<16x16xf32>
    %cst_190 = arith.constant 0.000000e+00 : f32
    %698 = vector.broadcast %cst_190 : f32 to vector<16x16xf32>
    %699 = arith.select %679, %697, %698 : vector<16x16xi1>, vector<16x16xf32>
    %cst_191 = arith.constant dense<0.000000e+00> : vector<16xf32>
    %700 = vector.multi_reduction <add>, %699, %cst_191 [1] : vector<16x16xf32> to vector<16xf32>
    %701 = vector.shape_cast %700 : vector<16xf32> to vector<16x1xf32>
    %cst_192 = arith.constant 1.000000e-30 : f32
    %702 = vector.broadcast %cst_192 : f32 to vector<16x1xf32>
    %703 = arith.maximumf %701, %702 : vector<16x1xf32>
    %704 = tpu.reciprocal %703 {approx = true} : vector<16x1xf32> -> vector<16x1xf32>
    %705 = vector.broadcast %704 : vector<16x1xf32> to vector<16x16xf32>
    %706 = arith.mulf %699, %705 : vector<16x16xf32>
    %cst_193 = arith.constant dense<0.000000e+00> : vector<16x16xf32>
    %707 = tpu.matmul %706, %680, %cst_193 {dimension_numbers = #tpu.dot_dimension_numbers<[1], [0], [0], [1], [0, 0, 1, 1], [], []>} : vector<16x16xf32>, vector<16x16xf32>, vector<16x16xf32> -> vector<16x16xf32>
    %708 = vector.extract_strided_slice %673 {offsets = [0, 16], sizes = [16, 16], strides = [1, 1]} : vector<16x96xf32> to vector<16x16xf32>
    %709 = vector.extract_strided_slice %674 {offsets = [0, 1], sizes = [16, 1], strides = [1, 1]} : vector<16x8xf32> to vector<16x1xf32>
    %710 = vector.extract_strided_slice %676 {offsets = [1, 0], sizes = [1, 16], strides = [1, 1]} : vector<8x16xf32> to vector<1x16xf32>
    %711 = vector.broadcast %709 : vector<16x1xf32> to vector<16x16xf32>
    %712 = vector.broadcast %710 : vector<1x16xf32> to vector<16x16xf32>
    %713 = arith.addf %711, %712 : vector<16x16xf32>
    %cst_194 = arith.constant 0.000000e+00 : f32
    %714 = vector.broadcast %cst_194 : f32 to vector<16x16xf32>
    %715 = arith.cmpf ogt, %713, %714 : vector<16x16xf32>
    %cst_195 = arith.constant 2.000000e-01 : f32
    %716 = vector.broadcast %cst_195 : f32 to vector<16x16xf32>
    %717 = arith.mulf %716, %713 : vector<16x16xf32>
    %718 = arith.select %715, %713, %717 : vector<16x16xi1>, vector<16x16xf32>
    %cst_196 = arith.constant -1.000000e+30 : f32
    %719 = vector.broadcast %cst_196 : f32 to vector<16x16xf32>
    %720 = arith.select %679, %718, %719 : vector<16x16xi1>, vector<16x16xf32>
    %cst_197 = arith.constant dense<0xFF800000> : vector<16xf32>
    %721 = vector.multi_reduction <maximumf>, %720, %cst_197 [1] : vector<16x16xf32> to vector<16xf32>
    %722 = vector.shape_cast %721 : vector<16xf32> to vector<16x1xf32>
    %723 = vector.broadcast %722 : vector<16x1xf32> to vector<16x16xf32>
    %724 = arith.subf %720, %723 : vector<16x16xf32>
    %725 = math.exp %724 : vector<16x16xf32>
    %cst_198 = arith.constant 0.000000e+00 : f32
    %726 = vector.broadcast %cst_198 : f32 to vector<16x16xf32>
    %727 = arith.select %679, %725, %726 : vector<16x16xi1>, vector<16x16xf32>
    %cst_199 = arith.constant dense<0.000000e+00> : vector<16xf32>
    %728 = vector.multi_reduction <add>, %727, %cst_199 [1] : vector<16x16xf32> to vector<16xf32>
    %729 = vector.shape_cast %728 : vector<16xf32> to vector<16x1xf32>
    %cst_200 = arith.constant 1.000000e-30 : f32
    %730 = vector.broadcast %cst_200 : f32 to vector<16x1xf32>
    %731 = arith.maximumf %729, %730 : vector<16x1xf32>
    %732 = tpu.reciprocal %731 {approx = true} : vector<16x1xf32> -> vector<16x1xf32>
    %733 = vector.broadcast %732 : vector<16x1xf32> to vector<16x16xf32>
    %734 = arith.mulf %727, %733 : vector<16x16xf32>
    %cst_201 = arith.constant dense<0.000000e+00> : vector<16x16xf32>
    %735 = tpu.matmul %734, %708, %cst_201 {dimension_numbers = #tpu.dot_dimension_numbers<[1], [0], [0], [1], [0, 0, 1, 1], [], []>} : vector<16x16xf32>, vector<16x16xf32>, vector<16x16xf32> -> vector<16x16xf32>
    %736 = tpu.concatenate %707, %735 in 1 : vector<16x16xf32>, vector<16x16xf32> -> vector<16x32xf32>
    %737 = vector.extract_strided_slice %5 {offsets = [0, 0], sizes = [1, 32], strides = [1, 1]} : vector<1x128xf32> to vector<1x32xf32>
    %738 = vector.broadcast %737 : vector<1x32xf32> to vector<16x32xf32>
    %739 = arith.addf %736, %738 : vector<16x32xf32>
    %cst_202 = arith.constant 0.000000e+00 : f32
    %740 = vector.broadcast %cst_202 : f32 to vector<16x32xf32>
    %741 = arith.cmpf ogt, %739, %740 : vector<16x32xf32>
    %cst_203 = arith.constant 0.000000e+00 : f32
    %742 = vector.broadcast %cst_203 : f32 to vector<16x32xf32>
    %743 = arith.minimumf %739, %742 : vector<16x32xf32>
    %744 = math.exp %743 : vector<16x32xf32>
    %cst_204 = arith.constant 1.000000e+00 : f32
    %745 = vector.broadcast %cst_204 : f32 to vector<16x32xf32>
    %746 = arith.subf %744, %745 : vector<16x32xf32>
    %747 = arith.select %741, %739, %746 : vector<16x32xi1>, vector<16x32xf32>
    %748 = vector.extract_strided_slice %675 {offsets = [0, 16], sizes = [16, 16], strides = [1, 1]} : vector<16x48xf32> to vector<16x16xf32>
    %cst_205 = arith.constant 0.000000e+00 : f32
    %749 = vector.broadcast %cst_205 : f32 to vector<16x16xf32>
    %750 = arith.cmpf ogt, %748, %749 : vector<16x16xf32>
    %751 = vector.extract_strided_slice %673 {offsets = [0, 32], sizes = [16, 16], strides = [1, 1]} : vector<16x96xf32> to vector<16x16xf32>
    %752 = vector.extract_strided_slice %674 {offsets = [0, 2], sizes = [16, 1], strides = [1, 1]} : vector<16x8xf32> to vector<16x1xf32>
    %753 = vector.extract_strided_slice %676 {offsets = [2, 0], sizes = [1, 16], strides = [1, 1]} : vector<8x16xf32> to vector<1x16xf32>
    %754 = vector.broadcast %752 : vector<16x1xf32> to vector<16x16xf32>
    %755 = vector.broadcast %753 : vector<1x16xf32> to vector<16x16xf32>
    %756 = arith.addf %754, %755 : vector<16x16xf32>
    %cst_206 = arith.constant 0.000000e+00 : f32
    %757 = vector.broadcast %cst_206 : f32 to vector<16x16xf32>
    %758 = arith.cmpf ogt, %756, %757 : vector<16x16xf32>
    %cst_207 = arith.constant 2.000000e-01 : f32
    %759 = vector.broadcast %cst_207 : f32 to vector<16x16xf32>
    %760 = arith.mulf %759, %756 : vector<16x16xf32>
    %761 = arith.select %758, %756, %760 : vector<16x16xi1>, vector<16x16xf32>
    %cst_208 = arith.constant -1.000000e+30 : f32
    %762 = vector.broadcast %cst_208 : f32 to vector<16x16xf32>
    %763 = arith.select %750, %761, %762 : vector<16x16xi1>, vector<16x16xf32>
    %cst_209 = arith.constant dense<0xFF800000> : vector<16xf32>
    %764 = vector.multi_reduction <maximumf>, %763, %cst_209 [1] : vector<16x16xf32> to vector<16xf32>
    %765 = vector.shape_cast %764 : vector<16xf32> to vector<16x1xf32>
    %766 = vector.broadcast %765 : vector<16x1xf32> to vector<16x16xf32>
    %767 = arith.subf %763, %766 : vector<16x16xf32>
    %768 = math.exp %767 : vector<16x16xf32>
    %cst_210 = arith.constant 0.000000e+00 : f32
    %769 = vector.broadcast %cst_210 : f32 to vector<16x16xf32>
    %770 = arith.select %750, %768, %769 : vector<16x16xi1>, vector<16x16xf32>
    %cst_211 = arith.constant dense<0.000000e+00> : vector<16xf32>
    %771 = vector.multi_reduction <add>, %770, %cst_211 [1] : vector<16x16xf32> to vector<16xf32>
    %772 = vector.shape_cast %771 : vector<16xf32> to vector<16x1xf32>
    %cst_212 = arith.constant 1.000000e-30 : f32
    %773 = vector.broadcast %cst_212 : f32 to vector<16x1xf32>
    %774 = arith.maximumf %772, %773 : vector<16x1xf32>
    %775 = tpu.reciprocal %774 {approx = true} : vector<16x1xf32> -> vector<16x1xf32>
    %776 = vector.broadcast %775 : vector<16x1xf32> to vector<16x16xf32>
    %777 = arith.mulf %770, %776 : vector<16x16xf32>
    %cst_213 = arith.constant dense<0.000000e+00> : vector<16x16xf32>
    %778 = tpu.matmul %777, %751, %cst_213 {dimension_numbers = #tpu.dot_dimension_numbers<[1], [0], [0], [1], [0, 0, 1, 1], [], []>} : vector<16x16xf32>, vector<16x16xf32>, vector<16x16xf32> -> vector<16x16xf32>
    %779 = vector.extract_strided_slice %673 {offsets = [0, 48], sizes = [16, 16], strides = [1, 1]} : vector<16x96xf32> to vector<16x16xf32>
    %780 = vector.extract_strided_slice %674 {offsets = [0, 3], sizes = [16, 1], strides = [1, 1]} : vector<16x8xf32> to vector<16x1xf32>
    %781 = vector.extract_strided_slice %676 {offsets = [3, 0], sizes = [1, 16], strides = [1, 1]} : vector<8x16xf32> to vector<1x16xf32>
    %782 = vector.broadcast %780 : vector<16x1xf32> to vector<16x16xf32>
    %783 = vector.broadcast %781 : vector<1x16xf32> to vector<16x16xf32>
    %784 = arith.addf %782, %783 : vector<16x16xf32>
    %cst_214 = arith.constant 0.000000e+00 : f32
    %785 = vector.broadcast %cst_214 : f32 to vector<16x16xf32>
    %786 = arith.cmpf ogt, %784, %785 : vector<16x16xf32>
    %cst_215 = arith.constant 2.000000e-01 : f32
    %787 = vector.broadcast %cst_215 : f32 to vector<16x16xf32>
    %788 = arith.mulf %787, %784 : vector<16x16xf32>
    %789 = arith.select %786, %784, %788 : vector<16x16xi1>, vector<16x16xf32>
    %cst_216 = arith.constant -1.000000e+30 : f32
    %790 = vector.broadcast %cst_216 : f32 to vector<16x16xf32>
    %791 = arith.select %750, %789, %790 : vector<16x16xi1>, vector<16x16xf32>
    %cst_217 = arith.constant dense<0xFF800000> : vector<16xf32>
    %792 = vector.multi_reduction <maximumf>, %791, %cst_217 [1] : vector<16x16xf32> to vector<16xf32>
    %793 = vector.shape_cast %792 : vector<16xf32> to vector<16x1xf32>
    %794 = vector.broadcast %793 : vector<16x1xf32> to vector<16x16xf32>
    %795 = arith.subf %791, %794 : vector<16x16xf32>
    %796 = math.exp %795 : vector<16x16xf32>
    %cst_218 = arith.constant 0.000000e+00 : f32
    %797 = vector.broadcast %cst_218 : f32 to vector<16x16xf32>
    %798 = arith.select %750, %796, %797 : vector<16x16xi1>, vector<16x16xf32>
    %cst_219 = arith.constant dense<0.000000e+00> : vector<16xf32>
    %799 = vector.multi_reduction <add>, %798, %cst_219 [1] : vector<16x16xf32> to vector<16xf32>
    %800 = vector.shape_cast %799 : vector<16xf32> to vector<16x1xf32>
    %cst_220 = arith.constant 1.000000e-30 : f32
    %801 = vector.broadcast %cst_220 : f32 to vector<16x1xf32>
    %802 = arith.maximumf %800, %801 : vector<16x1xf32>
    %803 = tpu.reciprocal %802 {approx = true} : vector<16x1xf32> -> vector<16x1xf32>
    %804 = vector.broadcast %803 : vector<16x1xf32> to vector<16x16xf32>
    %805 = arith.mulf %798, %804 : vector<16x16xf32>
    %cst_221 = arith.constant dense<0.000000e+00> : vector<16x16xf32>
    %806 = tpu.matmul %805, %779, %cst_221 {dimension_numbers = #tpu.dot_dimension_numbers<[1], [0], [0], [1], [0, 0, 1, 1], [], []>} : vector<16x16xf32>, vector<16x16xf32>, vector<16x16xf32> -> vector<16x16xf32>
    %807 = tpu.concatenate %778, %806 in 1 : vector<16x16xf32>, vector<16x16xf32> -> vector<16x32xf32>
    %808 = vector.extract_strided_slice %5 {offsets = [0, 32], sizes = [1, 32], strides = [1, 1]} : vector<1x128xf32> to vector<1x32xf32>
    %809 = vector.broadcast %808 : vector<1x32xf32> to vector<16x32xf32>
    %810 = arith.addf %807, %809 : vector<16x32xf32>
    %cst_222 = arith.constant 0.000000e+00 : f32
    %811 = vector.broadcast %cst_222 : f32 to vector<16x32xf32>
    %812 = arith.cmpf ogt, %810, %811 : vector<16x32xf32>
    %cst_223 = arith.constant 0.000000e+00 : f32
    %813 = vector.broadcast %cst_223 : f32 to vector<16x32xf32>
    %814 = arith.minimumf %810, %813 : vector<16x32xf32>
    %815 = math.exp %814 : vector<16x32xf32>
    %cst_224 = arith.constant 1.000000e+00 : f32
    %816 = vector.broadcast %cst_224 : f32 to vector<16x32xf32>
    %817 = arith.subf %815, %816 : vector<16x32xf32>
    %818 = arith.select %812, %810, %817 : vector<16x32xi1>, vector<16x32xf32>
    %819 = vector.extract_strided_slice %675 {offsets = [0, 32], sizes = [16, 16], strides = [1, 1]} : vector<16x48xf32> to vector<16x16xf32>
    %cst_225 = arith.constant 0.000000e+00 : f32
    %820 = vector.broadcast %cst_225 : f32 to vector<16x16xf32>
    %821 = arith.cmpf ogt, %819, %820 : vector<16x16xf32>
    %822 = vector.extract_strided_slice %673 {offsets = [0, 64], sizes = [16, 16], strides = [1, 1]} : vector<16x96xf32> to vector<16x16xf32>
    %823 = vector.extract_strided_slice %674 {offsets = [0, 4], sizes = [16, 1], strides = [1, 1]} : vector<16x8xf32> to vector<16x1xf32>
    %824 = vector.extract_strided_slice %676 {offsets = [4, 0], sizes = [1, 16], strides = [1, 1]} : vector<8x16xf32> to vector<1x16xf32>
    %825 = vector.broadcast %823 : vector<16x1xf32> to vector<16x16xf32>
    %826 = vector.broadcast %824 : vector<1x16xf32> to vector<16x16xf32>
    %827 = arith.addf %825, %826 : vector<16x16xf32>
    %cst_226 = arith.constant 0.000000e+00 : f32
    %828 = vector.broadcast %cst_226 : f32 to vector<16x16xf32>
    %829 = arith.cmpf ogt, %827, %828 : vector<16x16xf32>
    %cst_227 = arith.constant 2.000000e-01 : f32
    %830 = vector.broadcast %cst_227 : f32 to vector<16x16xf32>
    %831 = arith.mulf %830, %827 : vector<16x16xf32>
    %832 = arith.select %829, %827, %831 : vector<16x16xi1>, vector<16x16xf32>
    %cst_228 = arith.constant -1.000000e+30 : f32
    %833 = vector.broadcast %cst_228 : f32 to vector<16x16xf32>
    %834 = arith.select %821, %832, %833 : vector<16x16xi1>, vector<16x16xf32>
    %cst_229 = arith.constant dense<0xFF800000> : vector<16xf32>
    %835 = vector.multi_reduction <maximumf>, %834, %cst_229 [1] : vector<16x16xf32> to vector<16xf32>
    %836 = vector.shape_cast %835 : vector<16xf32> to vector<16x1xf32>
    %837 = vector.broadcast %836 : vector<16x1xf32> to vector<16x16xf32>
    %838 = arith.subf %834, %837 : vector<16x16xf32>
    %839 = math.exp %838 : vector<16x16xf32>
    %cst_230 = arith.constant 0.000000e+00 : f32
    %840 = vector.broadcast %cst_230 : f32 to vector<16x16xf32>
    %841 = arith.select %821, %839, %840 : vector<16x16xi1>, vector<16x16xf32>
    %cst_231 = arith.constant dense<0.000000e+00> : vector<16xf32>
    %842 = vector.multi_reduction <add>, %841, %cst_231 [1] : vector<16x16xf32> to vector<16xf32>
    %843 = vector.shape_cast %842 : vector<16xf32> to vector<16x1xf32>
    %cst_232 = arith.constant 1.000000e-30 : f32
    %844 = vector.broadcast %cst_232 : f32 to vector<16x1xf32>
    %845 = arith.maximumf %843, %844 : vector<16x1xf32>
    %846 = tpu.reciprocal %845 {approx = true} : vector<16x1xf32> -> vector<16x1xf32>
    %847 = vector.broadcast %846 : vector<16x1xf32> to vector<16x16xf32>
    %848 = arith.mulf %841, %847 : vector<16x16xf32>
    %cst_233 = arith.constant dense<0.000000e+00> : vector<16x16xf32>
    %849 = tpu.matmul %848, %822, %cst_233 {dimension_numbers = #tpu.dot_dimension_numbers<[1], [0], [0], [1], [0, 0, 1, 1], [], []>} : vector<16x16xf32>, vector<16x16xf32>, vector<16x16xf32> -> vector<16x16xf32>
    %850 = vector.extract_strided_slice %673 {offsets = [0, 80], sizes = [16, 16], strides = [1, 1]} : vector<16x96xf32> to vector<16x16xf32>
    %851 = vector.extract_strided_slice %674 {offsets = [0, 5], sizes = [16, 1], strides = [1, 1]} : vector<16x8xf32> to vector<16x1xf32>
    %852 = vector.extract_strided_slice %676 {offsets = [5, 0], sizes = [1, 16], strides = [1, 1]} : vector<8x16xf32> to vector<1x16xf32>
    %853 = vector.broadcast %851 : vector<16x1xf32> to vector<16x16xf32>
    %854 = vector.broadcast %852 : vector<1x16xf32> to vector<16x16xf32>
    %855 = arith.addf %853, %854 : vector<16x16xf32>
    %cst_234 = arith.constant 0.000000e+00 : f32
    %856 = vector.broadcast %cst_234 : f32 to vector<16x16xf32>
    %857 = arith.cmpf ogt, %855, %856 : vector<16x16xf32>
    %cst_235 = arith.constant 2.000000e-01 : f32
    %858 = vector.broadcast %cst_235 : f32 to vector<16x16xf32>
    %859 = arith.mulf %858, %855 : vector<16x16xf32>
    %860 = arith.select %857, %855, %859 : vector<16x16xi1>, vector<16x16xf32>
    %cst_236 = arith.constant -1.000000e+30 : f32
    %861 = vector.broadcast %cst_236 : f32 to vector<16x16xf32>
    %862 = arith.select %821, %860, %861 : vector<16x16xi1>, vector<16x16xf32>
    %cst_237 = arith.constant dense<0xFF800000> : vector<16xf32>
    %863 = vector.multi_reduction <maximumf>, %862, %cst_237 [1] : vector<16x16xf32> to vector<16xf32>
    %864 = vector.shape_cast %863 : vector<16xf32> to vector<16x1xf32>
    %865 = vector.broadcast %864 : vector<16x1xf32> to vector<16x16xf32>
    %866 = arith.subf %862, %865 : vector<16x16xf32>
    %867 = math.exp %866 : vector<16x16xf32>
    %cst_238 = arith.constant 0.000000e+00 : f32
    %868 = vector.broadcast %cst_238 : f32 to vector<16x16xf32>
    %869 = arith.select %821, %867, %868 : vector<16x16xi1>, vector<16x16xf32>
    %cst_239 = arith.constant dense<0.000000e+00> : vector<16xf32>
    %870 = vector.multi_reduction <add>, %869, %cst_239 [1] : vector<16x16xf32> to vector<16xf32>
    %871 = vector.shape_cast %870 : vector<16xf32> to vector<16x1xf32>
    %cst_240 = arith.constant 1.000000e-30 : f32
    %872 = vector.broadcast %cst_240 : f32 to vector<16x1xf32>
    %873 = arith.maximumf %871, %872 : vector<16x1xf32>
    %874 = tpu.reciprocal %873 {approx = true} : vector<16x1xf32> -> vector<16x1xf32>
    %875 = vector.broadcast %874 : vector<16x1xf32> to vector<16x16xf32>
    %876 = arith.mulf %869, %875 : vector<16x16xf32>
    %cst_241 = arith.constant dense<0.000000e+00> : vector<16x16xf32>
    %877 = tpu.matmul %876, %850, %cst_241 {dimension_numbers = #tpu.dot_dimension_numbers<[1], [0], [0], [1], [0, 0, 1, 1], [], []>} : vector<16x16xf32>, vector<16x16xf32>, vector<16x16xf32> -> vector<16x16xf32>
    %878 = tpu.concatenate %849, %877 in 1 : vector<16x16xf32>, vector<16x16xf32> -> vector<16x32xf32>
    %879 = vector.extract_strided_slice %5 {offsets = [0, 64], sizes = [1, 32], strides = [1, 1]} : vector<1x128xf32> to vector<1x32xf32>
    %880 = vector.broadcast %879 : vector<1x32xf32> to vector<16x32xf32>
    %881 = arith.addf %878, %880 : vector<16x32xf32>
    %cst_242 = arith.constant 0.000000e+00 : f32
    %882 = vector.broadcast %cst_242 : f32 to vector<16x32xf32>
    %883 = arith.cmpf ogt, %881, %882 : vector<16x32xf32>
    %cst_243 = arith.constant 0.000000e+00 : f32
    %884 = vector.broadcast %cst_243 : f32 to vector<16x32xf32>
    %885 = arith.minimumf %881, %884 : vector<16x32xf32>
    %886 = math.exp %885 : vector<16x32xf32>
    %cst_244 = arith.constant 1.000000e+00 : f32
    %887 = vector.broadcast %cst_244 : f32 to vector<16x32xf32>
    %888 = arith.subf %886, %887 : vector<16x32xf32>
    %889 = arith.select %883, %881, %888 : vector<16x32xi1>, vector<16x32xf32>
    %890 = tpu.concatenate %96, %167, %238, %313, %384, %455, %530, %601, %672, %747, %818, %889 in 0 : vector<16x32xf32>, vector<16x32xf32>, vector<16x32xf32>, vector<16x32xf32>, vector<16x32xf32>, vector<16x32xf32>, vector<16x32xf32>, vector<16x32xf32>, vector<16x32xf32>, vector<16x32xf32>, vector<16x32xf32>, vector<16x32xf32> -> vector<192x32xf32>
    %891 = arith.truncf %890 : vector<192x32xf32> to vector<192x32xbf16>
    %892 = arith.truncf %2 : vector<32x128xf32> to vector<32x128xbf16>
    %cst_245 = arith.constant dense<0.000000e+00> : vector<192x128xf32>
    %893 = tpu.matmul %891, %892, %cst_245 {dimension_numbers = #tpu.dot_dimension_numbers<[1], [0], [0], [1], [0, 0, 1, 1], [], []>} : vector<192x32xbf16>, vector<32x128xbf16>, vector<192x128xf32> -> vector<192x128xf32>
    %894 = vector.broadcast %3 : vector<1x128xf32> to vector<192x128xf32>
    %895 = arith.addf %893, %894 : vector<192x128xf32>
    %896 = math.tanh %895 : vector<192x128xf32>
    %897 = vector.broadcast %4 : vector<1x128xf32> to vector<192x128xf32>
    %898 = arith.mulf %896, %897 : vector<192x128xf32>
    %cst_246 = arith.constant dense<0.000000e+00> : vector<192xf32>
    %899 = vector.multi_reduction <add>, %898, %cst_246 [1] : vector<192x128xf32> to vector<192xf32>
    %900 = vector.shape_cast %899 : vector<192xf32> to vector<192x1xf32>
    %cst_247 = arith.constant 6.250000e-02 : f32
    %901 = vector.broadcast %cst_247 : f32 to vector<192x1xf32>
    %902 = arith.mulf %900, %901 : vector<192x1xf32>
    %903 = vector.extract_strided_slice %902 {offsets = [0, 0], sizes = [16, 1], strides = [1, 1]} : vector<192x1xf32> to vector<16x1xf32>
    %cst_248 = arith.constant dense<0.000000e+00> : vector<1xf32>
    %904 = vector.multi_reduction <add>, %903, %cst_248 [0] : vector<16x1xf32> to vector<1xf32>
    %905 = vector.shape_cast %904 : vector<1xf32> to vector<1x1xf32>
    %906 = vector.extract_strided_slice %902 {offsets = [16, 0], sizes = [16, 1], strides = [1, 1]} : vector<192x1xf32> to vector<16x1xf32>
    %cst_249 = arith.constant dense<0.000000e+00> : vector<1xf32>
    %907 = vector.multi_reduction <add>, %906, %cst_249 [0] : vector<16x1xf32> to vector<1xf32>
    %908 = vector.shape_cast %907 : vector<1xf32> to vector<1x1xf32>
    %909 = vector.extract_strided_slice %902 {offsets = [32, 0], sizes = [16, 1], strides = [1, 1]} : vector<192x1xf32> to vector<16x1xf32>
    %cst_250 = arith.constant dense<0.000000e+00> : vector<1xf32>
    %910 = vector.multi_reduction <add>, %909, %cst_250 [0] : vector<16x1xf32> to vector<1xf32>
    %911 = vector.shape_cast %910 : vector<1xf32> to vector<1x1xf32>
    %912 = arith.maximumf %905, %908 : vector<1x1xf32>
    %913 = arith.maximumf %912, %911 : vector<1x1xf32>
    %914 = arith.subf %905, %913 : vector<1x1xf32>
    %915 = math.exp %914 : vector<1x1xf32>
    %916 = arith.subf %908, %913 : vector<1x1xf32>
    %917 = math.exp %916 : vector<1x1xf32>
    %918 = arith.subf %911, %913 : vector<1x1xf32>
    %919 = math.exp %918 : vector<1x1xf32>
    %920 = arith.addf %915, %917 : vector<1x1xf32>
    %921 = arith.addf %920, %919 : vector<1x1xf32>
    %922 = tpu.reciprocal %921 {approx = true} : vector<1x1xf32> -> vector<1x1xf32>
    %923 = arith.mulf %915, %922 : vector<1x1xf32>
    %924 = vector.broadcast %923 : vector<1x1xf32> to vector<16x32xf32>
    %925 = arith.mulf %924, %96 : vector<16x32xf32>
    %926 = arith.mulf %917, %922 : vector<1x1xf32>
    %927 = vector.broadcast %926 : vector<1x1xf32> to vector<16x32xf32>
    %928 = arith.mulf %927, %167 : vector<16x32xf32>
    %929 = arith.addf %925, %928 : vector<16x32xf32>
    %930 = arith.mulf %919, %922 : vector<1x1xf32>
    %931 = vector.broadcast %930 : vector<1x1xf32> to vector<16x32xf32>
    %932 = arith.mulf %931, %238 : vector<16x32xf32>
    %933 = arith.addf %929, %932 : vector<16x32xf32>
    %934 = vector.extract_strided_slice %902 {offsets = [48, 0], sizes = [16, 1], strides = [1, 1]} : vector<192x1xf32> to vector<16x1xf32>
    %cst_251 = arith.constant dense<0.000000e+00> : vector<1xf32>
    %935 = vector.multi_reduction <add>, %934, %cst_251 [0] : vector<16x1xf32> to vector<1xf32>
    %936 = vector.shape_cast %935 : vector<1xf32> to vector<1x1xf32>
    %937 = vector.extract_strided_slice %902 {offsets = [64, 0], sizes = [16, 1], strides = [1, 1]} : vector<192x1xf32> to vector<16x1xf32>
    %cst_252 = arith.constant dense<0.000000e+00> : vector<1xf32>
    %938 = vector.multi_reduction <add>, %937, %cst_252 [0] : vector<16x1xf32> to vector<1xf32>
    %939 = vector.shape_cast %938 : vector<1xf32> to vector<1x1xf32>
    %940 = vector.extract_strided_slice %902 {offsets = [80, 0], sizes = [16, 1], strides = [1, 1]} : vector<192x1xf32> to vector<16x1xf32>
    %cst_253 = arith.constant dense<0.000000e+00> : vector<1xf32>
    %941 = vector.multi_reduction <add>, %940, %cst_253 [0] : vector<16x1xf32> to vector<1xf32>
    %942 = vector.shape_cast %941 : vector<1xf32> to vector<1x1xf32>
    %943 = arith.maximumf %936, %939 : vector<1x1xf32>
    %944 = arith.maximumf %943, %942 : vector<1x1xf32>
    %945 = arith.subf %936, %944 : vector<1x1xf32>
    %946 = math.exp %945 : vector<1x1xf32>
    %947 = arith.subf %939, %944 : vector<1x1xf32>
    %948 = math.exp %947 : vector<1x1xf32>
    %949 = arith.subf %942, %944 : vector<1x1xf32>
    %950 = math.exp %949 : vector<1x1xf32>
    %951 = arith.addf %946, %948 : vector<1x1xf32>
    %952 = arith.addf %951, %950 : vector<1x1xf32>
    %953 = tpu.reciprocal %952 {approx = true} : vector<1x1xf32> -> vector<1x1xf32>
    %954 = arith.mulf %946, %953 : vector<1x1xf32>
    %955 = vector.broadcast %954 : vector<1x1xf32> to vector<16x32xf32>
    %956 = arith.mulf %955, %313 : vector<16x32xf32>
    %957 = arith.mulf %948, %953 : vector<1x1xf32>
    %958 = vector.broadcast %957 : vector<1x1xf32> to vector<16x32xf32>
    %959 = arith.mulf %958, %384 : vector<16x32xf32>
    %960 = arith.addf %956, %959 : vector<16x32xf32>
    %961 = arith.mulf %950, %953 : vector<1x1xf32>
    %962 = vector.broadcast %961 : vector<1x1xf32> to vector<16x32xf32>
    %963 = arith.mulf %962, %455 : vector<16x32xf32>
    %964 = arith.addf %960, %963 : vector<16x32xf32>
    %965 = vector.extract_strided_slice %902 {offsets = [96, 0], sizes = [16, 1], strides = [1, 1]} : vector<192x1xf32> to vector<16x1xf32>
    %cst_254 = arith.constant dense<0.000000e+00> : vector<1xf32>
    %966 = vector.multi_reduction <add>, %965, %cst_254 [0] : vector<16x1xf32> to vector<1xf32>
    %967 = vector.shape_cast %966 : vector<1xf32> to vector<1x1xf32>
    %968 = vector.extract_strided_slice %902 {offsets = [112, 0], sizes = [16, 1], strides = [1, 1]} : vector<192x1xf32> to vector<16x1xf32>
    %cst_255 = arith.constant dense<0.000000e+00> : vector<1xf32>
    %969 = vector.multi_reduction <add>, %968, %cst_255 [0] : vector<16x1xf32> to vector<1xf32>
    %970 = vector.shape_cast %969 : vector<1xf32> to vector<1x1xf32>
    %971 = vector.extract_strided_slice %902 {offsets = [128, 0], sizes = [16, 1], strides = [1, 1]} : vector<192x1xf32> to vector<16x1xf32>
    %cst_256 = arith.constant dense<0.000000e+00> : vector<1xf32>
    %972 = vector.multi_reduction <add>, %971, %cst_256 [0] : vector<16x1xf32> to vector<1xf32>
    %973 = vector.shape_cast %972 : vector<1xf32> to vector<1x1xf32>
    %974 = arith.maximumf %967, %970 : vector<1x1xf32>
    %975 = arith.maximumf %974, %973 : vector<1x1xf32>
    %976 = arith.subf %967, %975 : vector<1x1xf32>
    %977 = math.exp %976 : vector<1x1xf32>
    %978 = arith.subf %970, %975 : vector<1x1xf32>
    %979 = math.exp %978 : vector<1x1xf32>
    %980 = arith.subf %973, %975 : vector<1x1xf32>
    %981 = math.exp %980 : vector<1x1xf32>
    %982 = arith.addf %977, %979 : vector<1x1xf32>
    %983 = arith.addf %982, %981 : vector<1x1xf32>
    %984 = tpu.reciprocal %983 {approx = true} : vector<1x1xf32> -> vector<1x1xf32>
    %985 = arith.mulf %977, %984 : vector<1x1xf32>
    %986 = vector.broadcast %985 : vector<1x1xf32> to vector<16x32xf32>
    %987 = arith.mulf %986, %530 : vector<16x32xf32>
    %988 = arith.mulf %979, %984 : vector<1x1xf32>
    %989 = vector.broadcast %988 : vector<1x1xf32> to vector<16x32xf32>
    %990 = arith.mulf %989, %601 : vector<16x32xf32>
    %991 = arith.addf %987, %990 : vector<16x32xf32>
    %992 = arith.mulf %981, %984 : vector<1x1xf32>
    %993 = vector.broadcast %992 : vector<1x1xf32> to vector<16x32xf32>
    %994 = arith.mulf %993, %672 : vector<16x32xf32>
    %995 = arith.addf %991, %994 : vector<16x32xf32>
    %996 = vector.extract_strided_slice %902 {offsets = [144, 0], sizes = [16, 1], strides = [1, 1]} : vector<192x1xf32> to vector<16x1xf32>
    %cst_257 = arith.constant dense<0.000000e+00> : vector<1xf32>
    %997 = vector.multi_reduction <add>, %996, %cst_257 [0] : vector<16x1xf32> to vector<1xf32>
    %998 = vector.shape_cast %997 : vector<1xf32> to vector<1x1xf32>
    %999 = vector.extract_strided_slice %902 {offsets = [160, 0], sizes = [16, 1], strides = [1, 1]} : vector<192x1xf32> to vector<16x1xf32>
    %cst_258 = arith.constant dense<0.000000e+00> : vector<1xf32>
    %1000 = vector.multi_reduction <add>, %999, %cst_258 [0] : vector<16x1xf32> to vector<1xf32>
    %1001 = vector.shape_cast %1000 : vector<1xf32> to vector<1x1xf32>
    %1002 = vector.extract_strided_slice %902 {offsets = [176, 0], sizes = [16, 1], strides = [1, 1]} : vector<192x1xf32> to vector<16x1xf32>
    %cst_259 = arith.constant dense<0.000000e+00> : vector<1xf32>
    %1003 = vector.multi_reduction <add>, %1002, %cst_259 [0] : vector<16x1xf32> to vector<1xf32>
    %1004 = vector.shape_cast %1003 : vector<1xf32> to vector<1x1xf32>
    %1005 = arith.maximumf %998, %1001 : vector<1x1xf32>
    %1006 = arith.maximumf %1005, %1004 : vector<1x1xf32>
    %1007 = arith.subf %998, %1006 : vector<1x1xf32>
    %1008 = math.exp %1007 : vector<1x1xf32>
    %1009 = arith.subf %1001, %1006 : vector<1x1xf32>
    %1010 = math.exp %1009 : vector<1x1xf32>
    %1011 = arith.subf %1004, %1006 : vector<1x1xf32>
    %1012 = math.exp %1011 : vector<1x1xf32>
    %1013 = arith.addf %1008, %1010 : vector<1x1xf32>
    %1014 = arith.addf %1013, %1012 : vector<1x1xf32>
    %1015 = tpu.reciprocal %1014 {approx = true} : vector<1x1xf32> -> vector<1x1xf32>
    %1016 = arith.mulf %1008, %1015 : vector<1x1xf32>
    %1017 = vector.broadcast %1016 : vector<1x1xf32> to vector<16x32xf32>
    %1018 = arith.mulf %1017, %747 : vector<16x32xf32>
    %1019 = arith.mulf %1010, %1015 : vector<1x1xf32>
    %1020 = vector.broadcast %1019 : vector<1x1xf32> to vector<16x32xf32>
    %1021 = arith.mulf %1020, %818 : vector<16x32xf32>
    %1022 = arith.addf %1018, %1021 : vector<16x32xf32>
    %1023 = arith.mulf %1012, %1015 : vector<1x1xf32>
    %1024 = vector.broadcast %1023 : vector<1x1xf32> to vector<16x32xf32>
    %1025 = arith.mulf %1024, %889 : vector<16x32xf32>
    %1026 = arith.addf %1022, %1025 : vector<16x32xf32>
    %1027 = tpu.concatenate %933, %964, %995, %1026 in 1 : vector<16x32xf32>, vector<16x32xf32>, vector<16x32xf32>, vector<16x32xf32> -> vector<16x128xf32>
    %c0_260 = arith.constant 0 : index
    %c0_261 = arith.constant 0 : index
    %c0_262 = arith.constant 0 : index
    %1028 = vector.load %arg3[%c0_260, %c0_261, %c0_262] : memref<1x16x128xf32, #tpu.memory_space<vmem>>, vector<1x16x128xf32>
    %1029 = vector.shape_cast %1028 : vector<1x16x128xf32> to vector<16x128xf32>
    %1030 = vector.shape_cast %1027 : vector<16x128xf32> to vector<1x16x128xf32>
    tpu.vector_store %arg3[%c0_260, %c0_261, %c0_262], %1030 {strides = array<i32>} : memref<1x16x128xf32, #tpu.memory_space<vmem>>, vector<1x16x128xf32>,
    return
  }
  func.func @transform_0(%arg0: i32) -> (i32, i32, i32) {
    %c0_i32 = arith.constant 0 : i32
    %c0_i32_0 = arith.constant 0 : i32
    %c0_i32_1 = arith.constant 0 : i32
    return %arg0, %c0_i32, %c0_i32_0 : i32, i32, i32
  }
  func.func @transform_1(%arg0: i32) -> (i32, i32) {
    %c0_i32 = arith.constant 0 : i32
    %c0_i32_0 = arith.constant 0 : i32
    %c0_i32_1 = arith.constant 0 : i32
    return %c0_i32, %c0_i32_0 : i32, i32
  }
  func.func @transform_2(%arg0: i32) -> (i32, i32, i32) {
    %c0_i32 = arith.constant 0 : i32
    %c0_i32_0 = arith.constant 0 : i32
    %c0_i32_1 = arith.constant 0 : i32
    return %arg0, %c0_i32, %c0_i32_0 : i32, i32, i32
  }
}

</mosaic_0001>

<llo_original>
// kernel: han_layer_batched.1
$region0: #{han_layer_batched.1}
  #allocation0 [shape = 'u32[]', space=smem, size = 0x4, offset = 0x4, fixed_abs, tag = 'smem constant byte address 0x4 - core index']
  #allocation1 [shape = 'u32[144,128]{1,0:T(1,128)}', space=vmem, size = 0x12000, scoped, tag = 'internal scratch']
  %s0 = inlined_call_operand.vmem [shape: f32[4,64,144], index: 0, kind: input, shape index: {}]
  %s1 = inlined_call_operand.vmem [shape: f32[131,128], index: 1, kind: input, shape index: {}]
  %s2 = inlined_call_operand.vmem [shape: f32[4,16,128], index: 2, kind: output, shape index: {}]
  %s3 = sld [smem:[#allocation0]]
  $region41: #{han_layer_batched.1} parent=0
    _
  %s5 = ssub.s32 1, %s3
  %s6 = scalar_select 0, %s5, %s3
  loop: start=0, step=1, limit=6
  $region2: #{han_layer_batched.1} parent=0 // loop_pre_header
    _
  $region3: #{han_layer_batched.1} parent=0 // loop_header
    %s8 = sphi 0, %s12
    %p9 = scmp.ge.s32.totalorder %s8, 6
    %s18 = sphi 0, %s20
    %s21 = sphi 0, %s18
    %s22 = sphi 0, %s21
    %s38 = sphi 0, %s22
    %s42 = sphi 0, %s42
    %s44 = sphi 0, %s42
    %s45 = sphi 0, %s44
    %s59 = sphi 0, %s45
    %s65 = sphi 0, %s67
    %s68 = sphi 0, %s65
    %s69 = sphi 0, %s68
    %s85 = sphi 0, %s69
  $region4: #{han_layer_batched.1} parent=0 // loop_header_branch
    %11 = sbr.rel (%p9) target = $region8
  $region5: #{han_layer_batched.1} parent=0 // loop_body
    %s13 = ssub.s32 %s8, 1
    %s14 = ssub.s32 %s8, 2
    %s15 = sadd.s32 %s8, 1
    %s16 = ssub.s32 %s8, %s15
    %p17 = scmp.eq.s32.totalorder %s16, 0
    %s19 = sadd.s32 %s18, 1
    %s20 = scalar_select %p17, %s18, %s19
    %p23 = pneg %p17
    %p24 = scmp.eq.s32.totalorder %s8, 3
    %p25 = por %p23, %p24
    %p26 = scmp.ne.s32.totalorder %s18, %s21
    %p27 = scmp.eq.s32.totalorder %s8, 0
    %p28 = por %p26, %p27
    %p29 = scmp.ne.s32.totalorder %s18, %s21
    %p30 = scmp.eq.s32.totalorder %s13, 3
    %p31 = por %p29, %p30
    %p32 = scmp.ne.s32.totalorder %s21, %s22
    %p33 = scmp.eq.s32.totalorder %s13, 0
    %p34 = por %p32, %p33
    %p35 = scmp.ne.s32.totalorder %s21, %s22
    %p36 = scmp.eq.s32.totalorder %s14, 3
    %p37 = por %p35, %p36
    %p39 = scmp.ne.s32.totalorder %s22, %s38
    %p40 = scmp.eq.s32.totalorder %s14, 0
    %p41 = por %p39, %p40
    %s43 = sadd.s32 %s42, 1
    %p46 = scmp.eq.s32.totalorder %s8, 3
    %p47 = scmp.ne.s32.totalorder %s42, %s44
    %p48 = scmp.eq.s32.totalorder %s8, 0
    %p49 = por %p47, %p48
    %p50 = scmp.ne.s32.totalorder %s42, %s44
    %p51 = scmp.eq.s32.totalorder %s13, 3
    %p52 = por %p50, %p51
    %p53 = scmp.ne.s32.totalorder %s44, %s45
    %p54 = scmp.eq.s32.totalorder %s13, 0
    %p55 = por %p53, %p54
    %p56 = scmp.ne.s32.totalorder %s44, %s45
    %p57 = scmp.eq.s32.totalorder %s14, 3
    %p58 = por %p56, %p57
    %p60 = scmp.ne.s32.totalorder %s45, %s59
    %p61 = scmp.eq.s32.totalorder %s14, 0
    %p62 = por %p60, %p61
    %s63 = ssub.s32 %s8, %s15
    %p64 = scmp.eq.s32.totalorder %s63, 0
    %s66 = sadd.s32 %s65, 1
    %s67 = scalar_select %p64, %s65, %s66
    %p70 = pneg %p64
    %p71 = scmp.eq.s32.totalorder %s8, 3
    %p72 = por %p70, %p71
    %p73 = scmp.ne.s32.totalorder %s65, %s68
    %p74 = scmp.eq.s32.totalorder %s8, 0
    %p75 = por %p73, %p74
    %p76 = scmp.ne.s32.totalorder %s65, %s68
    %p77 = scmp.eq.s32.totalorder %s13, 3
    %p78 = por %p76, %p77
    %p79 = scmp.ne.s32.totalorder %s68, %s69
    %p80 = scmp.eq.s32.totalorder %s13, 0
    %p81 = por %p79, %p80
    %p82 = scmp.ne.s32.totalorder %s68, %s69
    %p83 = scmp.eq.s32.totalorder %s14, 3
    %p84 = por %p82, %p83
    %p86 = scmp.ne.s32.totalorder %s69, %s85
    %p87 = scmp.eq.s32.totalorder %s14, 0
    %p88 = por %p86, %p87
    %p89 = scmp.le.s32.totalorder 1, %s8
    %p90 = scmp.lt.s32.totalorder %s8, 5
    %p91 = pnand %p89, %p90
    %p92 = pneg %p91
    // Predicated region
    $region9: #{han_layer_batched.1} parent=5 // pred_check
      _
    $region10: #{han_layer_batched.1} parent=5 // pred_check_branch
      %94 = sbr.rel (%p91) target = $region12
    $region11: #{han_layer_batched.1} parent=5 // pred_region
      %s95 = ssub.s32 %s8, 1
      // Predicated region
      $region13: #{han_layer_batched.1} parent=11 // pred_check
        %p96 = pneg %p55
      $region14: #{han_layer_batched.1} parent=11 // pred_check_branch
        %98 = sbr.rel (%p96) target = $region16
      $region15: #{han_layer_batched.1} parent=11 // pred_region
        _
      $region16: #{han_layer_batched.1} parent=11 // pred_fallthru
        _
    $region12: #{han_layer_batched.1} parent=5 // pred_fallthru
      _
    %p99 = scmp.lt.s32.totalorder %s8, 4
    // Predicated region
    $region17: #{han_layer_batched.1} parent=5 // pred_check
      %p100 = pneg %p99
    $region18: #{han_layer_batched.1} parent=5 // pred_check_branch
      %102 = sbr.rel (%p100) target = $region20
    $region19: #{han_layer_batched.1} parent=5 // pred_region
      // Predicated region
      $region21: #{han_layer_batched.1} parent=19 // pred_check
        %p103 = pneg %p28
      $region22: #{han_layer_batched.1} parent=19 // pred_check_branch
        %105 = sbr.rel (%p103) target = $region24
      $region23: #{han_layer_batched.1} parent=19 // pred_region
        %p106 = scmp.lt.s32.totalorder %s8, 3
        %s107 = scalar_select %p106, %s8, 3
        %s108 = smul.addr %s107, 16
        %s109 = smul.addr %s108, 8
        %s110 = scalar_lea.vmem %s0, %s109
      $region24: #{han_layer_batched.1} parent=19 // pred_fallthru
        _
    $region20: #{han_layer_batched.1} parent=5 // pred_fallthru
      _
    %p111 = scmp.le.s32.totalorder 1, %s8
    %p112 = scmp.lt.s32.totalorder %s8, 5
    %p113 = pnand %p111, %p112
    %p114 = pneg %p113
    // Predicated region
    $region25: #{han_layer_batched.1} parent=5 // pred_check
      _
    $region26: #{han_layer_batched.1} parent=5 // pred_check_branch
      %116 = sbr.rel (%p113) target = $region28
    $region27: #{han_layer_batched.1} parent=5 // pred_region
      %s117 = ssub.s32 %s8, 1
      %p118 = scmp.lt.s32.totalorder %s13, 3
      %s119 = scalar_select %p118, %s13, 3
      %s120 = smul.addr %s119, 16
      %s121 = smul.addr %s120, 8
      %s122 = scalar_lea.vmem %s0, %s121
      %p123 = pneg %p34
      %p124 = pneg %p31
      %p125 = pneg %p55
      %p126 = pneg %p52
      %p127 = pneg %p81
      %p128 = pneg %p78
      %p129 = scmp.lt.s32.totalorder %s13, 3
      %s130 = scalar_select %p129, %s13, 3
      %s131 = smul.addr %s130, 2
      %s132 = smul.addr %s131, 8
      %s133 = scalar_lea.vmem %s2, %s132
      %p134 = scmp.lt.s32.totalorder %s13, 3
      %s135 = scalar_select %p134, %s13, 3
      %s136 = smul.addr %s135, 16
      %s137 = smul.addr %s136, 8
      %s138 = scalar_lea.vmem %s0, %s137
      %p139 = scmp.lt.s32.totalorder %s13, 3
      %s140 = scalar_select %p139, %s13, 3
      %s141 = smul.addr %s140, 2
      %s142 = smul.addr %s141, 8
      %s143 = scalar_lea.vmem %s2, %s142
      %v145 = vld [vmem:[%s1] sm:$0xff]
      %v146 = vld [vmem:[%s1 + $0x8] sm:$0xff]
      %v147 = vld [vmem:[%s1 + $0x10] sm:$0xff]
      %v148 = vld [vmem:[%s1 + $0x18] sm:$0xff]
      %v149 = vld [vmem:[%s1 + $0x20] sm:$0xff]
      %v150 = vld [vmem:[%s1 + $0x28] sm:$0xff]
      %v151 = vld [vmem:[%s1 + $0x30] sm:$0xff]
      %v152 = vld [vmem:[%s1 + $0x38] sm:$0xff]
      %v153 = vld [vmem:[%s1 + $0x40] sm:$0xff]
      %v154 = vld [vmem:[%s1 + $0x48] sm:$0xff]
      %v155 = vld [vmem:[%s1 + $0x50] sm:$0xff]
      %v156 = vld [vmem:[%s1 + $0x58] sm:$0xff]
      %v157 = vld [vmem:[%s1 + $0x60] sm:$0xff]
      %v158 = vld [vmem:[%s1 + $0x68] sm:$0xff]
      %v159 = vld [vmem:[%s1 + $0x70] sm:$0xff]
      %v160 = vld [vmem:[%s1 + $0x78] sm:$0xff]
      %v161 = vld [vmem:[%s1 + $0x80] sm:$0x7]
      %v162 = vld [vmem:[%s138] sm:$0xff]
      %v163 = vld [vmem:[%s138 + $0x8] sm:$0xff]
      %v164 = vld [vmem:[%s138 + $0x10] sm:$0xff]
      %v165 = vld [vmem:[%s138 + $0x18] sm:$0xff]
      %v166 = vld [vmem:[%s138 + $0x20] sm:$0xff]
      %v167 = vld [vmem:[%s138 + $0x28] sm:$0xff]
      %v168 = vld [vmem:[%s138 + $0x30] sm:$0xff]
      %v169 = vld [vmem:[%s138 + $0x38] sm:$0xff]
      %v170 = vld [vmem:[%s138 + $0x40] sm:$0xff]
      %v171 = vld [vmem:[%s138 + $0x48] sm:$0xff]
      %v172 = vld [vmem:[%s138 + $0x50] sm:$0xff]
      %v173 = vld [vmem:[%s138 + $0x58] sm:$0xff]
      %v174 = vld [vmem:[%s138 + $0x60] sm:$0xff]
      %v175 = vld [vmem:[%s138 + $0x68] sm:$0xff]
      %v176 = vld [vmem:[%s138 + $0x70] sm:$0xff]
      %v177 = vld [vmem:[%s138 + $0x78] sm:$0xff]
      %v178 = vpack.c.bf16 %v164, %v162
      %v179 = vpack.c.bf16 %v168, %v166
      %v180 = vpack.c.bf16 %v172, %v170
      %v181 = vpack.c.bf16 %v176, %v174
      %v182 = vpack.c.bf16 %v146, %v145
      %v183 = vpack.c.bf16 %v148, %v147
      %v184 = vpack.c.bf16 %v150, %v149
      %v185 = vpack.c.bf16 %v152, %v151
      %v186 = vpack.c.bf16 %v154, %v153
      %v187 = vpack.c.bf16 %v156, %v155
      %vm188 = vcmask 785408
      %v190 = vsel %vm188, %v178, 0
      %v193 = vsel %vm188, %v179, 0
      %v196 = vsel %vm188, %v180, 0
      %v199 = vsel %vm188, %v181, 0
      %201 = vmatprep.subr.bf16.mxu0 0
      %202 = vmatpush1.bf16.msra.mxu0 %v182
      %203 = vmatprep.subr.bf16.mxu0 0
      %204 = vmatpush1.bf16.msra.mxu0 %v183
      %205 = vmatprep.subr.bf16.mxu0 0
      %206 = vmatpush1.bf16.msra.mxu0 %v184
      %207 = vmatprep.subr.bf16.mxu0 0
      %208 = vmatpush1.bf16.msra.mxu0 %v185
      %209 = vmatprep.subr.bf16.mxu0 0
      %210 = vmatpush1.bf16.msra.mxu0 %v186
      %211 = vmatprep.subr.bf16.mxu0 0
      %212 = vmatpush1.bf16.msra.mxu0 %v187
      %213 = vmatprep.subr.bf16.mxu0 0
      %214 = vmatpush1.bf16.msra.mxu0 0
      %215 = vmatprep.subr.bf16.mxu0 0
      %216 = vmatpush1.bf16.msra.mxu0 0
      %217 = vmatprep.subr.bf16.mxu0 0
      %218 = vmatpush1.bf16.msra.mxu0 0
      %219 = vmatprep.subr.bf16.mxu0 0
      %220 = vmatpush1.bf16.msra.mxu0 0
      %221 = vmatprep.subr.bf16.mxu0 0
      %222 = vmatpush1.bf16.msra.mxu0 0
      %223 = vmatprep.subr.bf16.mxu0 0
      %224 = vmatpush1.bf16.msra.mxu0 0
      %225 = vmatprep.subr.bf16.mxu0 0
      %226 = vmatpush1.bf16.msra.mxu0 0
      %227 = vmatprep.subr.bf16.mxu0 0
      %228 = vmatpush1.bf16.msra.mxu0 0
      %229 = vmatprep.subr.bf16.mxu0 0
      %230 = vmatpush1.bf16.msra.mxu0 0
      %231 = vmatprep.subr.bf16.mxu0 0
      %232 = vmatpush1.bf16.msra.mxu0 0
      %233 = vmatprep.mubr.bf16.mxu0 0
      %234 = vmatmul.mubr.bf16.gmra.mrb[0].mxu0 %v190
      %v235 = vpop.f32.mrb[0].mxu0
      %v236 = vadd.f32 0.0, %v235
      %v237 = vpop.f32.mrb[0].mxu0
      %v238 = vpop.f32.mrb[0].mxu0
      %v239 = vadd.f32 0.0, %v238
      %v240 = vpop.f32.mrb[0].mxu0
      %241 = vmatprep.mubr.bf16.mxu0 0
      %242 = vmatmul.mubr.bf16.gmra.mrb[0].mxu0 %v193
      %v243 = vpop.f32.mrb[0].mxu0
      %v244 = vadd.f32 0.0, %v243
      %v245 = vpop.f32.mrb[0].mxu0
      %v246 = vpop.f32.mrb[0].mxu0
      %v247 = vadd.f32 0.0, %v246
      %v248 = vpop.f32.mrb[0].mxu0
      %249 = vmatprep.mubr.bf16.mxu0 0
      %250 = vmatmul.mubr.bf16.gmra.mrb[0].mxu0 %v196
      %v251 = vpop.f32.mrb[0].mxu0
      %v252 = vadd.f32 0.0, %v251
      %v253 = vpop.f32.mrb[0].mxu0
      %v254 = vpop.f32.mrb[0].mxu0
      %v255 = vadd.f32 0.0, %v254
      %v256 = vpop.f32.mrb[0].mxu0
      %257 = vmatprep.mubr.bf16.mxu0 0
      %258 = vmatmul.mubr.bf16.gmra.mrb[0].mxu0 %v199
      %v259 = vpop.f32.mrb[0].mxu0
      %v260 = vadd.f32 0.0, %v259
      %v261 = vpop.f32.mrb[0].mxu0
      %v262 = vpop.f32.mrb[0].mxu0
      %v263 = vadd.f32 0.0, %v262
      %v264 = vpop.f32.mrb[0].mxu0
      %265 = vdwg.mxu0
      %v266 = vlaneseq
      %v267 = vshrl.u32 %v266, 7
      %v268 = vlaneseq
      %v269 = vand.u32 %v268, 127
      %vm270 = vcmp.eq.s32.totalorder %v267, %v269
      %v271 = vsel %vm270, 1, 0
      %v272 = vcvt.s32.f32 %v271
      %281 = vrot.lane.b32.xlu0 %v236, 32
      %v282 = vpop.permute.xlu0 %281
      %283 = vrot.lane.b32.xlu0 %v239, 32
      %v284 = vpop.permute.xlu0 %283
      %285 = vrot.lane.b32.xlu0 %v244, 32
      %v286 = vpop.permute.xlu0 %285
      %287 = vrot.lane.b32.xlu0 %v247, 32
      %v288 = vpop.permute.xlu0 %287
      %289 = vrot.lane.b32.xlu0 %v252, 32
      %v290 = vpop.permute.xlu0 %289
      %291 = vrot.lane.b32.xlu0 %v255, 32
      %v292 = vpop.permute.xlu0 %291
      %293 = vrot.lane.b32.xlu0 %v260, 32
      %v294 = vpop.permute.xlu0 %293
      %295 = vrot.lane.b32.xlu0 %v263, 32
      %v296 = vpop.permute.xlu0 %295
      %vm297 = vcmask 64512
      %v299 = vsel %vm297, %v272, 0
      %v301 = vsel %vm297, %v282, 0
      %v303 = vsel %vm297, %v284, 0
      %v305 = vsel %vm297, %v286, 0
      %v307 = vsel %vm297, %v288, 0
      %v309 = vsel %vm297, %v290, 0
      %v311 = vsel %vm297, %v292, 0
      %v313 = vsel %vm297, %v294, 0
      %v315 = vsel %vm297, %v296, 0
      %317 = vmatprep.subr.mxu0 0.0
      %318 = vmatpush1.xpose.msra.mxu0 %v301
      %319 = vmatprep.subr.mxu0 0.0
      %320 = vmatpush1.xpose.msra.mxu0 %v303
      %321 = vmatprep.subr.mxu0 0.0
      %322 = vmatpush1.xpose.msra.mxu0 %v305
      %323 = vmatprep.subr.mxu0 0.0
      %324 = vmatpush1.xpose.msra.mxu0 %v307
      %325 = vmatprep.subr.mxu0 0.0
      %326 = vmatpush1.xpose.msra.mxu0 %v309
      %327 = vmatprep.subr.mxu0 0.0
      %328 = vmatpush1.xpose.msra.mxu0 %v311
      %329 = vmatprep.subr.mxu0 0.0
      %330 = vmatpush1.xpose.msra.mxu0 %v313
      %331 = vmatprep.subr.mxu0 0.0
      %332 = vmatpush1.xpose.msra.mxu0 %v315
      %333 = vmatprep.subr.mxu0 0.0
      %334 = vmatpush1.xpose.msra.mxu0 0.0
      %335 = vmatprep.subr.mxu0 0.0
      %336 = vmatpush1.xpose.msra.mxu0 0.0
      %337 = vmatprep.subr.mxu0 0.0
      %338 = vmatpush1.xpose.msra.mxu0 0.0
      %339 = vmatprep.subr.mxu0 0.0
      %340 = vmatpush1.xpose.msra.mxu0 0.0
      %341 = vmatprep.subr.mxu0 0.0
      %342 = vmatpush1.xpose.msra.mxu0 0.0
      %343 = vmatprep.subr.mxu0 0.0
      %344 = vmatpush1.xpose.msra.mxu0 0.0
      %345 = vmatprep.subr.mxu0 0.0
      %346 = vmatpush1.xpose.msra.mxu0 0.0
      %347 = vmatprep.subr.mxu0 0.0
      %348 = vmatpush1.xpose.msra.mxu0 0.0
      %349 = vmatprep.subr.mxu0 0.0
      %350 = vmatpush1.xpose.msra.mxu0 0.0
      %351 = vmatprep.subr.mxu0 0.0
      %352 = vmatpush1.xpose.msra.mxu0 0.0
      %353 = vmatprep.subr.mxu0 0.0
      %354 = vmatpush1.xpose.msra.mxu0 0.0
      %355 = vmatprep.subr.mxu0 0.0
      %356 = vmatpush1.xpose.msra.mxu0 0.0
      %357 = vmatprep.subr.mxu0 0.0
      %358 = vmatpush1.xpose.msra.mxu0 0.0
      %359 = vmatprep.subr.mxu0 0.0
      %360 = vmatpush1.xpose.msra.mxu0 0.0
      %361 = vmatprep.subr.mxu0 0.0
      %362 = vmatpush1.xpose.msra.mxu0 0.0
      %363 = vmatprep.subr.mxu0 0.0
      %364 = vmatpush1.xpose.msra.mxu0 0.0
      %365 = vmatprep.subr.mxu0 0.0
      %366 = vmatpush1.xpose.msra.mxu0 0.0
      %367 = vmatprep.subr.mxu0 0.0
      %368 = vmatpush1.xpose.msra.mxu0 0.0
      %369 = vmatprep.subr.mxu0 0.0
      %370 = vmatpush1.xpose.msra.mxu0 0.0
      %371 = vmatprep.subr.mxu0 0.0
      %372 = vmatpush1.xpose.msra.mxu0 0.0
      %373 = vmatprep.subr.mxu0 0.0
      %374 = vmatpush1.xpose.msra.mxu0 0.0
      %375 = vmatprep.subr.mxu0 0.0
      %376 = vmatpush1.xpose.msra.mxu0 0.0
      %377 = vmatprep.subr.mxu0 0.0
      %378 = vmatpush1.xpose.msra.mxu0 0.0
      %379 = vmatprep.subr.mxu0 0.0
      %380 = vmatpush1.xpose.msra.mxu0 0.0
      %381 = vmatprep.mubr.f32.mxu0 0.0
      %382 = vmatmul.mubr.f32.gmra.mrb[0].mxu0 %v299
      %v383 = vpop.f32.mrb[0].mxu0
      %v384 = vadd.f32 0.0, %v383
      %v385 = vpop.f32.mrb[0].mxu0
      %386 = vdwg.mxu0
      %vm387 = vcmp.gt.f32.partialorder %v162, 0.0
      %vm388 = vcmp.gt.f32.partialorder %v164, 0.0
      %389 = vset.pattern.permute.xlu0 104
      %390 = vperm.xlu0 %389, %v236
      %v391 = vpop.permute.xlu0 %390
      %393 = vset.pattern.permute.xlu0 104
      %394 = vperm.xlu0 %393, %v239
      %v395 = vpop.permute.xlu0 %394
      %v397 = vlaneseq
      %v398 = vshrl.u32 %v397, 7
      %v399 = vsub.s32 0, %v398
      %v400 = vrot.slane %v384, %v399
      %v401 = vadd.f32 %v391, %v400
      %v402 = vadd.f32 %v395, %v400
      %vm403 = vcmp.gt.f32.partialorder %v401, 0.0
      %vm404 = vcmp.gt.f32.partialorder %v402, 0.0
      %v405 = vmul.f32 %v401, 0.2
      %v406 = vmul.f32 %v402, 0.2
      %v407 = vsel %vm403, %v401, %v405
      %v408 = vsel %vm404, %v402, %v406
      %411 = vrot.lane.b32.xlu0 %v407, 96
      %v412 = vpop.permute.xlu0 %411
      %413 = vrot.lane.b32.xlu0 %v408, 96
      %v414 = vpop.permute.xlu0 %413
      %v417 = vsel %vm387, %v412, -1e+30
      %v418 = vsel %vm388, %v414, -1e+30
      %vm419 = vcmask 917248
      %v420 = vsel %vm419, %v417, -inf
      %421 = vmax.xlane.f32.xlu0 %v420
      %v422 = vpop.xlane.xlu0 %421
      %v423 = vsel %vm419, %v418, -inf
      %424 = vmax.xlane.f32.xlu0 %v423
      %v425 = vpop.xlane.xlu0 %424
      %v426 = vsub.f32 %v417, %v422
      %v427 = vsub.f32 %v418, %v425
      %v428 = vmul.f32 %v426, 1.442695
      %v429 = vpow.pop %v428
      %v430 = vmul.f32 %v427, 1.442695
      %v431 = vpow.pop %v430
      %v432 = vsel %vm387, %v429, 0.0
      %v433 = vsel %vm388, %v431, 0.0
      %436 = vrot.lane.b32.xlu0 %v432, 32
      %v437 = vpop.permute.xlu0 %436
      %438 = vrot.lane.b32.xlu0 %v433, 32
      %v439 = vpop.permute.xlu0 %438
      %vm442 = vcmask 130048
      %v443 = vsel %vm442, %v437, 0.0
      %444 = vadd.xlane.f32.xlu0 %v443
      %v445 = vpop.xlane.xlu0 %444
      %v446 = vsel %vm442, %v439, 0.0
      %447 = vadd.xlane.f32.xlu0 %v446
      %v448 = vpop.xlane.xlu0 %447
      %v449 = vmax.f32 %v445, 1e-30
      %v450 = vmax.f32 %v448, 1e-30
      %v451 = vrcp.pop %v449
      %v452 = vrcp.pop %v450
      %v453 = vmul.f32 %v432, %v451
      %v454 = vmul.f32 %v433, %v452
      %457 = vrot.lane.b32.xlu0 %v453, 32
      %v458 = vpop.permute.xlu0 %457
      %459 = vrot.lane.b32.xlu0 %v454, 32
      %v460 = vpop.permute.xlu0 %459
      %v461 = vsel %vm442, %v458, 0
      %v463 = vsel %vm442, %v460, 0
      %465 = vmatprep.subr.mxu0 0.0
      %466 = vmatpush1.msra.mxu0 %v236
      %467 = vmatprep.subr.mxu0 0.0
      %468 = vmatpush1.msra.mxu0 %v239
      %469 = vmatprep.subr.mxu0 0.0
      %470 = vmatpush1.msra.mxu0 0.0
      %471 = vmatprep.subr.mxu0 0.0
      %472 = vmatpush1.msra.mxu0 0.0
      %473 = vmatprep.subr.mxu0 0.0
      %474 = vmatpush1.msra.mxu0 0.0
      %475 = vmatprep.subr.mxu0 0.0
      %476 = vmatpush1.msra.mxu0 0.0
      %477 = vmatprep.subr.mxu0 0.0
      %478 = vmatpush1.msra.mxu0 0.0
      %479 = vmatprep.subr.mxu0 0.0
      %480 = vmatpush1.msra.mxu0 0.0
      %481 = vmatprep.subr.mxu0 0.0
      %482 = vmatpush1.msra.mxu0 0.0
      %483 = vmatprep.subr.mxu0 0.0
      %484 = vmatpush1.msra.mxu0 0.0
      %485 = vmatprep.subr.mxu0 0.0
      %486 = vmatpush1.msra.mxu0 0.0
      %487 = vmatprep.subr.mxu0 0.0
      %488 = vmatpush1.msra.mxu0 0.0
      %489 = vmatprep.subr.mxu0 0.0
      %490 = vmatpush1.msra.mxu0 0.0
      %491 = vmatprep.subr.mxu0 0.0
      %492 = vmatpush1.msra.mxu0 0.0
      %493 = vmatprep.subr.mxu0 0.0
      %494 = vmatpush1.msra.mxu0 0.0
      %495 = vmatprep.subr.mxu0 0.0
      %496 = vmatpush1.msra.mxu0 0.0
      %497 = vmatprep.subr.mxu0 0.0
      %498 = vmatpush1.msra.mxu0 0.0
      %499 = vmatprep.subr.mxu0 0.0
      %500 = vmatpush1.msra.mxu0 0.0
      %501 = vmatprep.subr.mxu0 0.0
      %502 = vmatpush1.msra.mxu0 0.0
      %503 = vmatprep.subr.mxu0 0.0
      %504 = vmatpush1.msra.mxu0 0.0
      %505 = vmatprep.subr.mxu0 0.0
      %506 = vmatpush1.msra.mxu0 0.0
      %507 = vmatprep.subr.mxu0 0.0
      %508 = vmatpush1.msra.mxu0 0.0
      %509 = vmatprep.subr.mxu0 0.0
      %510 = vmatpush1.msra.mxu0 0.0
      %511 = vmatprep.subr.mxu0 0.0
      %512 = vmatpush1.msra.mxu0 0.0
      %513 = vmatprep.subr.mxu0 0.0
      %514 = vmatpush1.msra.mxu0 0.0
      %515 = vmatprep.subr.mxu0 0.0
      %516 = vmatpush1.msra.mxu0 0.0
      %517 = vmatprep.subr.mxu0 0.0
      %518 = vmatpush1.msra.mxu0 0.0
      %519 = vmatprep.subr.mxu0 0.0
      %520 = vmatpush1.msra.mxu0 0.0
      %521 = vmatprep.subr.mxu0 0.0
      %522 = vmatpush1.msra.mxu0 0.0
      %523 = vmatprep.subr.mxu0 0.0
      %524 = vmatpush1.msra.mxu0 0.0
      %525 = vmatprep.subr.mxu0 0.0
      %526 = vmatpush1.msra.mxu0 0.0
      %527 = vmatprep.subr.mxu0 0.0
      %528 = vmatpush1.msra.mxu0 0.0
      %529 = vmatprep.mubr.f32.mxu0 0.0
      %530 = vmatmul.mubr.f32.gmra.mrb[0].mxu0 %v461
      %v531 = vpop.f32.mrb[0].mxu0
      %v532 = vadd.f32 0.0, %v531
      %v533 = vpop.f32.mrb[0].mxu0
      %534 = vmatprep.mubr.f32.mxu0 0.0
      %535 = vmatmul.mubr.f32.gmra.mrb[0].mxu0 %v463
      %v536 = vpop.f32.mrb[0].mxu0
      %v537 = vadd.f32 0.0, %v536
      %v538 = vpop.f32.mrb[0].mxu0
      %539 = vdwg.mxu0
      %540 = vset.pattern.permute.xlu0 105
      %541 = vperm.xlu0 %540, %v236
      %v542 = vpop.permute.xlu0 %541
      %544 = vset.pattern.permute.xlu0 105
      %545 = vperm.xlu0 %544, %v239
      %v546 = vpop.permute.xlu0 %545
      %v548 = vlaneseq
      %v549 = vshrl.u32 %v548, 7
      %v550 = vsub.s32 1, %v549
      %v551 = vrot.slane %v384, %v550
      %v552 = vadd.f32 %v542, %v551
      %v553 = vadd.f32 %v546, %v551
      %vm554 = vcmp.gt.f32.partialorder %v552, 0.0
      %vm555 = vcmp.gt.f32.partialorder %v553, 0.0
      %v556 = vmul.f32 %v552, 0.2
      %v557 = vmul.f32 %v553, 0.2
      %v558 = vsel %vm554, %v552, %v556
      %v559 = vsel %vm555, %v553, %v557
      %562 = vrot.lane.b32.xlu0 %v558, 96
      %v563 = vpop.permute.xlu0 %562
      %564 = vrot.lane.b32.xlu0 %v559, 96
      %v565 = vpop.permute.xlu0 %564
      %v568 = vsel %vm387, %v563, -1e+30
      %v569 = vsel %vm388, %v565, -1e+30
      %v570 = vsel %vm419, %v568, -inf
      %571 = vmax.xlane.f32.xlu0 %v570
      %v572 = vpop.xlane.xlu0 %571
      %v573 = vsel %vm419, %v569, -inf
      %574 = vmax.xlane.f32.xlu0 %v573
      %v575 = vpop.xlane.xlu0 %574
      %v576 = vsub.f32 %v568, %v572
      %v577 = vsub.f32 %v569, %v575
      %v578 = vmul.f32 %v576, 1.442695
      %v579 = vpow.pop %v578
      %v580 = vmul.f32 %v577, 1.442695
      %v581 = vpow.pop %v580
      %v582 = vsel %vm387, %v579, 0.0
      %v583 = vsel %vm388, %v581, 0.0
      %586 = vrot.lane.b32.xlu0 %v582, 32
      %v587 = vpop.permute.xlu0 %586
      %588 = vrot.lane.b32.xlu0 %v583, 32
      %v589 = vpop.permute.xlu0 %588
      %v592 = vsel %vm442, %v587, 0.0
      %593 = vadd.xlane.f32.xlu0 %v592
      %v594 = vpop.xlane.xlu0 %593
      %v595 = vsel %vm442, %v589, 0.0
      %596 = vadd.xlane.f32.xlu0 %v595
      %v597 = vpop.xlane.xlu0 %596
      %v598 = vmax.f32 %v594, 1e-30
      %v599 = vmax.f32 %v597, 1e-30
      %v600 = vrcp.pop %v598
      %v601 = vrcp.pop %v599
      %v602 = vmul.f32 %v582, %v600
      %v603 = vmul.f32 %v583, %v601
      %606 = vrot.lane.b32.xlu0 %v602, 32
      %v607 = vpop.permute.xlu0 %606
      %608 = vrot.lane.b32.xlu0 %v603, 32
      %v609 = vpop.permute.xlu0 %608
      %610 = vrot.lane.b32.xlu0 %v236, 112
      %v611 = vpop.permute.xlu0 %610
      %612 = vrot.lane.b32.xlu0 %v239, 112
      %v613 = vpop.permute.xlu0 %612
      %v616 = vsel %vm442, %v607, 0
      %v618 = vsel %vm442, %v609, 0
      %620 = vmatprep.subr.mxu0 0.0
      %621 = vmatpush1.msra.mxu0 %v611
      %622 = vmatprep.subr.mxu0 0.0
      %623 = vmatpush1.msra.mxu0 %v613
      %624 = vmatprep.subr.mxu0 0.0
      %625 = vmatpush1.msra.mxu0 0.0
      %626 = vmatprep.subr.mxu0 0.0
      %627 = vmatpush1.msra.mxu0 0.0
      %628 = vmatprep.subr.mxu0 0.0
      %629 = vmatpush1.msra.mxu0 0.0
      %630 = vmatprep.subr.mxu0 0.0
      %631 = vmatpush1.msra.mxu0 0.0
      %632 = vmatprep.subr.mxu0 0.0
      %633 = vmatpush1.msra.mxu0 0.0
      %634 = vmatprep.subr.mxu0 0.0
      %635 = vmatpush1.msra.mxu0 0.0
      %636 = vmatprep.subr.mxu0 0.0
      %637 = vmatpush1.msra.mxu0 0.0
      %638 = vmatprep.subr.mxu0 0.0
      %639 = vmatpush1.msra.mxu0 0.0
      %640 = vmatprep.subr.mxu0 0.0
      %641 = vmatpush1.msra.mxu0 0.0
      %642 = vmatprep.subr.mxu0 0.0
      %643 = vmatpush1.msra.mxu0 0.0
      %644 = vmatprep.subr.mxu0 0.0
      %645 = vmatpush1.msra.mxu0 0.0
      %646 = vmatprep.subr.mxu0 0.0
      %647 = vmatpush1.msra.mxu0 0.0
      %648 = vmatprep.subr.mxu0 0.0
      %649 = vmatpush1.msra.mxu0 0.0
      %650 = vmatprep.subr.mxu0 0.0
      %651 = vmatpush1.msra.mxu0 0.0
      %652 = vmatprep.subr.mxu0 0.0
      %653 = vmatpush1.msra.mxu0 0.0
      %654 = vmatprep.subr.mxu0 0.0
      %655 = vmatpush1.msra.mxu0 0.0
      %656 = vmatprep.subr.mxu0 0.0
      %657 = vmatpush1.msra.mxu0 0.0
      %658 = vmatprep.subr.mxu0 0.0
      %659 = vmatpush1.msra.mxu0 0.0
      %660 = vmatprep.subr.mxu0 0.0
      %661 = vmatpush1.msra.mxu0 0.0
      %662 = vmatprep.subr.mxu0 0.0
      %663 = vmatpush1.msra.mxu0 0.0
      %664 = vmatprep.subr.mxu0 0.0
      %665 = vmatpush1.msra.mxu0 0.0
      %666 = vmatprep.subr.mxu0 0.0
      %667 = vmatpush1.msra.mxu0 0.0
      %668 = vmatprep.subr.mxu0 0.0
      %669 = vmatpush1.msra.mxu0 0.0
      %670 = vmatprep.subr.mxu0 0.0
      %671 = vmatpush1.msra.mxu0 0.0
      %672 = vmatprep.subr.mxu0 0.0
      %673 = vmatpush1.msra.mxu0 0.0
      %674 = vmatprep.subr.mxu0 0.0
      %675 = vmatpush1.msra.mxu0 0.0
      %676 = vmatprep.subr.mxu0 0.0
      %677 = vmatpush1.msra.mxu0 0.0
      %678 = vmatprep.subr.mxu0 0.0
      %679 = vmatpush1.msra.mxu0 0.0
      %680 = vmatprep.subr.mxu0 0.0
      %681 = vmatpush1.msra.mxu0 0.0
      %682 = vmatprep.subr.mxu0 0.0
      %683 = vmatpush1.msra.mxu0 0.0
      %684 = vmatprep.mubr.f32.mxu0 0.0
      %685 = vmatmul.mubr.f32.gmra.mrb[0].mxu0 %v616
      %v686 = vpop.f32.mrb[0].mxu0
      %v687 = vadd.f32 0.0, %v686
      %v688 = vpop.f32.mrb[0].mxu0
      %689 = vmatprep.mubr.f32.mxu0 0.0
      %690 = vmatmul.mubr.f32.gmra.mrb[0].mxu0 %v618
      %v691 = vpop.f32.mrb[0].mxu0
      %v692 = vadd.f32 0.0, %v691
      %v693 = vpop.f32.mrb[0].mxu0
      %694 = vdwg.mxu0
      %697 = vrot.lane.b32.xlu0 %v687, 16
      %v698 = vpop.permute.xlu0 %697
      %699 = vrot.lane.b32.xlu0 %v692, 16
      %v700 = vpop.permute.xlu0 %699
      %v703 = vsel %vm442, %v532, %v698
      %v704 = vsel %vm442, %v537, %v700
      %v705 = vlaneseq
      %v706 = vshrl.u32 %v705, 7
      %v707 = vsub.s32 2, %v706
      %v708 = vrot.slane %v161, %v707
      %v709 = vadd.f32 %v703, %v708
      %v710 = vadd.f32 %v704, %v708
      %vm711 = vcmp.gt.f32.partialorder %v709, 0.0
      %vm712 = vcmp.gt.f32.partialorder %v710, 0.0
      %v713 = vmin.f32 %v709, 0.0
      %v714 = vmin.f32 %v710, 0.0
      %v715 = vmul.f32 %v713, 1.442695
      %v716 = vpow.pop %v715
      %v717 = vmul.f32 %v714, 1.442695
      %v718 = vpow.pop %v717
      %v719 = vsub.f32 %v716, 1.0
      %v720 = vsub.f32 %v718, 1.0
      %v721 = vsel %vm711, %v709, %v719
      %v722 = vsel %vm712, %v710, %v720
      %723 = vset.pattern.permute.xlu0 106
      %724 = vperm.xlu0 %723, %v236
      %v725 = vpop.permute.xlu0 %724
      %727 = vset.pattern.permute.xlu0 106
      %728 = vperm.xlu0 %727, %v239
      %v729 = vpop.permute.xlu0 %728
      %v731 = vlaneseq
      %v732 = vshrl.u32 %v731, 7
      %v733 = vsub.s32 2, %v732
      %v734 = vrot.slane %v384, %v733
      %v735 = vadd.f32 %v725, %v734
      %v736 = vadd.f32 %v729, %v734
      %vm737 = vcmp.gt.f32.partialorder %v735, 0.0
      %vm738 = vcmp.gt.f32.partialorder %v736, 0.0
      %v739 = vmul.f32 %v735, 0.2
      %v740 = vmul.f32 %v736, 0.2
      %v741 = vsel %vm737, %v735, %v739
      %v742 = vsel %vm738, %v736, %v740
      %745 = vrot.lane.b32.xlu0 %v741, 112
      %v746 = vpop.permute.xlu0 %745
      %747 = vrot.lane.b32.xlu0 %v742, 112
      %v748 = vpop.permute.xlu0 %747
      %v751 = vsel %vm387, %v746, -1e+30
      %v752 = vsel %vm388, %v748, -1e+30
      %vm753 = vcmask 1048448
      %v754 = vsel %vm753, %v751, -inf
      %755 = vmax.xlane.f32.xlu0 %v754
      %v756 = vpop.xlane.xlu0 %755
      %v757 = vsel %vm753, %v752, -inf
      %758 = vmax.xlane.f32.xlu0 %v757
      %v759 = vpop.xlane.xlu0 %758
      %v760 = vsub.f32 %v751, %v756
      %v761 = vsub.f32 %v752, %v759
      %v762 = vmul.f32 %v760, 1.442695
      %v763 = vpow.pop %v762
      %v764 = vmul.f32 %v761, 1.442695
      %v765 = vpow.pop %v764
      %v766 = vsel %vm387, %v763, 0.0
      %v767 = vsel %vm388, %v765, 0.0
      %770 = vrot.lane.b32.xlu0 %v766, 16
      %v771 = vpop.permute.xlu0 %770
      %772 = vrot.lane.b32.xlu0 %v767, 16
      %v773 = vpop.permute.xlu0 %772
      %v776 = vsel %vm442, %v771, 0.0
      %777 = vadd.xlane.f32.xlu0 %v776
      %v778 = vpop.xlane.xlu0 %777
      %v779 = vsel %vm442, %v773, 0.0
      %780 = vadd.xlane.f32.xlu0 %v779
      %v781 = vpop.xlane.xlu0 %780
      %v782 = vmax.f32 %v778, 1e-30
      %v783 = vmax.f32 %v781, 1e-30
      %v784 = vrcp.pop %v782
      %v785 = vrcp.pop %v783
      %v786 = vmul.f32 %v766, %v784
      %v787 = vmul.f32 %v767, %v785
      %790 = vrot.lane.b32.xlu0 %v786, 16
      %v791 = vpop.permute.xlu0 %790
      %792 = vrot.lane.b32.xlu0 %v787, 16
      %v793 = vpop.permute.xlu0 %792
      %794 = vrot.lane.b32.xlu0 %v236, 96
      %v795 = vpop.permute.xlu0 %794
      %796 = vrot.lane.b32.xlu0 %v239, 96
      %v797 = vpop.permute.xlu0 %796
      %v800 = vsel %vm442, %v791, 0
      %v802 = vsel %vm442, %v793, 0
      %804 = vmatprep.subr.mxu0 0.0
      %805 = vmatpush1.msra.mxu0 %v795
      %806 = vmatprep.subr.mxu0 0.0
      %807 = vmatpush1.msra.mxu0 %v797
      %808 = vmatprep.subr.mxu0 0.0
      %809 = vmatpush1.msra.mxu0 0.0
      %810 = vmatprep.subr.mxu0 0.0
      %811 = vmatpush1.msra.mxu0 0.0
      %812 = vmatprep.subr.mxu0 0.0
      %813 = vmatpush1.msra.mxu0 0.0
      %814 = vmatprep.subr.mxu0 0.0
      %815 = vmatpush1.msra.mxu0 0.0
      %816 = vmatprep.subr.mxu0 0.0
      %817 = vmatpush1.msra.mxu0 0.0
      %818 = vmatprep.subr.mxu0 0.0
      %819 = vmatpush1.msra.mxu0 0.0
      %820 = vmatprep.subr.mxu0 0.0
      %821 = vmatpush1.msra.mxu0 0.0
      %822 = vmatprep.subr.mxu0 0.0
      %823 = vmatpush1.msra.mxu0 0.0
      %824 = vmatprep.subr.mxu0 0.0
      %825 = vmatpush1.msra.mxu0 0.0
      %826 = vmatprep.subr.mxu0 0.0
      %827 = vmatpush1.msra.mxu0 0.0
      %828 = vmatprep.subr.mxu0 0.0
      %829 = vmatpush1.msra.mxu0 0.0
      %830 = vmatprep.subr.mxu0 0.0
      %831 = vmatpush1.msra.mxu0 0.0
      %832 = vmatprep.subr.mxu0 0.0
      %833 = vmatpush1.msra.mxu0 0.0
      %834 = vmatprep.subr.mxu0 0.0
      %835 = vmatpush1.msra.mxu0 0.0
      %836 = vmatprep.subr.mxu0 0.0
      %837 = vmatpush1.msra.mxu0 0.0
      %838 = vmatprep.subr.mxu0 0.0
      %839 = vmatpush1.msra.mxu0 0.0
      %840 = vmatprep.subr.mxu0 0.0
      %841 = vmatpush1.msra.mxu0 0.0
      %842 = vmatprep.subr.mxu0 0.0
      %843 = vmatpush1.msra.mxu0 0.0
      %844 = vmatprep.subr.mxu0 0.0
      %845 = vmatpush1.msra.mxu0 0.0
      %846 = vmatprep.subr.mxu0 0.0
      %847 = vmatpush1.msra.mxu0 0.0
      %848 = vmatprep.subr.mxu0 0.0
      %849 = vmatpush1.msra.mxu0 0.0
      %850 = vmatprep.subr.mxu0 0.0
      %851 = vmatpush1.msra.mxu0 0.0
      %852 = vmatprep.subr.mxu0 0.0
      %853 = vmatpush1.msra.mxu0 0.0
      %854 = vmatprep.subr.mxu0 0.0
      %855 = vmatpush1.msra.mxu0 0.0
      %856 = vmatprep.subr.mxu0 0.0
      %857 = vmatpush1.msra.mxu0 0.0
      %858 = vmatprep.subr.mxu0 0.0
      %859 = vmatpush1.msra.mxu0 0.0
      %860 = vmatprep.subr.mxu0 0.0
      %861 = vmatpush1.msra.mxu0 0.0
      %862 = vmatprep.subr.mxu0 0.0
      %863 = vmatpush1.msra.mxu0 0.0
      %864 = vmatprep.subr.mxu0 0.0
      %865 = vmatpush1.msra.mxu0 0.0
      %866 = vmatprep.subr.mxu0 0.0
      %867 = vmatpush1.msra.mxu0 0.0
      %868 = vmatprep.mubr.f32.mxu0 0.0
      %869 = vmatmul.mubr.f32.gmra.mrb[0].mxu0 %v800
      %v870 = vpop.f32.mrb[0].mxu0
      %v871 = vadd.f32 0.0, %v870
      %v872 = vpop.f32.mrb[0].mxu0
      %873 = vmatprep.mubr.f32.mxu0 0.0
      %874 = vmatmul.mubr.f32.gmra.mrb[0].mxu0 %v802
      %v875 = vpop.f32.mrb[0].mxu0
      %v876 = vadd.f32 0.0, %v875
      %v877 = vpop.f32.mrb[0].mxu0
      %878 = vdwg.mxu0
      %879 = vset.pattern.permute.xlu0 107
      %880 = vperm.xlu0 %879, %v236
      %v881 = vpop.permute.xlu0 %880
      %883 = vset.pattern.permute.xlu0 107
      %884 = vperm.xlu0 %883, %v239
      %v885 = vpop.permute.xlu0 %884
      %v887 = vlaneseq
      %v888 = vshrl.u32 %v887, 7
      %v889 = vsub.s32 3, %v888
      %v890 = vrot.slane %v384, %v889
      %v891 = vadd.f32 %v881, %v890
      %v892 = vadd.f32 %v885, %v890
      %vm893 = vcmp.gt.f32.partialorder %v891, 0.0
      %vm894 = vcmp.gt.f32.partialorder %v892, 0.0
      %v895 = vmul.f32 %v891, 0.2
      %v896 = vmul.f32 %v892, 0.2
      %v897 = vsel %vm893, %v891, %v895
      %v898 = vsel %vm894, %v892, %v896
      %901 = vrot.lane.b32.xlu0 %v897, 112
      %v902 = vpop.permute.xlu0 %901
      %903 = vrot.lane.b32.xlu0 %v898, 112
      %v904 = vpop.permute.xlu0 %903
      %v907 = vsel %vm387, %v902, -1e+30
      %v908 = vsel %vm388, %v904, -1e+30
      %v909 = vsel %vm753, %v907, -inf
      %910 = vmax.xlane.f32.xlu0 %v909
      %v911 = vpop.xlane.xlu0 %910
      %v912 = vsel %vm753, %v908, -inf
      %913 = vmax.xlane.f32.xlu0 %v912
      %v914 = vpop.xlane.xlu0 %913
      %v915 = vsub.f32 %v907, %v911
      %v916 = vsub.f32 %v908, %v914
      %v917 = vmul.f32 %v915, 1.442695
      %v918 = vpow.pop %v917
      %v919 = vmul.f32 %v916, 1.442695
      %v920 = vpow.pop %v919
      %v921 = vsel %vm387, %v918, 0.0
      %v922 = vsel %vm388, %v920, 0.0
      %925 = vrot.lane.b32.xlu0 %v921, 16
      %v926 = vpop.permute.xlu0 %925
      %927 = vrot.lane.b32.xlu0 %v922, 16
      %v928 = vpop.permute.xlu0 %927
      %v931 = vsel %vm442, %v926, 0.0
      %932 = vadd.xlane.f32.xlu0 %v931
      %v933 = vpop.xlane.xlu0 %932
      %v934 = vsel %vm442, %v928, 0.0
      %935 = vadd.xlane.f32.xlu0 %v934
      %v936 = vpop.xlane.xlu0 %935
      %v937 = vmax.f32 %v933, 1e-30
      %v938 = vmax.f32 %v936, 1e-30
      %v939 = vrcp.pop %v937
      %v940 = vrcp.pop %v938
      %v941 = vmul.f32 %v921, %v939
      %v942 = vmul.f32 %v922, %v940
      %945 = vrot.lane.b32.xlu0 %v941, 16
      %v946 = vpop.permute.xlu0 %945
      %947 = vrot.lane.b32.xlu0 %v942, 16
      %v948 = vpop.permute.xlu0 %947
      %949 = vrot.lane.b32.xlu0 %v236, 80
      %v950 = vpop.permute.xlu0 %949
      %951 = vrot.lane.b32.xlu0 %v239, 80
      %v952 = vpop.permute.xlu0 %951
      %v955 = vsel %vm442, %v946, 0
      %v957 = vsel %vm442, %v948, 0
      %959 = vmatprep.subr.mxu0 0.0
      %960 = vmatpush1.msra.mxu0 %v950
      %961 = vmatprep.subr.mxu0 0.0
      %962 = vmatpush1.msra.mxu0 %v952
      %963 = vmatprep.subr.mxu0 0.0
      %964 = vmatpush1.msra.mxu0 0.0
      %965 = vmatprep.subr.mxu0 0.0
      %966 = vmatpush1.msra.mxu0 0.0
      %967 = vmatprep.subr.mxu0 0.0
      %968 = vmatpush1.msra.mxu0 0.0
      %969 = vmatprep.subr.mxu0 0.0
      %970 = vmatpush1.msra.mxu0 0.0
      %971 = vmatprep.subr.mxu0 0.0
      %972 = vmatpush1.msra.mxu0 0.0
      %973 = vmatprep.subr.mxu0 0.0
      %974 = vmatpush1.msra.mxu0 0.0
      %975 = vmatprep.subr.mxu0 0.0
      %976 = vmatpush1.msra.mxu0 0.0
      %977 = vmatprep.subr.mxu0 0.0
      %978 = vmatpush1.msra.mxu0 0.0
      %979 = vmatprep.subr.mxu0 0.0
      %980 = vmatpush1.msra.mxu0 0.0
      %981 = vmatprep.subr.mxu0 0.0
      %982 = vmatpush1.msra.mxu0 0.0
      %983 = vmatprep.subr.mxu0 0.0
      %984 = vmatpush1.msra.mxu0 0.0
      %985 = vmatprep.subr.mxu0 0.0
      %986 = vmatpush1.msra.mxu0 0.0
      %987 = vmatprep.subr.mxu0 0.0
      %988 = vmatpush1.msra.mxu0 0.0
      %989 = vmatprep.subr.mxu0 0.0
      %990 = vmatpush1.msra.mxu0 0.0
      %991 = vmatprep.subr.mxu0 0.0
      %992 = vmatpush1.msra.mxu0 0.0
      %993 = vmatprep.subr.mxu0 0.0
      %994 = vmatpush1.msra.mxu0 0.0
      %995 = vmatprep.subr.mxu0 0.0
      %996 = vmatpush1.msra.mxu0 0.0
      %997 = vmatprep.subr.mxu0 0.0
      %998 = vmatpush1.msra.mxu0 0.0
      %999 = vmatprep.subr.mxu0 0.0
      %1000 = vmatpush1.msra.mxu0 0.0
      %1001 = vmatprep.subr.mxu0 0.0
      %1002 = vmatpush1.msra.mxu0 0.0
      %1003 = vmatprep.subr.mxu0 0.0
      %1004 = vmatpush1.msra.mxu0 0.0
      %1005 = vmatprep.subr.mxu0 0.0
      %1006 = vmatpush1.msra.mxu0 0.0
      %1007 = vmatprep.subr.mxu0 0.0
      %1008 = vmatpush1.msra.mxu0 0.0
      %1009 = vmatprep.subr.mxu0 0.0
      %1010 = vmatpush1.msra.mxu0 0.0
      %1011 = vmatprep.subr.mxu0 0.0
      %1012 = vmatpush1.msra.mxu0 0.0
      %1013 = vmatprep.subr.mxu0 0.0
      %1014 = vmatpush1.msra.mxu0 0.0
      %1015 = vmatprep.subr.mxu0 0.0
      %1016 = vmatpush1.msra.mxu0 0.0
      %1017 = vmatprep.subr.mxu0 0.0
      %1018 = vmatpush1.msra.mxu0 0.0
      %1019 = vmatprep.subr.mxu0 0.0
      %1020 = vmatpush1.msra.mxu0 0.0
      %1021 = vmatprep.subr.mxu0 0.0
      %1022 = vmatpush1.msra.mxu0 0.0
      %1023 = vmatprep.mubr.f32.mxu0 0.0
      %1024 = vmatmul.mubr.f32.gmra.mrb[0].mxu0 %v955
      %v1025 = vpop.f32.mrb[0].mxu0
      %v1026 = vadd.f32 0.0, %v1025
      %v1027 = vpop.f32.mrb[0].mxu0
      %1028 = vmatprep.mubr.f32.mxu0 0.0
      %1029 = vmatmul.mubr.f32.gmra.mrb[0].mxu0 %v957
      %v1030 = vpop.f32.mrb[0].mxu0
      %v1031 = vadd.f32 0.0, %v1030
      %v1032 = vpop.f32.mrb[0].mxu0
      %1033 = vdwg.mxu0
      %1036 = vrot.lane.b32.xlu0 %v1026, 16
      %v1037 = vpop.permute.xlu0 %1036
      %1038 = vrot.lane.b32.xlu0 %v1031, 16
      %v1039 = vpop.permute.xlu0 %1038
      %v1042 = vsel %vm442, %v871, %v1037
      %v1043 = vsel %vm442, %v876, %v1039
      %1045 = vrot.lane.b32.xlu0 %v708, 96
      %v1046 = vpop.permute.xlu0 %1045
      %v1048 = vadd.f32 %v1042, %v1046
      %v1049 = vadd.f32 %v1043, %v1046
      %vm1050 = vcmp.gt.f32.partialorder %v1048, 0.0
      %vm1051 = vcmp.gt.f32.partialorder %v1049, 0.0
      %v1052 = vmin.f32 %v1048, 0.0
      %v1053 = vmin.f32 %v1049, 0.0
      %v1054 = vmul.f32 %v1052, 1.442695
      %v1055 = vpow.pop %v1054
      %v1056 = vmul.f32 %v1053, 1.442695
      %v1057 = vpow.pop %v1056
      %v1058 = vsub.f32 %v1055, 1.0
      %v1059 = vsub.f32 %v1057, 1.0
      %v1060 = vsel %vm1050, %v1048, %v1058
      %v1061 = vsel %vm1051, %v1049, %v1059
      %vm1062 = vcmp.gt.f32.partialorder %v163, 0.0
      %vm1063 = vcmp.gt.f32.partialorder %v165, 0.0
      %1064 = vset.pattern.permute.xlu0 108
      %1065 = vperm.xlu0 %1064, %v236
      %v1066 = vpop.permute.xlu0 %1065
      %1068 = vset.pattern.permute.xlu0 108
      %1069 = vperm.xlu0 %1068, %v239
      %v1070 = vpop.permute.xlu0 %1069
      %v1072 = vlaneseq
      %v1073 = vshrl.u32 %v1072, 7
      %v1074 = vsub.s32 4, %v1073
      %v1075 = vrot.slane %v384, %v1074
      %v1076 = vadd.f32 %v1066, %v1075
      %v1077 = vadd.f32 %v1070, %v1075
      %vm1078 = vcmp.gt.f32.partialorder %v1076, 0.0
      %vm1079 = vcmp.gt.f32.partialorder %v1077, 0.0
      %v1080 = vmul.f32 %v1076, 0.2
      %v1081 = vmul.f32 %v1077, 0.2
      %v1082 = vsel %vm1078, %v1076, %v1080
      %v1083 = vsel %vm1079, %v1077, %v1081
      %v1084 = vsel %vm1062, %v1082, -1e+30
      %v1085 = vsel %vm1063, %v1083, -1e+30
      %v1086 = vsel %vm442, %v1084, -inf
      %1087 = vmax.xlane.f32.xlu0 %v1086
      %v1088 = vpop.xlane.xlu0 %1087
      %v1089 = vsel %vm442, %v1085, -inf
      %1090 = vmax.xlane.f32.xlu0 %v1089
      %v1091 = vpop.xlane.xlu0 %1090
      %v1092 = vsub.f32 %v1084, %v1088
      %v1093 = vsub.f32 %v1085, %v1091
      %v1094 = vmul.f32 %v1092, 1.442695
      %v1095 = vpow.pop %v1094
      %v1096 = vmul.f32 %v1093, 1.442695
      %v1097 = vpow.pop %v1096
      %v1098 = vsel %vm1062, %v1095, 0.0
      %v1099 = vsel %vm1063, %v1097, 0.0
      %v1100 = vsel %vm442, %v1098, 0.0
      %1101 = vadd.xlane.f32.xlu0 %v1100
      %v1102 = vpop.xlane.xlu0 %1101
      %v1103 = vsel %vm442, %v1099, 0.0
      %1104 = vadd.xlane.f32.xlu0 %v1103
      %v1105 = vpop.xlane.xlu0 %1104
      %v1106 = vmax.f32 %v1102, 1e-30
      %v1107 = vmax.f32 %v1105, 1e-30
      %v1108 = vrcp.pop %v1106
      %v1109 = vrcp.pop %v1107
      %v1110 = vmul.f32 %v1098, %v1108
      %v1111 = vmul.f32 %v1099, %v1109
      %1112 = vrot.lane.b32.xlu0 %v236, 64
      %v1113 = vpop.permute.xlu0 %1112
      %1114 = vrot.lane.b32.xlu0 %v239, 64
      %v1115 = vpop.permute.xlu0 %1114
      %v1119 = vsel %vm442, %v1110, 0
      %v1122 = vsel %vm442, %v1111, 0
      %1124 = vmatprep.subr.mxu0 0.0
      %1125 = vmatpush1.msra.mxu0 %v1113
      %1126 = vmatprep.subr.mxu0 0.0
      %1127 = vmatpush1.msra.mxu0 %v1115
      %1128 = vmatprep.subr.mxu0 0.0
      %1129 = vmatpush1.msra.mxu0 0.0
      %1130 = vmatprep.subr.mxu0 0.0
      %1131 = vmatpush1.msra.mxu0 0.0
      %1132 = vmatprep.subr.mxu0 0.0
      %1133 = vmatpush1.msra.mxu0 0.0
      %1134 = vmatprep.subr.mxu0 0.0
      %1135 = vmatpush1.msra.mxu0 0.0
      %1136 = vmatprep.subr.mxu0 0.0
      %1137 = vmatpush1.msra.mxu0 0.0
      %1138 = vmatprep.subr.mxu0 0.0
      %1139 = vmatpush1.msra.mxu0 0.0
      %1140 = vmatprep.subr.mxu0 0.0
      %1141 = vmatpush1.msra.mxu0 0.0
      %1142 = vmatprep.subr.mxu0 0.0
      %1143 = vmatpush1.msra.mxu0 0.0
      %1144 = vmatprep.subr.mxu0 0.0
      %1145 = vmatpush1.msra.mxu0 0.0
      %1146 = vmatprep.subr.mxu0 0.0
      %1147 = vmatpush1.msra.mxu0 0.0
      %1148 = vmatprep.subr.mxu0 0.0
      %1149 = vmatpush1.msra.mxu0 0.0
      %1150 = vmatprep.subr.mxu0 0.0
      %1151 = vmatpush1.msra.mxu0 0.0
      %1152 = vmatprep.subr.mxu0 0.0
      %1153 = vmatpush1.msra.mxu0 0.0
      %1154 = vmatprep.subr.mxu0 0.0
      %1155 = vmatpush1.msra.mxu0 0.0
      %1156 = vmatprep.subr.mxu0 0.0
      %1157 = vmatpush1.msra.mxu0 0.0
      %1158 = vmatprep.subr.mxu0 0.0
      %1159 = vmatpush1.msra.mxu0 0.0
      %1160 = vmatprep.subr.mxu0 0.0
      %1161 = vmatpush1.msra.mxu0 0.0
      %1162 = vmatprep.subr.mxu0 0.0
      %1163 = vmatpush1.msra.mxu0 0.0
      %1164 = vmatprep.subr.mxu0 0.0
      %1165 = vmatpush1.msra.mxu0 0.0
      %1166 = vmatprep.subr.mxu0 0.0
      %1167 = vmatpush1.msra.mxu0 0.0
      %1168 = vmatprep.subr.mxu0 0.0
      %1169 = vmatpush1.msra.mxu0 0.0
      %1170 = vmatprep.subr.mxu0 0.0
      %1171 = vmatpush1.msra.mxu0 0.0
      %1172 = vmatprep.subr.mxu0 0.0
      %1173 = vmatpush1.msra.mxu0 0.0
      %1174 = vmatprep.subr.mxu0 0.0
      %1175 = vmatpush1.msra.mxu0 0.0
      %1176 = vmatprep.subr.mxu0 0.0
      %1177 = vmatpush1.msra.mxu0 0.0
      %1178 = vmatprep.subr.mxu0 0.0
      %1179 = vmatpush1.msra.mxu0 0.0
      %1180 = vmatprep.subr.mxu0 0.0
      %1181 = vmatpush1.msra.mxu0 0.0
      %1182 = vmatprep.subr.mxu0 0.0
      %1183 = vmatpush1.msra.mxu0 0.0
      %1184 = vmatprep.subr.mxu0 0.0
      %1185 = vmatpush1.msra.mxu0 0.0
      %1186 = vmatprep.subr.mxu0 0.0
      %1187 = vmatpush1.msra.mxu0 0.0
      %1188 = vmatprep.mubr.f32.mxu0 0.0
      %1189 = vmatmul.mubr.f32.gmra.mrb[0].mxu0 %v1119
      %v1190 = vpop.f32.mrb[0].mxu0
      %v1191 = vadd.f32 0.0, %v1190
      %v1192 = vpop.f32.mrb[0].mxu0
      %1193 = vmatprep.mubr.f32.mxu0 0.0
      %1194 = vmatmul.mubr.f32.gmra.mrb[0].mxu0 %v1122
      %v1195 = vpop.f32.mrb[0].mxu0
      %v1196 = vadd.f32 0.0, %v1195
      %v1197 = vpop.f32.mrb[0].mxu0
      %1198 = vdwg.mxu0
      %1199 = vset.pattern.permute.xlu0 109
      %1200 = vperm.xlu0 %1199, %v236
      %v1201 = vpop.permute.xlu0 %1200
      %1203 = vset.pattern.permute.xlu0 109
      %1204 = vperm.xlu0 %1203, %v239
      %v1205 = vpop.permute.xlu0 %1204
      %v1207 = vlaneseq
      %v1208 = vshrl.u32 %v1207, 7
      %v1209 = vsub.s32 5, %v1208
      %v1210 = vrot.slane %v384, %v1209
      %v1211 = vadd.f32 %v1201, %v1210
      %v1212 = vadd.f32 %v1205, %v1210
      %vm1213 = vcmp.gt.f32.partialorder %v1211, 0.0
      %vm1214 = vcmp.gt.f32.partialorder %v1212, 0.0
      %v1215 = vmul.f32 %v1211, 0.2
      %v1216 = vmul.f32 %v1212, 0.2
      %v1217 = vsel %vm1213, %v1211, %v1215
      %v1218 = vsel %vm1214, %v1212, %v1216
      %v1219 = vsel %vm1062, %v1217, -1e+30
      %v1220 = vsel %vm1063, %v1218, -1e+30
      %v1221 = vsel %vm442, %v1219, -inf
      %1222 = vmax.xlane.f32.xlu0 %v1221
      %v1223 = vpop.xlane.xlu0 %1222
      %v1224 = vsel %vm442, %v1220, -inf
      %1225 = vmax.xlane.f32.xlu0 %v1224
      %v1226 = vpop.xlane.xlu0 %1225
      %v1227 = vsub.f32 %v1219, %v1223
      %v1228 = vsub.f32 %v1220, %v1226
      %v1229 = vmul.f32 %v1227, 1.442695
      %v1230 = vpow.pop %v1229
      %v1231 = vmul.f32 %v1228, 1.442695
      %v1232 = vpow.pop %v1231
      %v1233 = vsel %vm1062, %v1230, 0.0
      %v1234 = vsel %vm1063, %v1232, 0.0
      %v1235 = vsel %vm442, %v1233, 0.0
      %1236 = vadd.xlane.f32.xlu0 %v1235
      %v1237 = vpop.xlane.xlu0 %1236
      %v1238 = vsel %vm442, %v1234, 0.0
      %1239 = vadd.xlane.f32.xlu0 %v1238
      %v1240 = vpop.xlane.xlu0 %1239
      %v1241 = vmax.f32 %v1237, 1e-30
      %v1242 = vmax.f32 %v1240, 1e-30
      %v1243 = vrcp.pop %v1241
      %v1244 = vrcp.pop %v1242
      %v1245 = vmul.f32 %v1233, %v1243
      %v1246 = vmul.f32 %v1234, %v1244
      %1247 = vrot.lane.b32.xlu0 %v236, 48
      %v1248 = vpop.permute.xlu0 %1247
      %1249 = vrot.lane.b32.xlu0 %v239, 48
      %v1250 = vpop.permute.xlu0 %1249
      %v1254 = vsel %vm442, %v1245, 0
      %v1257 = vsel %vm442, %v1246, 0
      %1259 = vmatprep.subr.mxu0 0.0
      %1260 = vmatpush1.msra.mxu0 %v1248
      %1261 = vmatprep.subr.mxu0 0.0
      %1262 = vmatpush1.msra.mxu0 %v1250
      %1263 = vmatprep.subr.mxu0 0.0
      %1264 = vmatpush1.msra.mxu0 0.0
      %1265 = vmatprep.subr.mxu0 0.0
      %1266 = vmatpush1.msra.mxu0 0.0
      %1267 = vmatprep.subr.mxu0 0.0
      %1268 = vmatpush1.msra.mxu0 0.0
      %1269 = vmatprep.subr.mxu0 0.0
      %1270 = vmatpush1.msra.mxu0 0.0
      %1271 = vmatprep.subr.mxu0 0.0
      %1272 = vmatpush1.msra.mxu0 0.0
      %1273 = vmatprep.subr.mxu0 0.0
      %1274 = vmatpush1.msra.mxu0 0.0
      %1275 = vmatprep.subr.mxu0 0.0
      %1276 = vmatpush1.msra.mxu0 0.0
      %1277 = vmatprep.subr.mxu0 0.0
      %1278 = vmatpush1.msra.mxu0 0.0
      %1279 = vmatprep.subr.mxu0 0.0
      %1280 = vmatpush1.msra.mxu0 0.0
      %1281 = vmatprep.subr.mxu0 0.0
      %1282 = vmatpush1.msra.mxu0 0.0
      %1283 = vmatprep.subr.mxu0 0.0
      %1284 = vmatpush1.msra.mxu0 0.0
      %1285 = vmatprep.subr.mxu0 0.0
      %1286 = vmatpush1.msra.mxu0 0.0
      %1287 = vmatprep.subr.mxu0 0.0
      %1288 = vmatpush1.msra.mxu0 0.0
      %1289 = vmatprep.subr.mxu0 0.0
      %1290 = vmatpush1.msra.mxu0 0.0
      %1291 = vmatprep.subr.mxu0 0.0
      %1292 = vmatpush1.msra.mxu0 0.0
      %1293 = vmatprep.subr.mxu0 0.0
      %1294 = vmatpush1.msra.mxu0 0.0
      %1295 = vmatprep.subr.mxu0 0.0
      %1296 = vmatpush1.msra.mxu0 0.0
      %1297 = vmatprep.subr.mxu0 0.0
      %1298 = vmatpush1.msra.mxu0 0.0
      %1299 = vmatprep.subr.mxu0 0.0
      %1300 = vmatpush1.msra.mxu0 0.0
      %1301 = vmatprep.subr.mxu0 0.0
      %1302 = vmatpush1.msra.mxu0 0.0
      %1303 = vmatprep.subr.mxu0 0.0
      %1304 = vmatpush1.msra.mxu0 0.0
      %1305 = vmatprep.subr.mxu0 0.0
      %1306 = vmatpush1.msra.mxu0 0.0
      %1307 = vmatprep.subr.mxu0 0.0
      %1308 = vmatpush1.msra.mxu0 0.0
      %1309 = vmatprep.subr.mxu0 0.0
      %1310 = vmatpush1.msra.mxu0 0.0
      %1311 = vmatprep.subr.mxu0 0.0
      %1312 = vmatpush1.msra.mxu0 0.0
      %1313 = vmatprep.subr.mxu0 0.0
      %1314 = vmatpush1.msra.mxu0 0.0
      %1315 = vmatprep.subr.mxu0 0.0
      %1316 = vmatpush1.msra.mxu0 0.0
      %1317 = vmatprep.subr.mxu0 0.0
      %1318 = vmatpush1.msra.mxu0 0.0
      %1319 = vmatprep.subr.mxu0 0.0
      %1320 = vmatpush1.msra.mxu0 0.0
      %1321 = vmatprep.subr.mxu0 0.0
      %1322 = vmatpush1.msra.mxu0 0.0
      %1323 = vmatprep.mubr.f32.mxu0 0.0
      %1324 = vmatmul.mubr.f32.gmra.mrb[0].mxu0 %v1254
      %v1325 = vpop.f32.mrb[0].mxu0
      %v1326 = vadd.f32 0.0, %v1325
      %v1327 = vpop.f32.mrb[0].mxu0
      %1328 = vmatprep.mubr.f32.mxu0 0.0
      %1329 = vmatmul.mubr.f32.gmra.mrb[0].mxu0 %v1257
      %v1330 = vpop.f32.mrb[0].mxu0
      %v1331 = vadd.f32 0.0, %v1330
      %v1332 = vpop.f32.mrb[0].mxu0
      %1333 = vdwg.mxu0
      %1336 = vrot.lane.b32.xlu0 %v1326, 16
      %v1337 = vpop.permute.xlu0 %1336
      %1338 = vrot.lane.b32.xlu0 %v1331, 16
      %v1339 = vpop.permute.xlu0 %1338
      %v1342 = vsel %vm442, %v1191, %v1337
      %v1343 = vsel %vm442, %v1196, %v1339
      %1344 = vrot.lane.b32.xlu0 %v708, 64
      %v1345 = vpop.permute.xlu0 %1344
      %v1347 = vadd.f32 %v1342, %v1345
      %v1348 = vadd.f32 %v1343, %v1345
      %vm1349 = vcmp.gt.f32.partialorder %v1347, 0.0
      %vm1350 = vcmp.gt.f32.partialorder %v1348, 0.0
      %v1351 = vmin.f32 %v1347, 0.0
      %v1352 = vmin.f32 %v1348, 0.0
      %v1353 = vmul.f32 %v1351, 1.442695
      %v1354 = vpow.pop %v1353
      %v1355 = vmul.f32 %v1352, 1.442695
      %v1356 = vpow.pop %v1355
      %v1357 = vsub.f32 %v1354, 1.0
      %v1358 = vsub.f32 %v1356, 1.0
      %v1359 = vsel %vm1349, %v1347, %v1357
      %v1360 = vsel %vm1350, %v1348, %v1358
      %vm1361 = vcmp.gt.f32.partialorder %v166, 0.0
      %vm1362 = vcmp.gt.f32.partialorder %v168, 0.0
      %1363 = vset.pattern.permute.xlu0 104
      %1364 = vperm.xlu0 %1363, %v244
      %v1365 = vpop.permute.xlu0 %1364
      %1367 = vset.pattern.permute.xlu0 104
      %1368 = vperm.xlu0 %1367, %v247
      %v1369 = vpop.permute.xlu0 %1368
      %v1371 = vadd.f32 %v1365, %v400
      %v1372 = vadd.f32 %v1369, %v400
      %vm1373 = vcmp.gt.f32.partialorder %v1371, 0.0
      %vm1374 = vcmp.gt.f32.partialorder %v1372, 0.0
      %v1375 = vmul.f32 %v1371, 0.2
      %v1376 = vmul.f32 %v1372, 0.2
      %v1377 = vsel %vm1373, %v1371, %v1375
      %v1378 = vsel %vm1374, %v1372, %v1376
      %1381 = vrot.lane.b32.xlu0 %v1377, 80
      %v1382 = vpop.permute.xlu0 %1381
      %1383 = vrot.lane.b32.xlu0 %v1378, 80
      %v1384 = vpop.permute.xlu0 %1383
      %v1387 = vsel %vm1361, %v1382, -1e+30
      %v1388 = vsel %vm1362, %v1384, -1e+30
      %v1389 = vsel %vm419, %v1387, -inf
      %1390 = vmax.xlane.f32.xlu0 %v1389
      %v1391 = vpop.xlane.xlu0 %1390
      %v1392 = vsel %vm419, %v1388, -inf
      %1393 = vmax.xlane.f32.xlu0 %v1392
      %v1394 = vpop.xlane.xlu0 %1393
      %v1395 = vsub.f32 %v1387, %v1391
      %v1396 = vsub.f32 %v1388, %v1394
      %v1397 = vmul.f32 %v1395, 1.442695
      %v1398 = vpow.pop %v1397
      %v1399 = vmul.f32 %v1396, 1.442695
      %v1400 = vpow.pop %v1399
      %v1401 = vsel %vm1361, %v1398, 0.0
      %v1402 = vsel %vm1362, %v1400, 0.0
      %1405 = vrot.lane.b32.xlu0 %v1401, 32
      %v1406 = vpop.permute.xlu0 %1405
      %1407 = vrot.lane.b32.xlu0 %v1402, 32
      %v1408 = vpop.permute.xlu0 %1407
      %v1411 = vsel %vm442, %v1406, 0.0
      %1412 = vadd.xlane.f32.xlu0 %v1411
      %v1413 = vpop.xlane.xlu0 %1412
      %v1414 = vsel %vm442, %v1408, 0.0
      %1415 = vadd.xlane.f32.xlu0 %v1414
      %v1416 = vpop.xlane.xlu0 %1415
      %v1417 = vmax.f32 %v1413, 1e-30
      %v1418 = vmax.f32 %v1416, 1e-30
      %v1419 = vrcp.pop %v1417
      %v1420 = vrcp.pop %v1418
      %v1421 = vmul.f32 %v1401, %v1419
      %v1422 = vmul.f32 %v1402, %v1420
      %1425 = vrot.lane.b32.xlu0 %v1421, 32
      %v1426 = vpop.permute.xlu0 %1425
      %1427 = vrot.lane.b32.xlu0 %v1422, 32
      %v1428 = vpop.permute.xlu0 %1427
      %v1429 = vsel %vm442, %v1426, 0
      %v1431 = vsel %vm442, %v1428, 0
      %1433 = vmatprep.subr.mxu0 0.0
      %1434 = vmatpush1.msra.mxu0 %v244
      %1435 = vmatprep.subr.mxu0 0.0
      %1436 = vmatpush1.msra.mxu0 %v247
      %1437 = vmatprep.subr.mxu0 0.0
      %1438 = vmatpush1.msra.mxu0 0.0
      %1439 = vmatprep.subr.mxu0 0.0
      %1440 = vmatpush1.msra.mxu0 0.0
      %1441 = vmatprep.subr.mxu0 0.0
      %1442 = vmatpush1.msra.mxu0 0.0
      %1443 = vmatprep.subr.mxu0 0.0
      %1444 = vmatpush1.msra.mxu0 0.0
      %1445 = vmatprep.subr.mxu0 0.0
      %1446 = vmatpush1.msra.mxu0 0.0
      %1447 = vmatprep.subr.mxu0 0.0
      %1448 = vmatpush1.msra.mxu0 0.0
      %1449 = vmatprep.subr.mxu0 0.0
      %1450 = vmatpush1.msra.mxu0 0.0
      %1451 = vmatprep.subr.mxu0 0.0
      %1452 = vmatpush1.msra.mxu0 0.0
      %1453 = vmatprep.subr.mxu0 0.0
      %1454 = vmatpush1.msra.mxu0 0.0
      %1455 = vmatprep.subr.mxu0 0.0
      %1456 = vmatpush1.msra.mxu0 0.0
      %1457 = vmatprep.subr.mxu0 0.0
      %1458 = vmatpush1.msra.mxu0 0.0
      %1459 = vmatprep.subr.mxu0 0.0
      %1460 = vmatpush1.msra.mxu0 0.0
      %1461 = vmatprep.subr.mxu0 0.0
      %1462 = vmatpush1.msra.mxu0 0.0
      %1463 = vmatprep.subr.mxu0 0.0
      %1464 = vmatpush1.msra.mxu0 0.0
      %1465 = vmatprep.subr.mxu0 0.0
      %1466 = vmatpush1.msra.mxu0 0.0
      %1467 = vmatprep.subr.mxu0 0.0
      %1468 = vmatpush1.msra.mxu0 0.0
      %1469 = vmatprep.subr.mxu0 0.0
      %1470 = vmatpush1.msra.mxu0 0.0
      %1471 = vmatprep.subr.mxu0 0.0
      %1472 = vmatpush1.msra.mxu0 0.0
      %1473 = vmatprep.subr.mxu0 0.0
      %1474 = vmatpush1.msra.mxu0 0.0
      %1475 = vmatprep.subr.mxu0 0.0
      %1476 = vmatpush1.msra.mxu0 0.0
      %1477 = vmatprep.subr.mxu0 0.0
      %1478 = vmatpush1.msra.mxu0 0.0
      %1479 = vmatprep.subr.mxu0 0.0
      %1480 = vmatpush1.msra.mxu0 0.0
      %1481 = vmatprep.subr.mxu0 0.0
      %1482 = vmatpush1.msra.mxu0 0.0
      %1483 = vmatprep.subr.mxu0 0.0
      %1484 = vmatpush1.msra.mxu0 0.0
      %1485 = vmatprep.subr.mxu0 0.0
      %1486 = vmatpush1.msra.mxu0 0.0
      %1487 = vmatprep.subr.mxu0 0.0
      %1488 = vmatpush1.msra.mxu0 0.0
      %1489 = vmatprep.subr.mxu0 0.0
      %1490 = vmatpush1.msra.mxu0 0.0
      %1491 = vmatprep.subr.mxu0 0.0
      %1492 = vmatpush1.msra.mxu0 0.0
      %1493 = vmatprep.subr.mxu0 0.0
      %1494 = vmatpush1.msra.mxu0 0.0
      %1495 = vmatprep.subr.mxu0 0.0
      %1496 = vmatpush1.msra.mxu0 0.0
      %1497 = vmatprep.mubr.f32.mxu0 0.0
      %1498 = vmatmul.mubr.f32.gmra.mrb[0].mxu0 %v1429
      %v1499 = vpop.f32.mrb[0].mxu0
      %v1500 = vadd.f32 0.0, %v1499
      %v1501 = vpop.f32.mrb[0].mxu0
      %1502 = vmatprep.mubr.f32.mxu0 0.0
      %1503 = vmatmul.mubr.f32.gmra.mrb[0].mxu0 %v1431
      %v1504 = vpop.f32.mrb[0].mxu0
      %v1505 = vadd.f32 0.0, %v1504
      %v1506 = vpop.f32.mrb[0].mxu0
      %1507 = vdwg.mxu0
      %1508 = vset.pattern.permute.xlu0 105
      %1509 = vperm.xlu0 %1508, %v244
      %v1510 = vpop.permute.xlu0 %1509
      %1512 = vset.pattern.permute.xlu0 105
      %1513 = vperm.xlu0 %1512, %v247
      %v1514 = vpop.permute.xlu0 %1513
      %v1516 = vadd.f32 %v1510, %v551
      %v1517 = vadd.f32 %v1514, %v551
      %vm1518 = vcmp.gt.f32.partialorder %v1516, 0.0
      %vm1519 = vcmp.gt.f32.partialorder %v1517, 0.0
      %v1520 = vmul.f32 %v1516, 0.2
      %v1521 = vmul.f32 %v1517, 0.2
      %v1522 = vsel %vm1518, %v1516, %v1520
      %v1523 = vsel %vm1519, %v1517, %v1521
      %1526 = vrot.lane.b32.xlu0 %v1522, 80
      %v1527 = vpop.permute.xlu0 %1526
      %1528 = vrot.lane.b32.xlu0 %v1523, 80
      %v1529 = vpop.permute.xlu0 %1528
      %v1532 = vsel %vm1361, %v1527, -1e+30
      %v1533 = vsel %vm1362, %v1529, -1e+30
      %v1534 = vsel %vm419, %v1532, -inf
      %1535 = vmax.xlane.f32.xlu0 %v1534
      %v1536 = vpop.xlane.xlu0 %1535
      %v1537 = vsel %vm419, %v1533, -inf
      %1538 = vmax.xlane.f32.xlu0 %v1537
      %v1539 = vpop.xlane.xlu0 %1538
      %v1540 = vsub.f32 %v1532, %v1536
      %v1541 = vsub.f32 %v1533, %v1539
      %v1542 = vmul.f32 %v1540, 1.442695
      %v1543 = vpow.pop %v1542
      %v1544 = vmul.f32 %v1541, 1.442695
      %v1545 = vpow.pop %v1544
      %v1546 = vsel %vm1361, %v1543, 0.0
      %v1547 = vsel %vm1362, %v1545, 0.0
      %1550 = vrot.lane.b32.xlu0 %v1546, 32
      %v1551 = vpop.permute.xlu0 %1550
      %1552 = vrot.lane.b32.xlu0 %v1547, 32
      %v1553 = vpop.permute.xlu0 %1552
      %v1556 = vsel %vm442, %v1551, 0.0
      %1557 = vadd.xlane.f32.xlu0 %v1556
      %v1558 = vpop.xlane.xlu0 %1557
      %v1559 = vsel %vm442, %v1553, 0.0
      %1560 = vadd.xlane.f32.xlu0 %v1559
      %v1561 = vpop.xlane.xlu0 %1560
      %v1562 = vmax.f32 %v1558, 1e-30
      %v1563 = vmax.f32 %v1561, 1e-30
      %v1564 = vrcp.pop %v1562
      %v1565 = vrcp.pop %v1563
      %v1566 = vmul.f32 %v1546, %v1564
      %v1567 = vmul.f32 %v1547, %v1565
      %1570 = vrot.lane.b32.xlu0 %v1566, 32
      %v1571 = vpop.permute.xlu0 %1570
      %1572 = vrot.lane.b32.xlu0 %v1567, 32
      %v1573 = vpop.permute.xlu0 %1572
      %1574 = vrot.lane.b32.xlu0 %v244, 112
      %v1575 = vpop.permute.xlu0 %1574
      %1576 = vrot.lane.b32.xlu0 %v247, 112
      %v1577 = vpop.permute.xlu0 %1576
      %v1580 = vsel %vm442, %v1571, 0
      %v1582 = vsel %vm442, %v1573, 0
      %1584 = vmatprep.subr.mxu0 0.0
      %1585 = vmatpush1.msra.mxu0 %v1575
      %1586 = vmatprep.subr.mxu0 0.0
      %1587 = vmatpush1.msra.mxu0 %v1577
      %1588 = vmatprep.subr.mxu0 0.0
      %1589 = vmatpush1.msra.mxu0 0.0
      %1590 = vmatprep.subr.mxu0 0.0
      %1591 = vmatpush1.msra.mxu0 0.0
      %1592 = vmatprep.subr.mxu0 0.0
      %1593 = vmatpush1.msra.mxu0 0.0
      %1594 = vmatprep.subr.mxu0 0.0
      %1595 = vmatpush1.msra.mxu0 0.0
      %1596 = vmatprep.subr.mxu0 0.0
      %1597 = vmatpush1.msra.mxu0 0.0
      %1598 = vmatprep.subr.mxu0 0.0
      %1599 = vmatpush1.msra.mxu0 0.0
      %1600 = vmatprep.subr.mxu0 0.0
      %1601 = vmatpush1.msra.mxu0 0.0
      %1602 = vmatprep.subr.mxu0 0.0
      %1603 = vmatpush1.msra.mxu0 0.0
      %1604 = vmatprep.subr.mxu0 0.0
      %1605 = vmatpush1.msra.mxu0 0.0
      %1606 = vmatprep.subr.mxu0 0.0
      %1607 = vmatpush1.msra.mxu0 0.0
      %1608 = vmatprep.subr.mxu0 0.0
      %1609 = vmatpush1.msra.mxu0 0.0
      %1610 = vmatprep.subr.mxu0 0.0
      %1611 = vmatpush1.msra.mxu0 0.0
      %1612 = vmatprep.subr.mxu0 0.0
      %1613 = vmatpush1.msra.mxu0 0.0
      %1614 = vmatprep.subr.mxu0 0.0
      %1615 = vmatpush1.msra.mxu0 0.0
      %1616 = vmatprep.subr.mxu0 0.0
      %1617 = vmatpush1.msra.mxu0 0.0
      %1618 = vmatprep.subr.mxu0 0.0
      %1619 = vmatpush1.msra.mxu0 0.0
      %1620 = vmatprep.subr.mxu0 0.0
      %1621 = vmatpush1.msra.mxu0 0.0
      %1622 = vmatprep.subr.mxu0 0.0
      %1623 = vmatpush1.msra.mxu0 0.0
      %1624 = vmatprep.subr.mxu0 0.0
      %1625 = vmatpush1.msra.mxu0 0.0
      %1626 = vmatprep.subr.mxu0 0.0
      %1627 = vmatpush1.msra.mxu0 0.0
      %1628 = vmatprep.subr.mxu0 0.0
      %1629 = vmatpush1.msra.mxu0 0.0
      %1630 = vmatprep.subr.mxu0 0.0
      %1631 = vmatpush1.msra.mxu0 0.0
      %1632 = vmatprep.subr.mxu0 0.0
      %1633 = vmatpush1.msra.mxu0 0.0
      %1634 = vmatprep.subr.mxu0 0.0
      %1635 = vmatpush1.msra.mxu0 0.0
      %1636 = vmatprep.subr.mxu0 0.0
      %1637 = vmatpush1.msra.mxu0 0.0
      %1638 = vmatprep.subr.mxu0 0.0
      %1639 = vmatpush1.msra.mxu0 0.0
      %1640 = vmatprep.subr.mxu0 0.0
      %1641 = vmatpush1.msra.mxu0 0.0
      %1642 = vmatprep.subr.mxu0 0.0
      %1643 = vmatpush1.msra.mxu0 0.0
      %1644 = vmatprep.subr.mxu0 0.0
      %1645 = vmatpush1.msra.mxu0 0.0
      %1646 = vmatprep.subr.mxu0 0.0
      %1647 = vmatpush1.msra.mxu0 0.0
      %1648 = vmatprep.mubr.f32.mxu0 0.0
      %1649 = vmatmul.mubr.f32.gmra.mrb[0].mxu0 %v1580
      %v1650 = vpop.f32.mrb[0].mxu0
      %v1651 = vadd.f32 0.0, %v1650
      %v1652 = vpop.f32.mrb[0].mxu0
      %1653 = vmatprep.mubr.f32.mxu0 0.0
      %1654 = vmatmul.mubr.f32.gmra.mrb[0].mxu0 %v1582
      %v1655 = vpop.f32.mrb[0].mxu0
      %v1656 = vadd.f32 0.0, %v1655
      %v1657 = vpop.f32.mrb[0].mxu0
      %1658 = vdwg.mxu0
      %1661 = vrot.lane.b32.xlu0 %v1651, 16
      %v1662 = vpop.permute.xlu0 %1661
      %1663 = vrot.lane.b32.xlu0 %v1656, 16
      %v1664 = vpop.permute.xlu0 %1663
      %v1667 = vsel %vm442, %v1500, %v1662
      %v1668 = vsel %vm442, %v1505, %v1664
      %v1669 = vadd.f32 %v1667, %v708
      %v1670 = vadd.f32 %v1668, %v708
      %vm1671 = vcmp.gt.f32.partialorder %v1669, 0.0
      %vm1672 = vcmp.gt.f32.partialorder %v1670, 0.0
      %v1673 = vmin.f32 %v1669, 0.0
      %v1674 = vmin.f32 %v1670, 0.0
      %v1675 = vmul.f32 %v1673, 1.442695
      %v1676 = vpow.pop %v1675
      %v1677 = vmul.f32 %v1674, 1.442695
      %v1678 = vpow.pop %v1677
      %v1679 = vsub.f32 %v1676, 1.0
      %v1680 = vsub.f32 %v1678, 1.0
      %v1681 = vsel %vm1671, %v1669, %v1679
      %v1682 = vsel %vm1672, %v1670, %v1680
      %1683 = vset.pattern.permute.xlu0 106
      %1684 = vperm.xlu0 %1683, %v244
      %v1685 = vpop.permute.xlu0 %1684
      %1687 = vset.pattern.permute.xlu0 106
      %1688 = vperm.xlu0 %1687, %v247
      %v1689 = vpop.permute.xlu0 %1688
      %v1691 = vadd.f32 %v1685, %v734
      %v1692 = vadd.f32 %v1689, %v734
      %vm1693 = vcmp.gt.f32.partialorder %v1691, 0.0
      %vm1694 = vcmp.gt.f32.partialorder %v1692, 0.0
      %v1695 = vmul.f32 %v1691, 0.2
      %v1696 = vmul.f32 %v1692, 0.2
      %v1697 = vsel %vm1693, %v1691, %v1695
      %v1698 = vsel %vm1694, %v1692, %v1696
      %1701 = vrot.lane.b32.xlu0 %v1697, 96
      %v1702 = vpop.permute.xlu0 %1701
      %1703 = vrot.lane.b32.xlu0 %v1698, 96
      %v1704 = vpop.permute.xlu0 %1703
      %v1707 = vsel %vm1361, %v1702, -1e+30
      %v1708 = vsel %vm1362, %v1704, -1e+30
      %v1709 = vsel %vm753, %v1707, -inf
      %1710 = vmax.xlane.f32.xlu0 %v1709
      %v1711 = vpop.xlane.xlu0 %1710
      %v1712 = vsel %vm753, %v1708, -inf
      %1713 = vmax.xlane.f32.xlu0 %v1712
      %v1714 = vpop.xlane.xlu0 %1713
      %v1715 = vsub.f32 %v1707, %v1711
      %v1716 = vsub.f32 %v1708, %v1714
      %v1717 = vmul.f32 %v1715, 1.442695
      %v1718 = vpow.pop %v1717
      %v1719 = vmul.f32 %v1716, 1.442695
      %v1720 = vpow.pop %v1719
      %v1721 = vsel %vm1361, %v1718, 0.0
      %v1722 = vsel %vm1362, %v1720, 0.0
      %1725 = vrot.lane.b32.xlu0 %v1721, 16
      %v1726 = vpop.permute.xlu0 %1725
      %1727 = vrot.lane.b32.xlu0 %v1722, 16
      %v1728 = vpop.permute.xlu0 %1727
      %v1731 = vsel %vm442, %v1726, 0.0
      %1732 = vadd.xlane.f32.xlu0 %v1731
      %v1733 = vpop.xlane.xlu0 %1732
      %v1734 = vsel %vm442, %v1728, 0.0
      %1735 = vadd.xlane.f32.xlu0 %v1734
      %v1736 = vpop.xlane.xlu0 %1735
      %v1737 = vmax.f32 %v1733, 1e-30
      %v1738 = vmax.f32 %v1736, 1e-30
      %v1739 = vrcp.pop %v1737
      %v1740 = vrcp.pop %v1738
      %v1741 = vmul.f32 %v1721, %v1739
      %v1742 = vmul.f32 %v1722, %v1740
      %1745 = vrot.lane.b32.xlu0 %v1741, 16
      %v1746 = vpop.permute.xlu0 %1745
      %1747 = vrot.lane.b32.xlu0 %v1742, 16
      %v1748 = vpop.permute.xlu0 %1747
      %1749 = vrot.lane.b32.xlu0 %v244, 96
      %v1750 = vpop.permute.xlu0 %1749
      %1751 = vrot.lane.b32.xlu0 %v247, 96
      %v1752 = vpop.permute.xlu0 %1751
      %v1755 = vsel %vm442, %v1746, 0
      %v1757 = vsel %vm442, %v1748, 0
      %1759 = vmatprep.subr.mxu0 0.0
      %1760 = vmatpush1.msra.mxu0 %v1750
      %1761 = vmatprep.subr.mxu0 0.0
      %1762 = vmatpush1.msra.mxu0 %v1752
      %1763 = vmatprep.subr.mxu0 0.0
      %1764 = vmatpush1.msra.mxu0 0.0
      %1765 = vmatprep.subr.mxu0 0.0
      %1766 = vmatpush1.msra.mxu0 0.0
      %1767 = vmatprep.subr.mxu0 0.0
      %1768 = vmatpush1.msra.mxu0 0.0
      %1769 = vmatprep.subr.mxu0 0.0
      %1770 = vmatpush1.msra.mxu0 0.0
      %1771 = vmatprep.subr.mxu0 0.0
      %1772 = vmatpush1.msra.mxu0 0.0
      %1773 = vmatprep.subr.mxu0 0.0
      %1774 = vmatpush1.msra.mxu0 0.0
      %1775 = vmatprep.subr.mxu0 0.0
      %1776 = vmatpush1.msra.mxu0 0.0
      %1777 = vmatprep.subr.mxu0 0.0
      %1778 = vmatpush1.msra.mxu0 0.0
      %1779 = vmatprep.subr.mxu0 0.0
      %1780 = vmatpush1.msra.mxu0 0.0
      %1781 = vmatprep.subr.mxu0 0.0
      %1782 = vmatpush1.msra.mxu0 0.0
      %1783 = vmatprep.subr.mxu0 0.0
      %1784 = vmatpush1.msra.mxu0 0.0
      %1785 = vmatprep.subr.mxu0 0.0
      %1786 = vmatpush1.msra.mxu0 0.0
      %1787 = vmatprep.subr.mxu0 0.0
      %1788 = vmatpush1.msra.mxu0 0.0
      %1789 = vmatprep.subr.mxu0 0.0
      %1790 = vmatpush1.msra.mxu0 0.0
      %1791 = vmatprep.subr.mxu0 0.0
      %1792 = vmatpush1.msra.mxu0 0.0
      %1793 = vmatprep.subr.mxu0 0.0
      %1794 = vmatpush1.msra.mxu0 0.0
      %1795 = vmatprep.subr.mxu0 0.0
      %1796 = vmatpush1.msra.mxu0 0.0
      %1797 = vmatprep.subr.mxu0 0.0
      %1798 = vmatpush1.msra.mxu0 0.0
      %1799 = vmatprep.subr.mxu0 0.0
      %1800 = vmatpush1.msra.mxu0 0.0
      %1801 = vmatprep.subr.mxu0 0.0
      %1802 = vmatpush1.msra.mxu0 0.0
      %1803 = vmatprep.subr.mxu0 0.0
      %1804 = vmatpush1.msra.mxu0 0.0
      %1805 = vmatprep.subr.mxu0 0.0
      %1806 = vmatpush1.msra.mxu0 0.0
      %1807 = vmatprep.subr.mxu0 0.0
      %1808 = vmatpush1.msra.mxu0 0.0
      %1809 = vmatprep.subr.mxu0 0.0
      %1810 = vmatpush1.msra.mxu0 0.0
      %1811 = vmatprep.subr.mxu0 0.0
      %1812 = vmatpush1.msra.mxu0 0.0
      %1813 = vmatprep.subr.mxu0 0.0
      %1814 = vmatpush1.msra.mxu0 0.0
      %1815 = vmatprep.subr.mxu0 0.0
      %1816 = vmatpush1.msra.mxu0 0.0
      %1817 = vmatprep.subr.mxu0 0.0
      %1818 = vmatpush1.msra.mxu0 0.0
      %1819 = vmatprep.subr.mxu0 0.0
      %1820 = vmatpush1.msra.mxu0 0.0
      %1821 = vmatprep.subr.mxu0 0.0
      %1822 = vmatpush1.msra.mxu0 0.0
      %1823 = vmatprep.mubr.f32.mxu0 0.0
      %1824 = vmatmul.mubr.f32.gmra.mrb[0].mxu0 %v1755
      %v1825 = vpop.f32.mrb[0].mxu0
      %v1826 = vadd.f32 0.0, %v1825
      %v1827 = vpop.f32.mrb[0].mxu0
      %1828 = vmatprep.mubr.f32.mxu0 0.0
      %1829 = vmatmul.mubr.f32.gmra.mrb[0].mxu0 %v1757
      %v1830 = vpop.f32.mrb[0].mxu0
      %v1831 = vadd.f32 0.0, %v1830
      %v1832 = vpop.f32.mrb[0].mxu0
      %1833 = vdwg.mxu0
      %1834 = vset.pattern.permute.xlu0 107
      %1835 = vperm.xlu0 %1834, %v244
      %v1836 = vpop.permute.xlu0 %1835
      %1838 = vset.pattern.permute.xlu0 107
      %1839 = vperm.xlu0 %1838, %v247
      %v1840 = vpop.permute.xlu0 %1839
      %v1842 = vadd.f32 %v1836, %v890
      %v1843 = vadd.f32 %v1840, %v890
      %vm1844 = vcmp.gt.f32.partialorder %v1842, 0.0
      %vm1845 = vcmp.gt.f32.partialorder %v1843, 0.0
      %v1846 = vmul.f32 %v1842, 0.2
      %v1847 = vmul.f32 %v1843, 0.2
      %v1848 = vsel %vm1844, %v1842, %v1846
      %v1849 = vsel %vm1845, %v1843, %v1847
      %1852 = vrot.lane.b32.xlu0 %v1848, 96
      %v1853 = vpop.permute.xlu0 %1852
      %1854 = vrot.lane.b32.xlu0 %v1849, 96
      %v1855 = vpop.permute.xlu0 %1854
      %v1858 = vsel %vm1361, %v1853, -1e+30
      %v1859 = vsel %vm1362, %v1855, -1e+30
      %v1860 = vsel %vm753, %v1858, -inf
      %1861 = vmax.xlane.f32.xlu0 %v1860
      %v1862 = vpop.xlane.xlu0 %1861
      %v1863 = vsel %vm753, %v1859, -inf
      %1864 = vmax.xlane.f32.xlu0 %v1863
      %v1865 = vpop.xlane.xlu0 %1864
      %v1866 = vsub.f32 %v1858, %v1862
      %v1867 = vsub.f32 %v1859, %v1865
      %v1868 = vmul.f32 %v1866, 1.442695
      %v1869 = vpow.pop %v1868
      %v1870 = vmul.f32 %v1867, 1.442695
      %v1871 = vpow.pop %v1870
      %v1872 = vsel %vm1361, %v1869, 0.0
      %v1873 = vsel %vm1362, %v1871, 0.0
      %1876 = vrot.lane.b32.xlu0 %v1872, 16
      %v1877 = vpop.permute.xlu0 %1876
      %1878 = vrot.lane.b32.xlu0 %v1873, 16
      %v1879 = vpop.permute.xlu0 %1878
      %v1882 = vsel %vm442, %v1877, 0.0
      %1883 = vadd.xlane.f32.xlu0 %v1882
      %v1884 = vpop.xlane.xlu0 %1883
      %v1885 = vsel %vm442, %v1879, 0.0
      %1886 = vadd.xlane.f32.xlu0 %v1885
      %v1887 = vpop.xlane.xlu0 %1886
      %v1888 = vmax.f32 %v1884, 1e-30
      %v1889 = vmax.f32 %v1887, 1e-30
      %v1890 = vrcp.pop %v1888
      %v1891 = vrcp.pop %v1889
      %v1892 = vmul.f32 %v1872, %v1890
      %v1893 = vmul.f32 %v1873, %v1891
      %1896 = vrot.lane.b32.xlu0 %v1892, 16
      %v1897 = vpop.permute.xlu0 %1896
      %1898 = vrot.lane.b32.xlu0 %v1893, 16
      %v1899 = vpop.permute.xlu0 %1898
      %1900 = vrot.lane.b32.xlu0 %v244, 80
      %v1901 = vpop.permute.xlu0 %1900
      %1902 = vrot.lane.b32.xlu0 %v247, 80
      %v1903 = vpop.permute.xlu0 %1902
      %v1906 = vsel %vm442, %v1897, 0
      %v1908 = vsel %vm442, %v1899, 0
      %1910 = vmatprep.subr.mxu0 0.0
      %1911 = vmatpush1.msra.mxu0 %v1901
      %1912 = vmatprep.subr.mxu0 0.0
      %1913 = vmatpush1.msra.mxu0 %v1903
      %1914 = vmatprep.subr.mxu0 0.0
      %1915 = vmatpush1.msra.mxu0 0.0
      %1916 = vmatprep.subr.mxu0 0.0
      %1917 = vmatpush1.msra.mxu0 0.0
      %1918 = vmatprep.subr.mxu0 0.0
      %1919 = vmatpush1.msra.mxu0 0.0
      %1920 = vmatprep.subr.mxu0 0.0
      %1921 = vmatpush1.msra.mxu0 0.0
      %1922 = vmatprep.subr.mxu0 0.0
      %1923 = vmatpush1.msra.mxu0 0.0
      %1924 = vmatprep.subr.mxu0 0.0
      %1925 = vmatpush1.msra.mxu0 0.0
      %1926 = vmatprep.subr.mxu0 0.0
      %1927 = vmatpush1.msra.mxu0 0.0
      %1928 = vmatprep.subr.mxu0 0.0
      %1929 = vmatpush1.msra.mxu0 0.0
      %1930 = vmatprep.subr.mxu0 0.0
      %1931 = vmatpush1.msra.mxu0 0.0
      %1932 = vmatprep.subr.mxu0 0.0
      %1933 = vmatpush1.msra.mxu0 0.0
      %1934 = vmatprep.subr.mxu0 0.0
      %1935 = vmatpush1.msra.mxu0 0.0
      %1936 = vmatprep.subr.mxu0 0.0
      %1937 = vmatpush1.msra.mxu0 0.0
      %1938 = vmatprep.subr.mxu0 0.0
      %1939 = vmatpush1.msra.mxu0 0.0
      %1940 = vmatprep.subr.mxu0 0.0
      %1941 = vmatpush1.msra.mxu0 0.0
      %1942 = vmatprep.subr.mxu0 0.0
      %1943 = vmatpush1.msra.mxu0 0.0
      %1944 = vmatprep.subr.mxu0 0.0
      %1945 = vmatpush1.msra.mxu0 0.0
      %1946 = vmatprep.subr.mxu0 0.0
      %1947 = vmatpush1.msra.mxu0 0.0
      %1948 = vmatprep.subr.mxu0 0.0
      %1949 = vmatpush1.msra.mxu0 0.0
      %1950 = vmatprep.subr.mxu0 0.0
      %1951 = vmatpush1.msra.mxu0 0.0
      %1952 = vmatprep.subr.mxu0 0.0
      %1953 = vmatpush1.msra.mxu0 0.0
      %1954 = vmatprep.subr.mxu0 0.0
      %1955 = vmatpush1.msra.mxu0 0.0
      %1956 = vmatprep.subr.mxu0 0.0
      %1957 = vmatpush1.msra.mxu0 0.0
      %1958 = vmatprep.subr.mxu0 0.0
      %1959 = vmatpush1.msra.mxu0 0.0
      %1960 = vmatprep.subr.mxu0 0.0
      %1961 = vmatpush1.msra.mxu0 0.0
      %1962 = vmatprep.subr.mxu0 0.0
      %1963 = vmatpush1.msra.mxu0 0.0
      %1964 = vmatprep.subr.mxu0 0.0
      %1965 = vmatpush1.msra.mxu0 0.0
      %1966 = vmatprep.subr.mxu0 0.0
      %1967 = vmatpush1.msra.mxu0 0.0
      %1968 = vmatprep.subr.mxu0 0.0
      %1969 = vmatpush1.msra.mxu0 0.0
      %1970 = vmatprep.subr.mxu0 0.0
      %1971 = vmatpush1.msra.mxu0 0.0
      %1972 = vmatprep.subr.mxu0 0.0
      %1973 = vmatpush1.msra.mxu0 0.0
      %1974 = vmatprep.mubr.f32.mxu0 0.0
      %1975 = vmatmul.mubr.f32.gmra.mrb[0].mxu0 %v1906
      %v1976 = vpop.f32.mrb[0].mxu0
      %v1977 = vadd.f32 0.0, %v1976
      %v1978 = vpop.f32.mrb[0].mxu0
      %1979 = vmatprep.mubr.f32.mxu0 0.0
      %1980 = vmatmul.mubr.f32.gmra.mrb[0].mxu0 %v1908
      %v1981 = vpop.f32.mrb[0].mxu0
      %v1982 = vadd.f32 0.0, %v1981
      %v1983 = vpop.f32.mrb[0].mxu0
      %1984 = vdwg.mxu0
      %1987 = vrot.lane.b32.xlu0 %v1977, 16
      %v1988 = vpop.permute.xlu0 %1987
      %1989 = vrot.lane.b32.xlu0 %v1982, 16
      %v1990 = vpop.permute.xlu0 %1989
      %v1993 = vsel %vm442, %v1826, %v1988
      %v1994 = vsel %vm442, %v1831, %v1990
      %v1995 = vadd.f32 %v1993, %v1046
      %v1996 = vadd.f32 %v1994, %v1046
      %vm1997 = vcmp.gt.f32.partialorder %v1995, 0.0
      %vm1998 = vcmp.gt.f32.partialorder %v1996, 0.0
      %v1999 = vmin.f32 %v1995, 0.0
      %v2000 = vmin.f32 %v1996, 0.0
      %v2001 = vmul.f32 %v1999, 1.442695
      %v2002 = vpow.pop %v2001
      %v2003 = vmul.f32 %v2000, 1.442695
      %v2004 = vpow.pop %v2003
      %v2005 = vsub.f32 %v2002, 1.0
      %v2006 = vsub.f32 %v2004, 1.0
      %v2007 = vsel %vm1997, %v1995, %v2005
      %v2008 = vsel %vm1998, %v1996, %v2006
      %vm2009 = vcmp.gt.f32.partialorder %v167, 0.0
      %vm2010 = vcmp.gt.f32.partialorder %v169, 0.0
      %2011 = vset.pattern.permute.xlu0 108
      %2012 = vperm.xlu0 %2011, %v244
      %v2013 = vpop.permute.xlu0 %2012
      %2015 = vset.pattern.permute.xlu0 108
      %2016 = vperm.xlu0 %2015, %v247
      %v2017 = vpop.permute.xlu0 %2016
      %v2019 = vadd.f32 %v2013, %v1075
      %v2020 = vadd.f32 %v2017, %v1075
      %vm2021 = vcmp.gt.f32.partialorder %v2019, 0.0
      %vm2022 = vcmp.gt.f32.partialorder %v2020, 0.0
      %v2023 = vmul.f32 %v2019, 0.2
      %v2024 = vmul.f32 %v2020, 0.2
      %v2025 = vsel %vm2021, %v2019, %v2023
      %v2026 = vsel %vm2022, %v2020, %v2024
      %2029 = vrot.lane.b32.xlu0 %v2025, 112
      %v2030 = vpop.permute.xlu0 %2029
      %2031 = vrot.lane.b32.xlu0 %v2026, 112
      %v2032 = vpop.permute.xlu0 %2031
      %v2035 = vsel %vm2009, %v2030, -1e+30
      %v2036 = vsel %vm2010, %v2032, -1e+30
      %v2037 = vsel %vm442, %v2035, -inf
      %2038 = vmax.xlane.f32.xlu0 %v2037
      %v2039 = vpop.xlane.xlu0 %2038
      %v2040 = vsel %vm442, %v2036, -inf
      %2041 = vmax.xlane.f32.xlu0 %v2040
      %v2042 = vpop.xlane.xlu0 %2041
      %v2043 = vsub.f32 %v2035, %v2039
      %v2044 = vsub.f32 %v2036, %v2042
      %v2045 = vmul.f32 %v2043, 1.442695
      %v2046 = vpow.pop %v2045
      %v2047 = vmul.f32 %v2044, 1.442695
      %v2048 = vpow.pop %v2047
      %v2049 = vsel %vm2009, %v2046, 0.0
      %v2050 = vsel %vm2010, %v2048, 0.0
      %v2051 = vsel %vm442, %v2049, 0.0
      %2052 = vadd.xlane.f32.xlu0 %v2051
      %v2053 = vpop.xlane.xlu0 %2052
      %v2054 = vsel %vm442, %v2050, 0.0
      %2055 = vadd.xlane.f32.xlu0 %v2054
      %v2056 = vpop.xlane.xlu0 %2055
      %v2057 = vmax.f32 %v2053, 1e-30
      %v2058 = vmax.f32 %v2056, 1e-30
      %v2059 = vrcp.pop %v2057
      %v2060 = vrcp.pop %v2058
      %v2061 = vmul.f32 %v2049, %v2059
      %v2062 = vmul.f32 %v2050, %v2060
      %2063 = vrot.lane.b32.xlu0 %v244, 64
      %v2064 = vpop.permute.xlu0 %2063
      %2065 = vrot.lane.b32.xlu0 %v247, 64
      %v2066 = vpop.permute.xlu0 %2065
      %v2070 = vsel %vm442, %v2061, 0
      %v2073 = vsel %vm442, %v2062, 0
      %2075 = vmatprep.subr.mxu0 0.0
      %2076 = vmatpush1.msra.mxu0 %v2064
      %2077 = vmatprep.subr.mxu0 0.0
      %2078 = vmatpush1.msra.mxu0 %v2066
      %2079 = vmatprep.subr.mxu0 0.0
      %2080 = vmatpush1.msra.mxu0 0.0
      %2081 = vmatprep.subr.mxu0 0.0
      %2082 = vmatpush1.msra.mxu0 0.0
      %2083 = vmatprep.subr.mxu0 0.0
      %2084 = vmatpush1.msra.mxu0 0.0
      %2085 = vmatprep.subr.mxu0 0.0
      %2086 = vmatpush1.msra.mxu0 0.0
      %2087 = vmatprep.subr.mxu0 0.0
      %2088 = vmatpush1.msra.mxu0 0.0
      %2089 = vmatprep.subr.mxu0 0.0
      %2090 = vmatpush1.msra.mxu0 0.0
      %2091 = vmatprep.subr.mxu0 0.0
      %2092 = vmatpush1.msra.mxu0 0.0
      %2093 = vmatprep.subr.mxu0 0.0
      %2094 = vmatpush1.msra.mxu0 0.0
      %2095 = vmatprep.subr.mxu0 0.0
      %2096 = vmatpush1.msra.mxu0 0.0
      %2097 = vmatprep.subr.mxu0 0.0
      %2098 = vmatpush1.msra.mxu0 0.0
      %2099 = vmatprep.subr.mxu0 0.0
      %2100 = vmatpush1.msra.mxu0 0.0
      %2101 = vmatprep.subr.mxu0 0.0
      %2102 = vmatpush1.msra.mxu0 0.0
      %2103 = vmatprep.subr.mxu0 0.0
      %2104 = vmatpush1.msra.mxu0 0.0
      %2105 = vmatprep.subr.mxu0 0.0
      %2106 = vmatpush1.msra.mxu0 0.0
      %2107 = vmatprep.subr.mxu0 0.0
      %2108 = vmatpush1.msra.mxu0 0.0
      %2109 = vmatprep.subr.mxu0 0.0
      %2110 = vmatpush1.msra.mxu0 0.0
      %2111 = vmatprep.subr.mxu0 0.0
      %2112 = vmatpush1.msra.mxu0 0.0
      %2113 = vmatprep.subr.mxu0 0.0
      %2114 = vmatpush1.msra.mxu0 0.0
      %2115 = vmatprep.subr.mxu0 0.0
      %2116 = vmatpush1.msra.mxu0 0.0
      %2117 = vmatprep.subr.mxu0 0.0
      %2118 = vmatpush1.msra.mxu0 0.0
      %2119 = vmatprep.subr.mxu0 0.0
      %2120 = vmatpush1.msra.mxu0 0.0
      %2121 = vmatprep.subr.mxu0 0.0
      %2122 = vmatpush1.msra.mxu0 0.0
      %2123 = vmatprep.subr.mxu0 0.0
      %2124 = vmatpush1.msra.mxu0 0.0
      %2125 = vmatprep.subr.mxu0 0.0
      %2126 = vmatpush1.msra.mxu0 0.0
      %2127 = vmatprep.subr.mxu0 0.0
      %2128 = vmatpush1.msra.mxu0 0.0
      %2129 = vmatprep.subr.mxu0 0.0
      %2130 = vmatpush1.msra.mxu0 0.0
      %2131 = vmatprep.subr.mxu0 0.0
      %2132 = vmatpush1.msra.mxu0 0.0
      %2133 = vmatprep.subr.mxu0 0.0
      %2134 = vmatpush1.msra.mxu0 0.0
      %2135 = vmatprep.subr.mxu0 0.0
      %2136 = vmatpush1.msra.mxu0 0.0
      %2137 = vmatprep.subr.mxu0 0.0
      %2138 = vmatpush1.msra.mxu0 0.0
      %2139 = vmatprep.mubr.f32.mxu0 0.0
      %2140 = vmatmul.mubr.f32.gmra.mrb[0].mxu0 %v2070
      %v2141 = vpop.f32.mrb[0].mxu0
      %v2142 = vadd.f32 0.0, %v2141
      %v2143 = vpop.f32.mrb[0].mxu0
      %2144 = vmatprep.mubr.f32.mxu0 0.0
      %2145 = vmatmul.mubr.f32.gmra.mrb[0].mxu0 %v2073
      %v2146 = vpop.f32.mrb[0].mxu0
      %v2147 = vadd.f32 0.0, %v2146
      %v2148 = vpop.f32.mrb[0].mxu0
      %2149 = vdwg.mxu0
      %2150 = vset.pattern.permute.xlu0 109
      %2151 = vperm.xlu0 %2150, %v244
      %v2152 = vpop.permute.xlu0 %2151
      %2154 = vset.pattern.permute.xlu0 109
      %2155 = vperm.xlu0 %2154, %v247
      %v2156 = vpop.permute.xlu0 %2155
      %v2158 = vadd.f32 %v2152, %v1210
      %v2159 = vadd.f32 %v2156, %v1210
      %vm2160 = vcmp.gt.f32.partialorder %v2158, 0.0
      %vm2161 = vcmp.gt.f32.partialorder %v2159, 0.0
      %v2162 = vmul.f32 %v2158, 0.2
      %v2163 = vmul.f32 %v2159, 0.2
      %v2164 = vsel %vm2160, %v2158, %v2162
      %v2165 = vsel %vm2161, %v2159, %v2163
      %2168 = vrot.lane.b32.xlu0 %v2164, 112
      %v2169 = vpop.permute.xlu0 %2168
      %2170 = vrot.lane.b32.xlu0 %v2165, 112
      %v2171 = vpop.permute.xlu0 %2170
      %v2174 = vsel %vm2009, %v2169, -1e+30
      %v2175 = vsel %vm2010, %v2171, -1e+30
      %v2176 = vsel %vm442, %v2174, -inf
      %2177 = vmax.xlane.f32.xlu0 %v2176
      %v2178 = vpop.xlane.xlu0 %2177
      %v2179 = vsel %vm442, %v2175, -inf
      %2180 = vmax.xlane.f32.xlu0 %v2179
      %v2181 = vpop.xlane.xlu0 %2180
      %v2182 = vsub.f32 %v2174, %v2178
      %v2183 = vsub.f32 %v2175, %v2181
      %v2184 = vmul.f32 %v2182, 1.442695
      %v2185 = vpow.pop %v2184
      %v2186 = vmul.f32 %v2183, 1.442695
      %v2187 = vpow.pop %v2186
      %v2188 = vsel %vm2009, %v2185, 0.0
      %v2189 = vsel %vm2010, %v2187, 0.0
      %v2190 = vsel %vm442, %v2188, 0.0
      %2191 = vadd.xlane.f32.xlu0 %v2190
      %v2192 = vpop.xlane.xlu0 %2191
      %v2193 = vsel %vm442, %v2189, 0.0
      %2194 = vadd.xlane.f32.xlu0 %v2193
      %v2195 = vpop.xlane.xlu0 %2194
      %v2196 = vmax.f32 %v2192, 1e-30
      %v2197 = vmax.f32 %v2195, 1e-30
      %v2198 = vrcp.pop %v2196
      %v2199 = vrcp.pop %v2197
      %v2200 = vmul.f32 %v2188, %v2198
      %v2201 = vmul.f32 %v2189, %v2199
      %2202 = vrot.lane.b32.xlu0 %v244, 48
      %v2203 = vpop.permute.xlu0 %2202
      %2204 = vrot.lane.b32.xlu0 %v247, 48
      %v2205 = vpop.permute.xlu0 %2204
      %v2209 = vsel %vm442, %v2200, 0
      %v2212 = vsel %vm442, %v2201, 0
      %2214 = vmatprep.subr.mxu0 0.0
      %2215 = vmatpush1.msra.mxu0 %v2203
      %2216 = vmatprep.subr.mxu0 0.0
      %2217 = vmatpush1.msra.mxu0 %v2205
      %2218 = vmatprep.subr.mxu0 0.0
      %2219 = vmatpush1.msra.mxu0 0.0
      %2220 = vmatprep.subr.mxu0 0.0
      %2221 = vmatpush1.msra.mxu0 0.0
      %2222 = vmatprep.subr.mxu0 0.0
      %2223 = vmatpush1.msra.mxu0 0.0
      %2224 = vmatprep.subr.mxu0 0.0
      %2225 = vmatpush1.msra.mxu0 0.0
      %2226 = vmatprep.subr.mxu0 0.0
      %2227 = vmatpush1.msra.mxu0 0.0
      %2228 = vmatprep.subr.mxu0 0.0
      %2229 = vmatpush1.msra.mxu0 0.0
      %2230 = vmatprep.subr.mxu0 0.0
      %2231 = vmatpush1.msra.mxu0 0.0
      %2232 = vmatprep.subr.mxu0 0.0
      %2233 = vmatpush1.msra.mxu0 0.0
      %2234 = vmatprep.subr.mxu0 0.0
      %2235 = vmatpush1.msra.mxu0 0.0
      %2236 = vmatprep.subr.mxu0 0.0
      %2237 = vmatpush1.msra.mxu0 0.0
      %2238 = vmatprep.subr.mxu0 0.0
      %2239 = vmatpush1.msra.mxu0 0.0
      %2240 = vmatprep.subr.mxu0 0.0
      %2241 = vmatpush1.msra.mxu0 0.0
      %2242 = vmatprep.subr.mxu0 0.0
      %2243 = vmatpush1.msra.mxu0 0.0
      %2244 = vmatprep.subr.mxu0 0.0
      %2245 = vmatpush1.msra.mxu0 0.0
      %2246 = vmatprep.subr.mxu0 0.0
      %2247 = vmatpush1.msra.mxu0 0.0
      %2248 = vmatprep.subr.mxu0 0.0
      %2249 = vmatpush1.msra.mxu0 0.0
      %2250 = vmatprep.subr.mxu0 0.0
      %2251 = vmatpush1.msra.mxu0 0.0
      %2252 = vmatprep.subr.mxu0 0.0
      %2253 = vmatpush1.msra.mxu0 0.0
      %2254 = vmatprep.subr.mxu0 0.0
      %2255 = vmatpush1.msra.mxu0 0.0
      %2256 = vmatprep.subr.mxu0 0.0
      %2257 = vmatpush1.msra.mxu0 0.0
      %2258 = vmatprep.subr.mxu0 0.0
      %2259 = vmatpush1.msra.mxu0 0.0
      %2260 = vmatprep.subr.mxu0 0.0
      %2261 = vmatpush1.msra.mxu0 0.0
      %2262 = vmatprep.subr.mxu0 0.0
      %2263 = vmatpush1.msra.mxu0 0.0
      %2264 = vmatprep.subr.mxu0 0.0
      %2265 = vmatpush1.msra.mxu0 0.0
      %2266 = vmatprep.subr.mxu0 0.0
      %2267 = vmatpush1.msra.mxu0 0.0
      %2268 = vmatprep.subr.mxu0 0.0
      %2269 = vmatpush1.msra.mxu0 0.0
      %2270 = vmatprep.subr.mxu0 0.0
      %2271 = vmatpush1.msra.mxu0 0.0
      %2272 = vmatprep.subr.mxu0 0.0
      %2273 = vmatpush1.msra.mxu0 0.0
      %2274 = vmatprep.subr.mxu0 0.0
      %2275 = vmatpush1.msra.mxu0 0.0
      %2276 = vmatprep.subr.mxu0 0.0
      %2277 = vmatpush1.msra.mxu0 0.0
      %2278 = vmatprep.mubr.f32.mxu0 0.0
      %2279 = vmatmul.mubr.f32.gmra.mrb[0].mxu0 %v2209
      %v2280 = vpop.f32.mrb[0].mxu0
      %v2281 = vadd.f32 0.0, %v2280
      %v2282 = vpop.f32.mrb[0].mxu0
      %2283 = vmatprep.mubr.f32.mxu0 0.0
      %2284 = vmatmul.mubr.f32.gmra.mrb[0].mxu0 %v2212
      %v2285 = vpop.f32.mrb[0].mxu0
      %v2286 = vadd.f32 0.0, %v2285
      %v2287 = vpop.f32.mrb[0].mxu0
      %2288 = vdwg.mxu0
      %2291 = vrot.lane.b32.xlu0 %v2281, 16
      %v2292 = vpop.permute.xlu0 %2291
      %2293 = vrot.lane.b32.xlu0 %v2286, 16
      %v2294 = vpop.permute.xlu0 %2293
      %v2297 = vsel %vm442, %v2142, %v2292
      %v2298 = vsel %vm442, %v2147, %v2294
      %v2299 = vadd.f32 %v2297, %v1345
      %v2300 = vadd.f32 %v2298, %v1345
      %vm2301 = vcmp.gt.f32.partialorder %v2299, 0.0
      %vm2302 = vcmp.gt.f32.partialorder %v2300, 0.0
      %v2303 = vmin.f32 %v2299, 0.0
      %v2304 = vmin.f32 %v2300, 0.0
      %v2305 = vmul.f32 %v2303, 1.442695
      %v2306 = vpow.pop %v2305
      %v2307 = vmul.f32 %v2304, 1.442695
      %v2308 = vpow.pop %v2307
      %v2309 = vsub.f32 %v2306, 1.0
      %v2310 = vsub.f32 %v2308, 1.0
      %v2311 = vsel %vm2301, %v2299, %v2309
      %v2312 = vsel %vm2302, %v2300, %v2310
      %vm2313 = vcmp.gt.f32.partialorder %v170, 0.0
      %vm2314 = vcmp.gt.f32.partialorder %v172, 0.0
      %2315 = vset.pattern.permute.xlu0 104
      %2316 = vperm.xlu0 %2315, %v252
      %v2317 = vpop.permute.xlu0 %2316
      %2319 = vset.pattern.permute.xlu0 104
      %2320 = vperm.xlu0 %2319, %v255
      %v2321 = vpop.permute.xlu0 %2320
      %v2323 = vadd.f32 %v2317, %v400
      %v2324 = vadd.f32 %v2321, %v400
      %vm2325 = vcmp.gt.f32.partialorder %v2323, 0.0
      %vm2326 = vcmp.gt.f32.partialorder %v2324, 0.0
      %v2327 = vmul.f32 %v2323, 0.2
      %v2328 = vmul.f32 %v2324, 0.2
      %v2329 = vsel %vm2325, %v2323, %v2327
      %v2330 = vsel %vm2326, %v2324, %v2328
      %2333 = vrot.lane.b32.xlu0 %v2329, 64
      %v2334 = vpop.permute.xlu0 %2333
      %2335 = vrot.lane.b32.xlu0 %v2330, 64
      %v2336 = vpop.permute.xlu0 %2335
      %v2339 = vsel %vm2313, %v2334, -1e+30
      %v2340 = vsel %vm2314, %v2336, -1e+30
      %v2341 = vsel %vm419, %v2339, -inf
      %2342 = vmax.xlane.f32.xlu0 %v2341
      %v2343 = vpop.xlane.xlu0 %2342
      %v2344 = vsel %vm419, %v2340, -inf
      %2345 = vmax.xlane.f32.xlu0 %v2344
      %v2346 = vpop.xlane.xlu0 %2345
      %v2347 = vsub.f32 %v2339, %v2343
      %v2348 = vsub.f32 %v2340, %v2346
      %v2349 = vmul.f32 %v2347, 1.442695
      %v2350 = vpow.pop %v2349
      %v2351 = vmul.f32 %v2348, 1.442695
      %v2352 = vpow.pop %v2351
      %v2353 = vsel %vm2313, %v2350, 0.0
      %v2354 = vsel %vm2314, %v2352, 0.0
      %2357 = vrot.lane.b32.xlu0 %v2353, 32
      %v2358 = vpop.permute.xlu0 %2357
      %2359 = vrot.lane.b32.xlu0 %v2354, 32
      %v2360 = vpop.permute.xlu0 %2359
      %v2363 = vsel %vm442, %v2358, 0.0
      %2364 = vadd.xlane.f32.xlu0 %v2363
      %v2365 = vpop.xlane.xlu0 %2364
      %v2366 = vsel %vm442, %v2360, 0.0
      %2367 = vadd.xlane.f32.xlu0 %v2366
      %v2368 = vpop.xlane.xlu0 %2367
      %v2369 = vmax.f32 %v2365, 1e-30
      %v2370 = vmax.f32 %v2368, 1e-30
      %v2371 = vrcp.pop %v2369
      %v2372 = vrcp.pop %v2370
      %v2373 = vmul.f32 %v2353, %v2371
      %v2374 = vmul.f32 %v2354, %v2372
      %2377 = vrot.lane.b32.xlu0 %v2373, 32
      %v2378 = vpop.permute.xlu0 %2377
      %2379 = vrot.lane.b32.xlu0 %v2374, 32
      %v2380 = vpop.permute.xlu0 %2379
      %v2381 = vsel %vm442, %v2378, 0
      %v2383 = vsel %vm442, %v2380, 0
      %2385 = vmatprep.subr.mxu0 0.0
      %2386 = vmatpush1.msra.mxu0 %v252
      %2387 = vmatprep.subr.mxu0 0.0
      %2388 = vmatpush1.msra.mxu0 %v255
      %2389 = vmatprep.subr.mxu0 0.0
      %2390 = vmatpush1.msra.mxu0 0.0
      %2391 = vmatprep.subr.mxu0 0.0
      %2392 = vmatpush1.msra.mxu0 0.0
      %2393 = vmatprep.subr.mxu0 0.0
      %2394 = vmatpush1.msra.mxu0 0.0
      %2395 = vmatprep.subr.mxu0 0.0
      %2396 = vmatpush1.msra.mxu0 0.0
      %2397 = vmatprep.subr.mxu0 0.0
      %2398 = vmatpush1.msra.mxu0 0.0
      %2399 = vmatprep.subr.mxu0 0.0
      %2400 = vmatpush1.msra.mxu0 0.0
      %2401 = vmatprep.subr.mxu0 0.0
      %2402 = vmatpush1.msra.mxu0 0.0
      %2403 = vmatprep.subr.mxu0 0.0
      %2404 = vmatpush1.msra.mxu0 0.0
      %2405 = vmatprep.subr.mxu0 0.0
      %2406 = vmatpush1.msra.mxu0 0.0
      %2407 = vmatprep.subr.mxu0 0.0
      %2408 = vmatpush1.msra.mxu0 0.0
      %2409 = vmatprep.subr.mxu0 0.0
      %2410 = vmatpush1.msra.mxu0 0.0
      %2411 = vmatprep.subr.mxu0 0.0
      %2412 = vmatpush1.msra.mxu0 0.0
      %2413 = vmatprep.subr.mxu0 0.0
      %2414 = vmatpush1.msra.mxu0 0.0
      %2415 = vmatprep.subr.mxu0 0.0
      %2416 = vmatpush1.msra.mxu0 0.0
      %2417 = vmatprep.subr.mxu0 0.0
      %2418 = vmatpush1.msra.mxu0 0.0
      %2419 = vmatprep.subr.mxu0 0.0
      %2420 = vmatpush1.msra.mxu0 0.0
      %2421 = vmatprep.subr.mxu0 0.0
      %2422 = vmatpush1.msra.mxu0 0.0
      %2423 = vmatprep.subr.mxu0 0.0
      %2424 = vmatpush1.msra.mxu0 0.0
      %2425 = vmatprep.subr.mxu0 0.0
      %2426 = vmatpush1.msra.mxu0 0.0
      %2427 = vmatprep.subr.mxu0 0.0
      %2428 = vmatpush1.msra.mxu0 0.0
      %2429 = vmatprep.subr.mxu0 0.0
      %2430 = vmatpush1.msra.mxu0 0.0
      %2431 = vmatprep.subr.mxu0 0.0
      %2432 = vmatpush1.msra.mxu0 0.0
      %2433 = vmatprep.subr.mxu0 0.0
      %2434 = vmatpush1.msra.mxu0 0.0
      %2435 = vmatprep.subr.mxu0 0.0
      %2436 = vmatpush1.msra.mxu0 0.0
      %2437 = vmatprep.subr.mxu0 0.0
      %2438 = vmatpush1.msra.mxu0 0.0
      %2439 = vmatprep.subr.mxu0 0.0
      %2440 = vmatpush1.msra.mxu0 0.0
      %2441 = vmatprep.subr.mxu0 0.0
      %2442 = vmatpush1.msra.mxu0 0.0
      %2443 = vmatprep.subr.mxu0 0.0
      %2444 = vmatpush1.msra.mxu0 0.0
      %2445 = vmatprep.subr.mxu0 0.0
      %2446 = vmatpush1.msra.mxu0 0.0
      %2447 = vmatprep.subr.mxu0 0.0
      %2448 = vmatpush1.msra.mxu0 0.0
      %2449 = vmatprep.mubr.f32.mxu0 0.0
      %2450 = vmatmul.mubr.f32.gmra.mrb[0].mxu0 %v2381
      %v2451 = vpop.f32.mrb[0].mxu0
      %v2452 = vadd.f32 0.0, %v2451
      %v2453 = vpop.f32.mrb[0].mxu0
      %2454 = vmatprep.mubr.f32.mxu0 0.0
      %2455 = vmatmul.mubr.f32.gmra.mrb[0].mxu0 %v2383
      %v2456 = vpop.f32.mrb[0].mxu0
      %v2457 = vadd.f32 0.0, %v2456
      %v2458 = vpop.f32.mrb[0].mxu0
      %2459 = vdwg.mxu0
      %2460 = vset.pattern.permute.xlu0 105
      %2461 = vperm.xlu0 %2460, %v252
      %v2462 = vpop.permute.xlu0 %2461
      %2464 = vset.pattern.permute.xlu0 105
      %2465 = vperm.xlu0 %2464, %v255
      %v2466 = vpop.permute.xlu0 %2465
      %v2468 = vadd.f32 %v2462, %v551
      %v2469 = vadd.f32 %v2466, %v551
      %vm2470 = vcmp.gt.f32.partialorder %v2468, 0.0
      %vm2471 = vcmp.gt.f32.partialorder %v2469, 0.0
      %v2472 = vmul.f32 %v2468, 0.2
      %v2473 = vmul.f32 %v2469, 0.2
      %v2474 = vsel %vm2470, %v2468, %v2472
      %v2475 = vsel %vm2471, %v2469, %v2473
      %2478 = vrot.lane.b32.xlu0 %v2474, 64
      %v2479 = vpop.permute.xlu0 %2478
      %2480 = vrot.lane.b32.xlu0 %v2475, 64
      %v2481 = vpop.permute.xlu0 %2480
      %v2484 = vsel %vm2313, %v2479, -1e+30
      %v2485 = vsel %vm2314, %v2481, -1e+30
      %v2486 = vsel %vm419, %v2484, -inf
      %2487 = vmax.xlane.f32.xlu0 %v2486
      %v2488 = vpop.xlane.xlu0 %2487
      %v2489 = vsel %vm419, %v2485, -inf
      %2490 = vmax.xlane.f32.xlu0 %v2489
      %v2491 = vpop.xlane.xlu0 %2490
      %v2492 = vsub.f32 %v2484, %v2488
      %v2493 = vsub.f32 %v2485, %v2491
      %v2494 = vmul.f32 %v2492, 1.442695
      %v2495 = vpow.pop %v2494
      %v2496 = vmul.f32 %v2493, 1.442695
      %v2497 = vpow.pop %v2496
      %v2498 = vsel %vm2313, %v2495, 0.0
      %v2499 = vsel %vm2314, %v2497, 0.0
      %2502 = vrot.lane.b32.xlu0 %v2498, 32
      %v2503 = vpop.permute.xlu0 %2502
      %2504 = vrot.lane.b32.xlu0 %v2499, 32
      %v2505 = vpop.permute.xlu0 %2504
      %v2508 = vsel %vm442, %v2503, 0.0
      %2509 = vadd.xlane.f32.xlu0 %v2508
      %v2510 = vpop.xlane.xlu0 %2509
      %v2511 = vsel %vm442, %v2505, 0.0
      %2512 = vadd.xlane.f32.xlu0 %v2511
      %v2513 = vpop.xlane.xlu0 %2512
      %v2514 = vmax.f32 %v2510, 1e-30
      %v2515 = vmax.f32 %v2513, 1e-30
      %v2516 = vrcp.pop %v2514
      %v2517 = vrcp.pop %v2515
      %v2518 = vmul.f32 %v2498, %v2516
      %v2519 = vmul.f32 %v2499, %v2517
      %2522 = vrot.lane.b32.xlu0 %v2518, 32
      %v2523 = vpop.permute.xlu0 %2522
      %2524 = vrot.lane.b32.xlu0 %v2519, 32
      %v2525 = vpop.permute.xlu0 %2524
      %2526 = vrot.lane.b32.xlu0 %v252, 112
      %v2527 = vpop.permute.xlu0 %2526
      %2528 = vrot.lane.b32.xlu0 %v255, 112
      %v2529 = vpop.permute.xlu0 %2528
      %v2532 = vsel %vm442, %v2523, 0
      %v2534 = vsel %vm442, %v2525, 0
      %2536 = vmatprep.subr.mxu0 0.0
      %2537 = vmatpush1.msra.mxu0 %v2527
      %2538 = vmatprep.subr.mxu0 0.0
      %2539 = vmatpush1.msra.mxu0 %v2529
      %2540 = vmatprep.subr.mxu0 0.0
      %2541 = vmatpush1.msra.mxu0 0.0
      %2542 = vmatprep.subr.mxu0 0.0
      %2543 = vmatpush1.msra.mxu0 0.0
      %2544 = vmatprep.subr.mxu0 0.0
      %2545 = vmatpush1.msra.mxu0 0.0
      %2546 = vmatprep.subr.mxu0 0.0
      %2547 = vmatpush1.msra.mxu0 0.0
      %2548 = vmatprep.subr.mxu0 0.0
      %2549 = vmatpush1.msra.mxu0 0.0
      %2550 = vmatprep.subr.mxu0 0.0
      %2551 = vmatpush1.msra.mxu0 0.0
      %2552 = vmatprep.subr.mxu0 0.0
      %2553 = vmatpush1.msra.mxu0 0.0
      %2554 = vmatprep.subr.mxu0 0.0
      %2555 = vmatpush1.msra.mxu0 0.0
      %2556 = vmatprep.subr.mxu0 0.0
      %2557 = vmatpush1.msra.mxu0 0.0
      %2558 = vmatprep.subr.mxu0 0.0
      %2559 = vmatpush1.msra.mxu0 0.0
      %2560 = vmatprep.subr.mxu0 0.0
      %2561 = vmatpush1.msra.mxu0 0.0
      %2562 = vmatprep.subr.mxu0 0.0
      %2563 = vmatpush1.msra.mxu0 0.0
      %2564 = vmatprep.subr.mxu0 0.0
      %2565 = vmatpush1.msra.mxu0 0.0
      %2566 = vmatprep.subr.mxu0 0.0
      %2567 = vmatpush1.msra.mxu0 0.0
      %2568 = vmatprep.subr.mxu0 0.0
      %2569 = vmatpush1.msra.mxu0 0.0
      %2570 = vmatprep.subr.mxu0 0.0
      %2571 = vmatpush1.msra.mxu0 0.0
      %2572 = vmatprep.subr.mxu0 0.0
      %2573 = vmatpush1.msra.mxu0 0.0
      %2574 = vmatprep.subr.mxu0 0.0
      %2575 = vmatpush1.msra.mxu0 0.0
      %2576 = vmatprep.subr.mxu0 0.0
      %2577 = vmatpush1.msra.mxu0 0.0
      %2578 = vmatprep.subr.mxu0 0.0
      %2579 = vmatpush1.msra.mxu0 0.0
      %2580 = vmatprep.subr.mxu0 0.0
      %2581 = vmatpush1.msra.mxu0 0.0
      %2582 = vmatprep.subr.mxu0 0.0
      %2583 = vmatpush1.msra.mxu0 0.0
      %2584 = vmatprep.subr.mxu0 0.0
      %2585 = vmatpush1.msra.mxu0 0.0
      %2586 = vmatprep.subr.mxu0 0.0
      %2587 = vmatpush1.msra.mxu0 0.0
      %2588 = vmatprep.subr.mxu0 0.0
      %2589 = vmatpush1.msra.mxu0 0.0
      %2590 = vmatprep.subr.mxu0 0.0
      %2591 = vmatpush1.msra.mxu0 0.0
      %2592 = vmatprep.subr.mxu0 0.0
      %2593 = vmatpush1.msra.mxu0 0.0
      %2594 = vmatprep.subr.mxu0 0.0
      %2595 = vmatpush1.msra.mxu0 0.0
      %2596 = vmatprep.subr.mxu0 0.0
      %2597 = vmatpush1.msra.mxu0 0.0
      %2598 = vmatprep.subr.mxu0 0.0
      %2599 = vmatpush1.msra.mxu0 0.0
      %2600 = vmatprep.mubr.f32.mxu0 0.0
      %2601 = vmatmul.mubr.f32.gmra.mrb[0].mxu0 %v2532
      %v2602 = vpop.f32.mrb[0].mxu0
      %v2603 = vadd.f32 0.0, %v2602
      %v2604 = vpop.f32.mrb[0].mxu0
      %2605 = vmatprep.mubr.f32.mxu0 0.0
      %2606 = vmatmul.mubr.f32.gmra.mrb[0].mxu0 %v2534
      %v2607 = vpop.f32.mrb[0].mxu0
      %v2608 = vadd.f32 0.0, %v2607
      %v2609 = vpop.f32.mrb[0].mxu0
      %2610 = vdwg.mxu0
      %2613 = vrot.lane.b32.xlu0 %v2603, 16
      %v2614 = vpop.permute.xlu0 %2613
      %2615 = vrot.lane.b32.xlu0 %v2608, 16
      %v2616 = vpop.permute.xlu0 %2615
      %v2619 = vsel %vm442, %v2452, %v2614
      %v2620 = vsel %vm442, %v2457, %v2616
      %v2621 = vadd.f32 %v2619, %v708
      %v2622 = vadd.f32 %v2620, %v708
      %vm2623 = vcmp.gt.f32.partialorder %v2621, 0.0
      %vm2624 = vcmp.gt.f32.partialorder %v2622, 0.0
      %v2625 = vmin.f32 %v2621, 0.0
      %v2626 = vmin.f32 %v2622, 0.0
      %v2627 = vmul.f32 %v2625, 1.442695
      %v2628 = vpow.pop %v2627
      %v2629 = vmul.f32 %v2626, 1.442695
      %v2630 = vpow.pop %v2629
      %v2631 = vsub.f32 %v2628, 1.0
      %v2632 = vsub.f32 %v2630, 1.0
      %v2633 = vsel %vm2623, %v2621, %v2631
      %v2634 = vsel %vm2624, %v2622, %v2632
      %2635 = vset.pattern.permute.xlu0 106
      %2636 = vperm.xlu0 %2635, %v252
      %v2637 = vpop.permute.xlu0 %2636
      %2639 = vset.pattern.permute.xlu0 106
      %2640 = vperm.xlu0 %2639, %v255
      %v2641 = vpop.permute.xlu0 %2640
      %v2643 = vadd.f32 %v2637, %v734
      %v2644 = vadd.f32 %v2641, %v734
      %vm2645 = vcmp.gt.f32.partialorder %v2643, 0.0
      %vm2646 = vcmp.gt.f32.partialorder %v2644, 0.0
      %v2647 = vmul.f32 %v2643, 0.2
      %v2648 = vmul.f32 %v2644, 0.2
      %v2649 = vsel %vm2645, %v2643, %v2647
      %v2650 = vsel %vm2646, %v2644, %v2648
      %2653 = vrot.lane.b32.xlu0 %v2649, 80
      %v2654 = vpop.permute.xlu0 %2653
      %2655 = vrot.lane.b32.xlu0 %v2650, 80
      %v2656 = vpop.permute.xlu0 %2655
      %v2659 = vsel %vm2313, %v2654, -1e+30
      %v2660 = vsel %vm2314, %v2656, -1e+30
      %v2661 = vsel %vm753, %v2659, -inf
      %2662 = vmax.xlane.f32.xlu0 %v2661
      %v2663 = vpop.xlane.xlu0 %2662
      %v2664 = vsel %vm753, %v2660, -inf
      %2665 = vmax.xlane.f32.xlu0 %v2664
      %v2666 = vpop.xlane.xlu0 %2665
      %v2667 = vsub.f32 %v2659, %v2663
      %v2668 = vsub.f32 %v2660, %v2666
      %v2669 = vmul.f32 %v2667, 1.442695
      %v2670 = vpow.pop %v2669
      %v2671 = vmul.f32 %v2668, 1.442695
      %v2672 = vpow.pop %v2671
      %v2673 = vsel %vm2313, %v2670, 0.0
      %v2674 = vsel %vm2314, %v2672, 0.0
      %2677 = vrot.lane.b32.xlu0 %v2673, 16
      %v2678 = vpop.permute.xlu0 %2677
      %2679 = vrot.lane.b32.xlu0 %v2674, 16
      %v2680 = vpop.permute.xlu0 %2679
      %v2683 = vsel %vm442, %v2678, 0.0
      %2684 = vadd.xlane.f32.xlu0 %v2683
      %v2685 = vpop.xlane.xlu0 %2684
      %v2686 = vsel %vm442, %v2680, 0.0
      %2687 = vadd.xlane.f32.xlu0 %v2686
      %v2688 = vpop.xlane.xlu0 %2687
      %v2689 = vmax.f32 %v2685, 1e-30
      %v2690 = vmax.f32 %v2688, 1e-30
      %v2691 = vrcp.pop %v2689
      %v2692 = vrcp.pop %v2690
      %v2693 = vmul.f32 %v2673, %v2691
      %v2694 = vmul.f32 %v2674, %v2692
      %2697 = vrot.lane.b32.xlu0 %v2693, 16
      %v2698 = vpop.permute.xlu0 %2697
      %2699 = vrot.lane.b32.xlu0 %v2694, 16
      %v2700 = vpop.permute.xlu0 %2699
      %2701 = vrot.lane.b32.xlu0 %v252, 96
      %v2702 = vpop.permute.xlu0 %2701
      %2703 = vrot.lane.b32.xlu0 %v255, 96
      %v2704 = vpop.permute.xlu0 %2703
      %v2707 = vsel %vm442, %v2698, 0
      %v2709 = vsel %vm442, %v2700, 0
      %2711 = vmatprep.subr.mxu0 0.0
      %2712 = vmatpush1.msra.mxu0 %v2702
      %2713 = vmatprep.subr.mxu0 0.0
      %2714 = vmatpush1.msra.mxu0 %v2704
      %2715 = vmatprep.subr.mxu0 0.0
      %2716 = vmatpush1.msra.mxu0 0.0
      %2717 = vmatprep.subr.mxu0 0.0
      %2718 = vmatpush1.msra.mxu0 0.0
      %2719 = vmatprep.subr.mxu0 0.0
      %2720 = vmatpush1.msra.mxu0 0.0
      %2721 = vmatprep.subr.mxu0 0.0
      %2722 = vmatpush1.msra.mxu0 0.0
      %2723 = vmatprep.subr.mxu0 0.0
      %2724 = vmatpush1.msra.mxu0 0.0
      %2725 = vmatprep.subr.mxu0 0.0
      %2726 = vmatpush1.msra.mxu0 0.0
      %2727 = vmatprep.subr.mxu0 0.0
      %2728 = vmatpush1.msra.mxu0 0.0
      %2729 = vmatprep.subr.mxu0 0.0
      %2730 = vmatpush1.msra.mxu0 0.0
      %2731 = vmatprep.subr.mxu0 0.0
      %2732 = vmatpush1.msra.mxu0 0.0
      %2733 = vmatprep.subr.mxu0 0.0
      %2734 = vmatpush1.msra.mxu0 0.0
      %2735 = vmatprep.subr.mxu0 0.0
      %2736 = vmatpush1.msra.mxu0 0.0
      %2737 = vmatprep.subr.mxu0 0.0
      %2738 = vmatpush1.msra.mxu0 0.0
      %2739 = vmatprep.subr.mxu0 0.0
      %2740 = vmatpush1.msra.mxu0 0.0
      %2741 = vmatprep.subr.mxu0 0.0
      %2742 = vmatpush1.msra.mxu0 0.0
      %2743 = vmatprep.subr.mxu0 0.0
      %2744 = vmatpush1.msra.mxu0 0.0
      %2745 = vmatprep.subr.mxu0 0.0
      %2746 = vmatpush1.msra.mxu0 0.0
      %2747 = vmatprep.subr.mxu0 0.0
      %2748 = vmatpush1.msra.mxu0 0.0
      %2749 = vmatprep.subr.mxu0 0.0
      %2750 = vmatpush1.msra.mxu0 0.0
      %2751 = vmatprep.subr.mxu0 0.0
      %2752 = vmatpush1.msra.mxu0 0.0
      %2753 = vmatprep.subr.mxu0 0.0
      %2754 = vmatpush1.msra.mxu0 0.0
      %2755 = vmatprep.subr.mxu0 0.0
      %2756 = vmatpush1.msra.mxu0 0.0
      %2757 = vmatprep.subr.mxu0 0.0
      %2758 = vmatpush1.msra.mxu0 0.0
      %2759 = vmatprep.subr.mxu0 0.0
      %2760 = vmatpush1.msra.mxu0 0.0
      %2761 = vmatprep.subr.mxu0 0.0
      %2762 = vmatpush1.msra.mxu0 0.0
      %2763 = vmatprep.subr.mxu0 0.0
      %2764 = vmatpush1.msra.mxu0 0.0
      %2765 = vmatprep.subr.mxu0 0.0
      %2766 = vmatpush1.msra.mxu0 0.0
      %2767 = vmatprep.subr.mxu0 0.0
      %2768 = vmatpush1.msra.mxu0 0.0
      %2769 = vmatprep.subr.mxu0 0.0
      %2770 = vmatpush1.msra.mxu0 0.0
      %2771 = vmatprep.subr.mxu0 0.0
      %2772 = vmatpush1.msra.mxu0 0.0
      %2773 = vmatprep.subr.mxu0 0.0
      %2774 = vmatpush1.msra.mxu0 0.0
      %2775 = vmatprep.mubr.f32.mxu0 0.0
      %2776 = vmatmul.mubr.f32.gmra.mrb[0].mxu0 %v2707
      %v2777 = vpop.f32.mrb[0].mxu0
      %v2778 = vadd.f32 0.0, %v2777
      %v2779 = vpop.f32.mrb[0].mxu0
      %2780 = vmatprep.mubr.f32.mxu0 0.0
      %2781 = vmatmul.mubr.f32.gmra.mrb[0].mxu0 %v2709
      %v2782 = vpop.f32.mrb[0].mxu0
      %v2783 = vadd.f32 0.0, %v2782
      %v2784 = vpop.f32.mrb[0].mxu0
      %2785 = vdwg.mxu0
      %2786 = vset.pattern.permute.xlu0 107
      %2787 = vperm.xlu0 %2786, %v252
      %v2788 = vpop.permute.xlu0 %2787
      %2790 = vset.pattern.permute.xlu0 107
      %2791 = vperm.xlu0 %2790, %v255
      %v2792 = vpop.permute.xlu0 %2791
      %v2794 = vadd.f32 %v2788, %v890
      %v2795 = vadd.f32 %v2792, %v890
      %vm2796 = vcmp.gt.f32.partialorder %v2794, 0.0
      %vm2797 = vcmp.gt.f32.partialorder %v2795, 0.0
      %v2798 = vmul.f32 %v2794, 0.2
      %v2799 = vmul.f32 %v2795, 0.2
      %v2800 = vsel %vm2796, %v2794, %v2798
      %v2801 = vsel %vm2797, %v2795, %v2799
      %2804 = vrot.lane.b32.xlu0 %v2800, 80
      %v2805 = vpop.permute.xlu0 %2804
      %2806 = vrot.lane.b32.xlu0 %v2801, 80
      %v2807 = vpop.permute.xlu0 %2806
      %v2810 = vsel %vm2313, %v2805, -1e+30
      %v2811 = vsel %vm2314, %v2807, -1e+30
      %v2812 = vsel %vm753, %v2810, -inf
      %2813 = vmax.xlane.f32.xlu0 %v2812
      %v2814 = vpop.xlane.xlu0 %2813
      %v2815 = vsel %vm753, %v2811, -inf
      %2816 = vmax.xlane.f32.xlu0 %v2815
      %v2817 = vpop.xlane.xlu0 %2816
      %v2818 = vsub.f32 %v2810, %v2814
      %v2819 = vsub.f32 %v2811, %v2817
      %v2820 = vmul.f32 %v2818, 1.442695
      %v2821 = vpow.pop %v2820
      %v2822 = vmul.f32 %v2819, 1.442695
      %v2823 = vpow.pop %v2822
      %v2824 = vsel %vm2313, %v2821, 0.0
      %v2825 = vsel %vm2314, %v2823, 0.0
      %2828 = vrot.lane.b32.xlu0 %v2824, 16
      %v2829 = vpop.permute.xlu0 %2828
      %2830 = vrot.lane.b32.xlu0 %v2825, 16
      %v2831 = vpop.permute.xlu0 %2830
      %v2834 = vsel %vm442, %v2829, 0.0
      %2835 = vadd.xlane.f32.xlu0 %v2834
      %v2836 = vpop.xlane.xlu0 %2835
      %v2837 = vsel %vm442, %v2831, 0.0
      %2838 = vadd.xlane.f32.xlu0 %v2837
      %v2839 = vpop.xlane.xlu0 %2838
      %v2840 = vmax.f32 %v2836, 1e-30
      %v2841 = vmax.f32 %v2839, 1e-30
      %v2842 = vrcp.pop %v2840
      %v2843 = vrcp.pop %v2841
      %v2844 = vmul.f32 %v2824, %v2842
      %v2845 = vmul.f32 %v2825, %v2843
      %2848 = vrot.lane.b32.xlu0 %v2844, 16
      %v2849 = vpop.permute.xlu0 %2848
      %2850 = vrot.lane.b32.xlu0 %v2845, 16
      %v2851 = vpop.permute.xlu0 %2850
      %2852 = vrot.lane.b32.xlu0 %v252, 80
      %v2853 = vpop.permute.xlu0 %2852
      %2854 = vrot.lane.b32.xlu0 %v255, 80
      %v2855 = vpop.permute.xlu0 %2854
      %v2858 = vsel %vm442, %v2849, 0
      %v2860 = vsel %vm442, %v2851, 0
      %2862 = vmatprep.subr.mxu0 0.0
      %2863 = vmatpush1.msra.mxu0 %v2853
      %2864 = vmatprep.subr.mxu0 0.0
      %2865 = vmatpush1.msra.mxu0 %v2855
      %2866 = vmatprep.subr.mxu0 0.0
      %2867 = vmatpush1.msra.mxu0 0.0
      %2868 = vmatprep.subr.mxu0 0.0
      %2869 = vmatpush1.msra.mxu0 0.0
      %2870 = vmatprep.subr.mxu0 0.0
      %2871 = vmatpush1.msra.mxu0 0.0
      %2872 = vmatprep.subr.mxu0 0.0
      %2873 = vmatpush1.msra.mxu0 0.0
      %2874 = vmatprep.subr.mxu0 0.0
      %2875 = vmatpush1.msra.mxu0 0.0
      %2876 = vmatprep.subr.mxu0 0.0
      %2877 = vmatpush1.msra.mxu0 0.0
      %2878 = vmatprep.subr.mxu0 0.0
      %2879 = vmatpush1.msra.mxu0 0.0
      %2880 = vmatprep.subr.mxu0 0.0
      %2881 = vmatpush1.msra.mxu0 0.0
      %2882 = vmatprep.subr.mxu0 0.0
      %2883 = vmatpush1.msra.mxu0 0.0
      %2884 = vmatprep.subr.mxu0 0.0
      %2885 = vmatpush1.msra.mxu0 0.0
      %2886 = vmatprep.subr.mxu0 0.0
      %2887 = vmatpush1.msra.mxu0 0.0
      %2888 = vmatprep.subr.mxu0 0.0
      %2889 = vmatpush1.msra.mxu0 0.0
      %2890 = vmatprep.subr.mxu0 0.0
      %2891 = vmatpush1.msra.mxu0 0.0
      %2892 = vmatprep.subr.mxu0 0.0
      %2893 = vmatpush1.msra.mxu0 0.0
      %2894 = vmatprep.subr.mxu0 0.0
      %2895 = vmatpush1.msra.mxu0 0.0
      %2896 = vmatprep.subr.mxu0 0.0
      %2897 = vmatpush1.msra.mxu0 0.0
      %2898 = vmatprep.subr.mxu0 0.0
      %2899 = vmatpush1.msra.mxu0 0.0
      %2900 = vmatprep.subr.mxu0 0.0
      %2901 = vmatpush1.msra.mxu0 0.0
      %2902 = vmatprep.subr.mxu0 0.0
      %2903 = vmatpush1.msra.mxu0 0.0
      %2904 = vmatprep.subr.mxu0 0.0
      %2905 = vmatpush1.msra.mxu0 0.0
      %2906 = vmatprep.subr.mxu0 0.0
      %2907 = vmatpush1.msra.mxu0 0.0
      %2908 = vmatprep.subr.mxu0 0.0
      %2909 = vmatpush1.msra.mxu0 0.0
      %2910 = vmatprep.subr.mxu0 0.0
      %2911 = vmatpush1.msra.mxu0 0.0
      %2912 = vmatprep.subr.mxu0 0.0
      %2913 = vmatpush1.msra.mxu0 0.0
      %2914 = vmatprep.subr.mxu0 0.0
      %2915 = vmatpush1.msra.mxu0 0.0
      %2916 = vmatprep.subr.mxu0 0.0
      %2917 = vmatpush1.msra.mxu0 0.0
      %2918 = vmatprep.subr.mxu0 0.0
      %2919 = vmatpush1.msra.mxu0 0.0
      %2920 = vmatprep.subr.mxu0 0.0
      %2921 = vmatpush1.msra.mxu0 0.0
      %2922 = vmatprep.subr.mxu0 0.0
      %2923 = vmatpush1.msra.mxu0 0.0
      %2924 = vmatprep.subr.mxu0 0.0
      %2925 = vmatpush1.msra.mxu0 0.0
      %2926 = vmatprep.mubr.f32.mxu0 0.0
      %2927 = vmatmul.mubr.f32.gmra.mrb[0].mxu0 %v2858
      %v2928 = vpop.f32.mrb[0].mxu0
      %v2929 = vadd.f32 0.0, %v2928
      %v2930 = vpop.f32.mrb[0].mxu0
      %2931 = vmatprep.mubr.f32.mxu0 0.0
      %2932 = vmatmul.mubr.f32.gmra.mrb[0].mxu0 %v2860
      %v2933 = vpop.f32.mrb[0].mxu0
      %v2934 = vadd.f32 0.0, %v2933
      %v2935 = vpop.f32.mrb[0].mxu0
      %2936 = vdwg.mxu0
      %2939 = vrot.lane.b32.xlu0 %v2929, 16
      %v2940 = vpop.permute.xlu0 %2939
      %2941 = vrot.lane.b32.xlu0 %v2934, 16
      %v2942 = vpop.permute.xlu0 %2941
      %v2945 = vsel %vm442, %v2778, %v2940
      %v2946 = vsel %vm442, %v2783, %v2942
      %v2947 = vadd.f32 %v2945, %v1046
      %v2948 = vadd.f32 %v2946, %v1046
      %vm2949 = vcmp.gt.f32.partialorder %v2947, 0.0
      %vm2950 = vcmp.gt.f32.partialorder %v2948, 0.0
      %v2951 = vmin.f32 %v2947, 0.0
      %v2952 = vmin.f32 %v2948, 0.0
      %v2953 = vmul.f32 %v2951, 1.442695
      %v2954 = vpow.pop %v2953
      %v2955 = vmul.f32 %v2952, 1.442695
      %v2956 = vpow.pop %v2955
      %v2957 = vsub.f32 %v2954, 1.0
      %v2958 = vsub.f32 %v2956, 1.0
      %v2959 = vsel %vm2949, %v2947, %v2957
      %v2960 = vsel %vm2950, %v2948, %v2958
      %vm2961 = vcmp.gt.f32.partialorder %v171, 0.0
      %vm2962 = vcmp.gt.f32.partialorder %v173, 0.0
      %2963 = vset.pattern.permute.xlu0 108
      %2964 = vperm.xlu0 %2963, %v252
      %v2965 = vpop.permute.xlu0 %2964
      %2967 = vset.pattern.permute.xlu0 108
      %2968 = vperm.xlu0 %2967, %v255
      %v2969 = vpop.permute.xlu0 %2968
      %v2971 = vadd.f32 %v2965, %v1075
      %v2972 = vadd.f32 %v2969, %v1075
      %vm2973 = vcmp.gt.f32.partialorder %v2971, 0.0
      %vm2974 = vcmp.gt.f32.partialorder %v2972, 0.0
      %v2975 = vmul.f32 %v2971, 0.2
      %v2976 = vmul.f32 %v2972, 0.2
      %v2977 = vsel %vm2973, %v2971, %v2975
      %v2978 = vsel %vm2974, %v2972, %v2976
      %2981 = vrot.lane.b32.xlu0 %v2977, 96
      %v2982 = vpop.permute.xlu0 %2981
      %2983 = vrot.lane.b32.xlu0 %v2978, 96
      %v2984 = vpop.permute.xlu0 %2983
      %v2987 = vsel %vm2961, %v2982, -1e+30
      %v2988 = vsel %vm2962, %v2984, -1e+30
      %v2989 = vsel %vm442, %v2987, -inf
      %2990 = vmax.xlane.f32.xlu0 %v2989
      %v2991 = vpop.xlane.xlu0 %2990
      %v2992 = vsel %vm442, %v2988, -inf
      %2993 = vmax.xlane.f32.xlu0 %v2992
      %v2994 = vpop.xlane.xlu0 %2993
      %v2995 = vsub.f32 %v2987, %v2991
      %v2996 = vsub.f32 %v2988, %v2994
      %v2997 = vmul.f32 %v2995, 1.442695
      %v2998 = vpow.pop %v2997
      %v2999 = vmul.f32 %v2996, 1.442695
      %v3000 = vpow.pop %v2999
      %v3001 = vsel %vm2961, %v2998, 0.0
      %v3002 = vsel %vm2962, %v3000, 0.0
      %v3003 = vsel %vm442, %v3001, 0.0
      %3004 = vadd.xlane.f32.xlu0 %v3003
      %v3005 = vpop.xlane.xlu0 %3004
      %v3006 = vsel %vm442, %v3002, 0.0
      %3007 = vadd.xlane.f32.xlu0 %v3006
      %v3008 = vpop.xlane.xlu0 %3007
      %v3009 = vmax.f32 %v3005, 1e-30
      %v3010 = vmax.f32 %v3008, 1e-30
      %v3011 = vrcp.pop %v3009
      %v3012 = vrcp.pop %v3010
      %v3013 = vmul.f32 %v3001, %v3011
      %v3014 = vmul.f32 %v3002, %v3012
      %3015 = vrot.lane.b32.xlu0 %v252, 64
      %v3016 = vpop.permute.xlu0 %3015
      %3017 = vrot.lane.b32.xlu0 %v255, 64
      %v3018 = vpop.permute.xlu0 %3017
      %v3022 = vsel %vm442, %v3013, 0
      %v3025 = vsel %vm442, %v3014, 0
      %3027 = vmatprep.subr.mxu0 0.0
      %3028 = vmatpush1.msra.mxu0 %v3016
      %3029 = vmatprep.subr.mxu0 0.0
      %3030 = vmatpush1.msra.mxu0 %v3018
      %3031 = vmatprep.subr.mxu0 0.0
      %3032 = vmatpush1.msra.mxu0 0.0
      %3033 = vmatprep.subr.mxu0 0.0
      %3034 = vmatpush1.msra.mxu0 0.0
      %3035 = vmatprep.subr.mxu0 0.0
      %3036 = vmatpush1.msra.mxu0 0.0
      %3037 = vmatprep.subr.mxu0 0.0
      %3038 = vmatpush1.msra.mxu0 0.0
      %3039 = vmatprep.subr.mxu0 0.0
      %3040 = vmatpush1.msra.mxu0 0.0
      %3041 = vmatprep.subr.mxu0 0.0
      %3042 = vmatpush1.msra.mxu0 0.0
      %3043 = vmatprep.subr.mxu0 0.0
      %3044 = vmatpush1.msra.mxu0 0.0
      %3045 = vmatprep.subr.mxu0 0.0
      %3046 = vmatpush1.msra.mxu0 0.0
      %3047 = vmatprep.subr.mxu0 0.0
      %3048 = vmatpush1.msra.mxu0 0.0
      %3049 = vmatprep.subr.mxu0 0.0
      %3050 = vmatpush1.msra.mxu0 0.0
      %3051 = vmatprep.subr.mxu0 0.0
      %3052 = vmatpush1.msra.mxu0 0.0
      %3053 = vmatprep.subr.mxu0 0.0
      %3054 = vmatpush1.msra.mxu0 0.0
      %3055 = vmatprep.subr.mxu0 0.0
      %3056 = vmatpush1.msra.mxu0 0.0
      %3057 = vmatprep.subr.mxu0 0.0
      %3058 = vmatpush1.msra.mxu0 0.0
      %3059 = vmatprep.subr.mxu0 0.0
      %3060 = vmatpush1.msra.mxu0 0.0
      %3061 = vmatprep.subr.mxu0 0.0
      %3062 = vmatpush1.msra.mxu0 0.0
      %3063 = vmatprep.subr.mxu0 0.0
      %3064 = vmatpush1.msra.mxu0 0.0
      %3065 = vmatprep.subr.mxu0 0.0
      %3066 = vmatpush1.msra.mxu0 0.0
      %3067 = vmatprep.subr.mxu0 0.0
      %3068 = vmatpush1.msra.mxu0 0.0
      %3069 = vmatprep.subr.mxu0 0.0
      %3070 = vmatpush1.msra.mxu0 0.0
      %3071 = vmatprep.subr.mxu0 0.0
      %3072 = vmatpush1.msra.mxu0 0.0
      %3073 = vmatprep.subr.mxu0 0.0
      %3074 = vmatpush1.msra.mxu0 0.0
      %3075 = vmatprep.subr.mxu0 0.0
      %3076 = vmatpush1.msra.mxu0 0.0
      %3077 = vmatprep.subr.mxu0 0.0
      %3078 = vmatpush1.msra.mxu0 0.0
      %3079 = vmatprep.subr.mxu0 0.0
      %3080 = vmatpush1.msra.mxu0 0.0
      %3081 = vmatprep.subr.mxu0 0.0
      %3082 = vmatpush1.msra.mxu0 0.0
      %3083 = vmatprep.subr.mxu0 0.0
      %3084 = vmatpush1.msra.mxu0 0.0
      %3085 = vmatprep.subr.mxu0 0.0
      %3086 = vmatpush1.msra.mxu0 0.0
      %3087 = vmatprep.subr.mxu0 0.0
      %3088 = vmatpush1.msra.mxu0 0.0
      %3089 = vmatprep.subr.mxu0 0.0
      %3090 = vmatpush1.msra.mxu0 0.0
      %3091 = vmatprep.mubr.f32.mxu0 0.0
      %3092 = vmatmul.mubr.f32.gmra.mrb[0].mxu0 %v3022
      %v3093 = vpop.f32.mrb[0].mxu0
      %v3094 = vadd.f32 0.0, %v3093
      %v3095 = vpop.f32.mrb[0].mxu0
      %3096 = vmatprep.mubr.f32.mxu0 0.0
      %3097 = vmatmul.mubr.f32.gmra.mrb[0].mxu0 %v3025
      %v3098 = vpop.f32.mrb[0].mxu0
      %v3099 = vadd.f32 0.0, %v3098
      %v3100 = vpop.f32.mrb[0].mxu0
      %3101 = vdwg.mxu0
      %3102 = vset.pattern.permute.xlu0 109
      %3103 = vperm.xlu0 %3102, %v252
      %v3104 = vpop.permute.xlu0 %3103
      %3106 = vset.pattern.permute.xlu0 109
      %3107 = vperm.xlu0 %3106, %v255
      %v3108 = vpop.permute.xlu0 %3107
      %v3110 = vadd.f32 %v3104, %v1210
      %v3111 = vadd.f32 %v3108, %v1210
      %vm3112 = vcmp.gt.f32.partialorder %v3110, 0.0
      %vm3113 = vcmp.gt.f32.partialorder %v3111, 0.0
      %v3114 = vmul.f32 %v3110, 0.2
      %v3115 = vmul.f32 %v3111, 0.2
      %v3116 = vsel %vm3112, %v3110, %v3114
      %v3117 = vsel %vm3113, %v3111, %v3115
      %3120 = vrot.lane.b32.xlu0 %v3116, 96
      %v3121 = vpop.permute.xlu0 %3120
      %3122 = vrot.lane.b32.xlu0 %v3117, 96
      %v3123 = vpop.permute.xlu0 %3122
      %v3126 = vsel %vm2961, %v3121, -1e+30
      %v3127 = vsel %vm2962, %v3123, -1e+30
      %v3128 = vsel %vm442, %v3126, -inf
      %3129 = vmax.xlane.f32.xlu0 %v3128
      %v3130 = vpop.xlane.xlu0 %3129
      %v3131 = vsel %vm442, %v3127, -inf
      %3132 = vmax.xlane.f32.xlu0 %v3131
      %v3133 = vpop.xlane.xlu0 %3132
      %v3134 = vsub.f32 %v3126, %v3130
      %v3135 = vsub.f32 %v3127, %v3133
      %v3136 = vmul.f32 %v3134, 1.442695
      %v3137 = vpow.pop %v3136
      %v3138 = vmul.f32 %v3135, 1.442695
      %v3139 = vpow.pop %v3138
      %v3140 = vsel %vm2961, %v3137, 0.0
      %v3141 = vsel %vm2962, %v3139, 0.0
      %v3142 = vsel %vm442, %v3140, 0.0
      %3143 = vadd.xlane.f32.xlu0 %v3142
      %v3144 = vpop.xlane.xlu0 %3143
      %v3145 = vsel %vm442, %v3141, 0.0
      %3146 = vadd.xlane.f32.xlu0 %v3145
      %v3147 = vpop.xlane.xlu0 %3146
      %v3148 = vmax.f32 %v3144, 1e-30
      %v3149 = vmax.f32 %v3147, 1e-30
      %v3150 = vrcp.pop %v3148
      %v3151 = vrcp.pop %v3149
      %v3152 = vmul.f32 %v3140, %v3150
      %v3153 = vmul.f32 %v3141, %v3151
      %3154 = vrot.lane.b32.xlu0 %v252, 48
      %v3155 = vpop.permute.xlu0 %3154
      %3156 = vrot.lane.b32.xlu0 %v255, 48
      %v3157 = vpop.permute.xlu0 %3156
      %v3161 = vsel %vm442, %v3152, 0
      %v3164 = vsel %vm442, %v3153, 0
      %3166 = vmatprep.subr.mxu0 0.0
      %3167 = vmatpush1.msra.mxu0 %v3155
      %3168 = vmatprep.subr.mxu0 0.0
      %3169 = vmatpush1.msra.mxu0 %v3157
      %3170 = vmatprep.subr.mxu0 0.0
      %3171 = vmatpush1.msra.mxu0 0.0
      %3172 = vmatprep.subr.mxu0 0.0
      %3173 = vmatpush1.msra.mxu0 0.0
      %3174 = vmatprep.subr.mxu0 0.0
      %3175 = vmatpush1.msra.mxu0 0.0
      %3176 = vmatprep.subr.mxu0 0.0
      %3177 = vmatpush1.msra.mxu0 0.0
      %3178 = vmatprep.subr.mxu0 0.0
      %3179 = vmatpush1.msra.mxu0 0.0
      %3180 = vmatprep.subr.mxu0 0.0
      %3181 = vmatpush1.msra.mxu0 0.0
      %3182 = vmatprep.subr.mxu0 0.0
      %3183 = vmatpush1.msra.mxu0 0.0
      %3184 = vmatprep.subr.mxu0 0.0
      %3185 = vmatpush1.msra.mxu0 0.0
      %3186 = vmatprep.subr.mxu0 0.0
      %3187 = vmatpush1.msra.mxu0 0.0
      %3188 = vmatprep.subr.mxu0 0.0
      %3189 = vmatpush1.msra.mxu0 0.0
      %3190 = vmatprep.subr.mxu0 0.0
      %3191 = vmatpush1.msra.mxu0 0.0
      %3192 = vmatprep.subr.mxu0 0.0
      %3193 = vmatpush1.msra.mxu0 0.0
      %3194 = vmatprep.subr.mxu0 0.0
      %3195 = vmatpush1.msra.mxu0 0.0
      %3196 = vmatprep.subr.mxu0 0.0
      %3197 = vmatpush1.msra.mxu0 0.0
      %3198 = vmatprep.subr.mxu0 0.0
      %3199 = vmatpush1.msra.mxu0 0.0
      %3200 = vmatprep.subr.mxu0 0.0
      %3201 = vmatpush1.msra.mxu0 0.0
      %3202 = vmatprep.subr.mxu0 0.0
      %3203 = vmatpush1.msra.mxu0 0.0
      %3204 = vmatprep.subr.mxu0 0.0
      %3205 = vmatpush1.msra.mxu0 0.0
      %3206 = vmatprep.subr.mxu0 0.0
      %3207 = vmatpush1.msra.mxu0 0.0
      %3208 = vmatprep.subr.mxu0 0.0
      %3209 = vmatpush1.msra.mxu0 0.0
      %3210 = vmatprep.subr.mxu0 0.0
      %3211 = vmatpush1.msra.mxu0 0.0
      %3212 = vmatprep.subr.mxu0 0.0
      %3213 = vmatpush1.msra.mxu0 0.0
      %3214 = vmatprep.subr.mxu0 0.0
      %3215 = vmatpush1.msra.mxu0 0.0
      %3216 = vmatprep.subr.mxu0 0.0
      %3217 = vmatpush1.msra.mxu0 0.0
      %3218 = vmatprep.subr.mxu0 0.0
      %3219 = vmatpush1.msra.mxu0 0.0
      %3220 = vmatprep.subr.mxu0 0.0
      %3221 = vmatpush1.msra.mxu0 0.0
      %3222 = vmatprep.subr.mxu0 0.0
      %3223 = vmatpush1.msra.mxu0 0.0
      %3224 = vmatprep.subr.mxu0 0.0
      %3225 = vmatpush1.msra.mxu0 0.0
      %3226 = vmatprep.subr.mxu0 0.0
      %3227 = vmatpush1.msra.mxu0 0.0
      %3228 = vmatprep.subr.mxu0 0.0
      %3229 = vmatpush1.msra.mxu0 0.0
      %3230 = vmatprep.mubr.f32.mxu0 0.0
      %3231 = vmatmul.mubr.f32.gmra.mrb[0].mxu0 %v3161
      %v3232 = vpop.f32.mrb[0].mxu0
      %v3233 = vadd.f32 0.0, %v3232
      %v3234 = vpop.f32.mrb[0].mxu0
      %3235 = vmatprep.mubr.f32.mxu0 0.0
      %3236 = vmatmul.mubr.f32.gmra.mrb[0].mxu0 %v3164
      %v3237 = vpop.f32.mrb[0].mxu0
      %v3238 = vadd.f32 0.0, %v3237
      %v3239 = vpop.f32.mrb[0].mxu0
      %3240 = vdwg.mxu0
      %3243 = vrot.lane.b32.xlu0 %v3233, 16
      %v3244 = vpop.permute.xlu0 %3243
      %3245 = vrot.lane.b32.xlu0 %v3238, 16
      %v3246 = vpop.permute.xlu0 %3245
      %v3249 = vsel %vm442, %v3094, %v3244
      %v3250 = vsel %vm442, %v3099, %v3246
      %v3251 = vadd.f32 %v3249, %v1345
      %v3252 = vadd.f32 %v3250, %v1345
      %vm3253 = vcmp.gt.f32.partialorder %v3251, 0.0
      %vm3254 = vcmp.gt.f32.partialorder %v3252, 0.0
      %v3255 = vmin.f32 %v3251, 0.0
      %v3256 = vmin.f32 %v3252, 0.0
      %v3257 = vmul.f32 %v3255, 1.442695
      %v3258 = vpow.pop %v3257
      %v3259 = vmul.f32 %v3256, 1.442695
      %v3260 = vpow.pop %v3259
      %v3261 = vsub.f32 %v3258, 1.0
      %v3262 = vsub.f32 %v3260, 1.0
      %v3263 = vsel %vm3253, %v3251, %v3261
      %v3264 = vsel %vm3254, %v3252, %v3262
      %vm3265 = vcmp.gt.f32.partialorder %v174, 0.0
      %vm3266 = vcmp.gt.f32.partialorder %v176, 0.0
      %3267 = vset.pattern.permute.xlu0 104
      %3268 = vperm.xlu0 %3267, %v260
      %v3269 = vpop.permute.xlu0 %3268
      %3271 = vset.pattern.permute.xlu0 104
      %3272 = vperm.xlu0 %3271, %v263
      %v3273 = vpop.permute.xlu0 %3272
      %v3275 = vadd.f32 %v3269, %v400
      %v3276 = vadd.f32 %v3273, %v400
      %vm3277 = vcmp.gt.f32.partialorder %v3275, 0.0
      %vm3278 = vcmp.gt.f32.partialorder %v3276, 0.0
      %v3279 = vmul.f32 %v3275, 0.2
      %v3280 = vmul.f32 %v3276, 0.2
      %v3281 = vsel %vm3277, %v3275, %v3279
      %v3282 = vsel %vm3278, %v3276, %v3280
      %3285 = vrot.lane.b32.xlu0 %v3281, 48
      %v3286 = vpop.permute.xlu0 %3285
      %3287 = vrot.lane.b32.xlu0 %v3282, 48
      %v3288 = vpop.permute.xlu0 %3287
      %v3291 = vsel %vm3265, %v3286, -1e+30
      %v3292 = vsel %vm3266, %v3288, -1e+30
      %v3293 = vsel %vm419, %v3291, -inf
      %3294 = vmax.xlane.f32.xlu0 %v3293
      %v3295 = vpop.xlane.xlu0 %3294
      %v3296 = vsel %vm419, %v3292, -inf
      %3297 = vmax.xlane.f32.xlu0 %v3296
      %v3298 = vpop.xlane.xlu0 %3297
      %v3299 = vsub.f32 %v3291, %v3295
      %v3300 = vsub.f32 %v3292, %v3298
      %v3301 = vmul.f32 %v3299, 1.442695
      %v3302 = vpow.pop %v3301
      %v3303 = vmul.f32 %v3300, 1.442695
      %v3304 = vpow.pop %v3303
      %v3305 = vsel %vm3265, %v3302, 0.0
      %v3306 = vsel %vm3266, %v3304, 0.0
      %3309 = vrot.lane.b32.xlu0 %v3305, 32
      %v3310 = vpop.permute.xlu0 %3309
      %3311 = vrot.lane.b32.xlu0 %v3306, 32
      %v3312 = vpop.permute.xlu0 %3311
      %v3315 = vsel %vm442, %v3310, 0.0
      %3316 = vadd.xlane.f32.xlu0 %v3315
      %v3317 = vpop.xlane.xlu0 %3316
      %v3318 = vsel %vm442, %v3312, 0.0
      %3319 = vadd.xlane.f32.xlu0 %v3318
      %v3320 = vpop.xlane.xlu0 %3319
      %v3321 = vmax.f32 %v3317, 1e-30
      %v3322 = vmax.f32 %v3320, 1e-30
      %v3323 = vrcp.pop %v3321
      %v3324 = vrcp.pop %v3322
      %v3325 = vmul.f32 %v3305, %v3323
      %v3326 = vmul.f32 %v3306, %v3324
      %3329 = vrot.lane.b32.xlu0 %v3325, 32
      %v3330 = vpop.permute.xlu0 %3329
      %3331 = vrot.lane.b32.xlu0 %v3326, 32
      %v3332 = vpop.permute.xlu0 %3331
      %v3333 = vsel %vm442, %v3330, 0
      %v3335 = vsel %vm442, %v3332, 0
      %3337 = vmatprep.subr.mxu0 0.0
      %3338 = vmatpush1.msra.mxu0 %v260
      %3339 = vmatprep.subr.mxu0 0.0
      %3340 = vmatpush1.msra.mxu0 %v263
      %3341 = vmatprep.subr.mxu0 0.0
      %3342 = vmatpush1.msra.mxu0 0.0
      %3343 = vmatprep.subr.mxu0 0.0
      %3344 = vmatpush1.msra.mxu0 0.0
      %3345 = vmatprep.subr.mxu0 0.0
      %3346 = vmatpush1.msra.mxu0 0.0
      %3347 = vmatprep.subr.mxu0 0.0
      %3348 = vmatpush1.msra.mxu0 0.0
      %3349 = vmatprep.subr.mxu0 0.0
      %3350 = vmatpush1.msra.mxu0 0.0
      %3351 = vmatprep.subr.mxu0 0.0
      %3352 = vmatpush1.msra.mxu0 0.0
      %3353 = vmatprep.subr.mxu0 0.0
      %3354 = vmatpush1.msra.mxu0 0.0
      %3355 = vmatprep.subr.mxu0 0.0
      %3356 = vmatpush1.msra.mxu0 0.0
      %3357 = vmatprep.subr.mxu0 0.0
      %3358 = vmatpush1.msra.mxu0 0.0
      %3359 = vmatprep.subr.mxu0 0.0
      %3360 = vmatpush1.msra.mxu0 0.0
      %3361 = vmatprep.subr.mxu0 0.0
      %3362 = vmatpush1.msra.mxu0 0.0
      %3363 = vmatprep.subr.mxu0 0.0
      %3364 = vmatpush1.msra.mxu0 0.0
      %3365 = vmatprep.subr.mxu0 0.0
      %3366 = vmatpush1.msra.mxu0 0.0
      %3367 = vmatprep.subr.mxu0 0.0
      %3368 = vmatpush1.msra.mxu0 0.0
      %3369 = vmatprep.subr.mxu0 0.0
      %3370 = vmatpush1.msra.mxu0 0.0
      %3371 = vmatprep.subr.mxu0 0.0
      %3372 = vmatpush1.msra.mxu0 0.0
      %3373 = vmatprep.subr.mxu0 0.0
      %3374 = vmatpush1.msra.mxu0 0.0
      %3375 = vmatprep.subr.mxu0 0.0
      %3376 = vmatpush1.msra.mxu0 0.0
      %3377 = vmatprep.subr.mxu0 0.0
      %3378 = vmatpush1.msra.mxu0 0.0
      %3379 = vmatprep.subr.mxu0 0.0
      %3380 = vmatpush1.msra.mxu0 0.0
      %3381 = vmatprep.subr.mxu0 0.0
      %3382 = vmatpush1.msra.mxu0 0.0
      %3383 = vmatprep.subr.mxu0 0.0
      %3384 = vmatpush1.msra.mxu0 0.0
      %3385 = vmatprep.subr.mxu0 0.0
      %3386 = vmatpush1.msra.mxu0 0.0
      %3387 = vmatprep.subr.mxu0 0.0
      %3388 = vmatpush1.msra.mxu0 0.0
      %3389 = vmatprep.subr.mxu0 0.0
      %3390 = vmatpush1.msra.mxu0 0.0
      %3391 = vmatprep.subr.mxu0 0.0
      %3392 = vmatpush1.msra.mxu0 0.0
      %3393 = vmatprep.subr.mxu0 0.0
      %3394 = vmatpush1.msra.mxu0 0.0
      %3395 = vmatprep.subr.mxu0 0.0
      %3396 = vmatpush1.msra.mxu0 0.0
      %3397 = vmatprep.subr.mxu0 0.0
      %3398 = vmatpush1.msra.mxu0 0.0
      %3399 = vmatprep.subr.mxu0 0.0
      %3400 = vmatpush1.msra.mxu0 0.0
      %3401 = vmatprep.mubr.f32.mxu0 0.0
      %3402 = vmatmul.mubr.f32.gmra.mrb[0].mxu0 %v3333
      %v3403 = vpop.f32.mrb[0].mxu0
      %v3404 = vadd.f32 0.0, %v3403
      %v3405 = vpop.f32.mrb[0].mxu0
      %3406 = vmatprep.mubr.f32.mxu0 0.0
      %3407 = vmatmul.mubr.f32.gmra.mrb[0].mxu0 %v3335
      %v3408 = vpop.f32.mrb[0].mxu0
      %v3409 = vadd.f32 0.0, %v3408
      %v3410 = vpop.f32.mrb[0].mxu0
      %3411 = vdwg.mxu0
      %3412 = vset.pattern.permute.xlu0 105
      %3413 = vperm.xlu0 %3412, %v260
      %v3414 = vpop.permute.xlu0 %3413
      %3416 = vset.pattern.permute.xlu0 105
      %3417 = vperm.xlu0 %3416, %v263
      %v3418 = vpop.permute.xlu0 %3417
      %v3420 = vadd.f32 %v3414, %v551
      %v3421 = vadd.f32 %v3418, %v551
      %vm3422 = vcmp.gt.f32.partialorder %v3420, 0.0
      %vm3423 = vcmp.gt.f32.partialorder %v3421, 0.0
      %v3424 = vmul.f32 %v3420, 0.2
      %v3425 = vmul.f32 %v3421, 0.2
      %v3426 = vsel %vm3422, %v3420, %v3424
      %v3427 = vsel %vm3423, %v3421, %v3425
      %3430 = vrot.lane.b32.xlu0 %v3426, 48
      %v3431 = vpop.permute.xlu0 %3430
      %3432 = vrot.lane.b32.xlu0 %v3427, 48
      %v3433 = vpop.permute.xlu0 %3432
      %v3436 = vsel %vm3265, %v3431, -1e+30
      %v3437 = vsel %vm3266, %v3433, -1e+30
      %v3438 = vsel %vm419, %v3436, -inf
      %3439 = vmax.xlane.f32.xlu0 %v3438
      %v3440 = vpop.xlane.xlu0 %3439
      %v3441 = vsel %vm419, %v3437, -inf
      %3442 = vmax.xlane.f32.xlu0 %v3441
      %v3443 = vpop.xlane.xlu0 %3442
      %v3444 = vsub.f32 %v3436, %v3440
      %v3445 = vsub.f32 %v3437, %v3443
      %v3446 = vmul.f32 %v3444, 1.442695
      %v3447 = vpow.pop %v3446
      %v3448 = vmul.f32 %v3445, 1.442695
      %v3449 = vpow.pop %v3448
      %v3450 = vsel %vm3265, %v3447, 0.0
      %v3451 = vsel %vm3266, %v3449, 0.0
      %3454 = vrot.lane.b32.xlu0 %v3450, 32
      %v3455 = vpop.permute.xlu0 %3454
      %3456 = vrot.lane.b32.xlu0 %v3451, 32
      %v3457 = vpop.permute.xlu0 %3456
      %v3460 = vsel %vm442, %v3455, 0.0
      %3461 = vadd.xlane.f32.xlu0 %v3460
      %v3462 = vpop.xlane.xlu0 %3461
      %v3463 = vsel %vm442, %v3457, 0.0
      %3464 = vadd.xlane.f32.xlu0 %v3463
      %v3465 = vpop.xlane.xlu0 %3464
      %v3466 = vmax.f32 %v3462, 1e-30
      %v3467 = vmax.f32 %v3465, 1e-30
      %v3468 = vrcp.pop %v3466
      %v3469 = vrcp.pop %v3467
      %v3470 = vmul.f32 %v3450, %v3468
      %v3471 = vmul.f32 %v3451, %v3469
      %3474 = vrot.lane.b32.xlu0 %v3470, 32
      %v3475 = vpop.permute.xlu0 %3474
      %3476 = vrot.lane.b32.xlu0 %v3471, 32
      %v3477 = vpop.permute.xlu0 %3476
      %3478 = vrot.lane.b32.xlu0 %v260, 112
      %v3479 = vpop.permute.xlu0 %3478
      %3480 = vrot.lane.b32.xlu0 %v263, 112
      %v3481 = vpop.permute.xlu0 %3480
      %v3484 = vsel %vm442, %v3475, 0
      %v3486 = vsel %vm442, %v3477, 0
      %3488 = vmatprep.subr.mxu0 0.0
      %3489 = vmatpush1.msra.mxu0 %v3479
      %3490 = vmatprep.subr.mxu0 0.0
      %3491 = vmatpush1.msra.mxu0 %v3481
      %3492 = vmatprep.subr.mxu0 0.0
      %3493 = vmatpush1.msra.mxu0 0.0
      %3494 = vmatprep.subr.mxu0 0.0
      %3495 = vmatpush1.msra.mxu0 0.0
      %3496 = vmatprep.subr.mxu0 0.0
      %3497 = vmatpush1.msra.mxu0 0.0
      %3498 = vmatprep.subr.mxu0 0.0
      %3499 = vmatpush1.msra.mxu0 0.0
      %3500 = vmatprep.subr.mxu0 0.0
      %3501 = vmatpush1.msra.mxu0 0.0
      %3502 = vmatprep.subr.mxu0 0.0
      %3503 = vmatpush1.msra.mxu0 0.0
      %3504 = vmatprep.subr.mxu0 0.0
      %3505 = vmatpush1.msra.mxu0 0.0
      %3506 = vmatprep.subr.mxu0 0.0
      %3507 = vmatpush1.msra.mxu0 0.0
      %3508 = vmatprep.subr.mxu0 0.0
      %3509 = vmatpush1.msra.mxu0 0.0
      %3510 = vmatprep.subr.mxu0 0.0
      %3511 = vmatpush1.msra.mxu0 0.0
      %3512 = vmatprep.subr.mxu0 0.0
      %3513 = vmatpush1.msra.mxu0 0.0
      %3514 = vmatprep.subr.mxu0 0.0
      %3515 = vmatpush1.msra.mxu0 0.0
      %3516 = vmatprep.subr.mxu0 0.0
      %3517 = vmatpush1.msra.mxu0 0.0
      %3518 = vmatprep.subr.mxu0 0.0
      %3519 = vmatpush1.msra.mxu0 0.0
      %3520 = vmatprep.subr.mxu0 0.0
      %3521 = vmatpush1.msra.mxu0 0.0
      %3522 = vmatprep.subr.mxu0 0.0
      %3523 = vmatpush1.msra.mxu0 0.0
      %3524 = vmatprep.subr.mxu0 0.0
      %3525 = vmatpush1.msra.mxu0 0.0
      %3526 = vmatprep.subr.mxu0 0.0
      %3527 = vmatpush1.msra.mxu0 0.0
      %3528 = vmatprep.subr.mxu0 0.0
      %3529 = vmatpush1.msra.mxu0 0.0
      %3530 = vmatprep.subr.mxu0 0.0
      %3531 = vmatpush1.msra.mxu0 0.0
      %3532 = vmatprep.subr.mxu0 0.0
      %3533 = vmatpush1.msra.mxu0 0.0
      %3534 = vmatprep.subr.mxu0 0.0
      %3535 = vmatpush1.msra.mxu0 0.0
      %3536 = vmatprep.subr.mxu0 0.0
      %3537 = vmatpush1.msra.mxu0 0.0
      %3538 = vmatprep.subr.mxu0 0.0
      %3539 = vmatpush1.msra.mxu0 0.0
      %3540 = vmatprep.subr.mxu0 0.0
      %3541 = vmatpush1.msra.mxu0 0.0
      %3542 = vmatprep.subr.mxu0 0.0
      %3543 = vmatpush1.msra.mxu0 0.0
      %3544 = vmatprep.subr.mxu0 0.0
      %3545 = vmatpush1.msra.mxu0 0.0
      %3546 = vmatprep.subr.mxu0 0.0
      %3547 = vmatpush1.msra.mxu0 0.0
      %3548 = vmatprep.subr.mxu0 0.0
      %3549 = vmatpush1.msra.mxu0 0.0
      %3550 = vmatprep.subr.mxu0 0.0
      %3551 = vmatpush1.msra.mxu0 0.0
      %3552 = vmatprep.mubr.f32.mxu0 0.0
      %3553 = vmatmul.mubr.f32.gmra.mrb[0].mxu0 %v3484
      %v3554 = vpop.f32.mrb[0].mxu0
      %v3555 = vadd.f32 0.0, %v3554
      %v3556 = vpop.f32.mrb[0].mxu0
      %3557 = vmatprep.mubr.f32.mxu0 0.0
      %3558 = vmatmul.mubr.f32.gmra.mrb[0].mxu0 %v3486
      %v3559 = vpop.f32.mrb[0].mxu0
      %v3560 = vadd.f32 0.0, %v3559
      %v3561 = vpop.f32.mrb[0].mxu0
      %3562 = vdwg.mxu0
      %3565 = vrot.lane.b32.xlu0 %v3555, 16
      %v3566 = vpop.permute.xlu0 %3565
      %3567 = vrot.lane.b32.xlu0 %v3560, 16
      %v3568 = vpop.permute.xlu0 %3567
      %v3571 = vsel %vm442, %v3404, %v3566
      %v3572 = vsel %vm442, %v3409, %v3568
      %v3573 = vadd.f32 %v3571, %v708
      %v3574 = vadd.f32 %v3572, %v708
      %vm3575 = vcmp.gt.f32.partialorder %v3573, 0.0
      %vm3576 = vcmp.gt.f32.partialorder %v3574, 0.0
      %v3577 = vmin.f32 %v3573, 0.0
      %v3578 = vmin.f32 %v3574, 0.0
      %v3579 = vmul.f32 %v3577, 1.442695
      %v3580 = vpow.pop %v3579
      %v3581 = vmul.f32 %v3578, 1.442695
      %v3582 = vpow.pop %v3581
      %v3583 = vsub.f32 %v3580, 1.0
      %v3584 = vsub.f32 %v3582, 1.0
      %v3585 = vsel %vm3575, %v3573, %v3583
      %v3586 = vsel %vm3576, %v3574, %v3584
      %3587 = vset.pattern.permute.xlu0 106
      %3588 = vperm.xlu0 %3587, %v260
      %v3589 = vpop.permute.xlu0 %3588
      %3591 = vset.pattern.permute.xlu0 106
      %3592 = vperm.xlu0 %3591, %v263
      %v3593 = vpop.permute.xlu0 %3592
      %v3595 = vadd.f32 %v3589, %v734
      %v3596 = vadd.f32 %v3593, %v734
      %vm3597 = vcmp.gt.f32.partialorder %v3595, 0.0
      %vm3598 = vcmp.gt.f32.partialorder %v3596, 0.0
      %v3599 = vmul.f32 %v3595, 0.2
      %v3600 = vmul.f32 %v3596, 0.2
      %v3601 = vsel %vm3597, %v3595, %v3599
      %v3602 = vsel %vm3598, %v3596, %v3600
      %3605 = vrot.lane.b32.xlu0 %v3601, 64
      %v3606 = vpop.permute.xlu0 %3605
      %3607 = vrot.lane.b32.xlu0 %v3602, 64
      %v3608 = vpop.permute.xlu0 %3607
      %v3611 = vsel %vm3265, %v3606, -1e+30
      %v3612 = vsel %vm3266, %v3608, -1e+30
      %v3613 = vsel %vm753, %v3611, -inf
      %3614 = vmax.xlane.f32.xlu0 %v3613
      %v3615 = vpop.xlane.xlu0 %3614
      %v3616 = vsel %vm753, %v3612, -inf
      %3617 = vmax.xlane.f32.xlu0 %v3616
      %v3618 = vpop.xlane.xlu0 %3617
      %v3619 = vsub.f32 %v3611, %v3615
      %v3620 = vsub.f32 %v3612, %v3618
      %v3621 = vmul.f32 %v3619, 1.442695
      %v3622 = vpow.pop %v3621
      %v3623 = vmul.f32 %v3620, 1.442695
      %v3624 = vpow.pop %v3623
      %v3625 = vsel %vm3265, %v3622, 0.0
      %v3626 = vsel %vm3266, %v3624, 0.0
      %3629 = vrot.lane.b32.xlu0 %v3625, 16
      %v3630 = vpop.permute.xlu0 %3629
      %3631 = vrot.lane.b32.xlu0 %v3626, 16
      %v3632 = vpop.permute.xlu0 %3631
      %v3635 = vsel %vm442, %v3630, 0.0
      %3636 = vadd.xlane.f32.xlu0 %v3635
      %v3637 = vpop.xlane.xlu0 %3636
      %v3638 = vsel %vm442, %v3632, 0.0
      %3639 = vadd.xlane.f32.xlu0 %v3638
      %v3640 = vpop.xlane.xlu0 %3639
      %v3641 = vmax.f32 %v3637, 1e-30
      %v3642 = vmax.f32 %v3640, 1e-30
      %v3643 = vrcp.pop %v3641
      %v3644 = vrcp.pop %v3642
      %v3645 = vmul.f32 %v3625, %v3643
      %v3646 = vmul.f32 %v3626, %v3644
      %3649 = vrot.lane.b32.xlu0 %v3645, 16
      %v3650 = vpop.permute.xlu0 %3649
      %3651 = vrot.lane.b32.xlu0 %v3646, 16
      %v3652 = vpop.permute.xlu0 %3651
      %3653 = vrot.lane.b32.xlu0 %v260, 96
      %v3654 = vpop.permute.xlu0 %3653
      %3655 = vrot.lane.b32.xlu0 %v263, 96
      %v3656 = vpop.permute.xlu0 %3655
      %v3659 = vsel %vm442, %v3650, 0
      %v3661 = vsel %vm442, %v3652, 0
      %3663 = vmatprep.subr.mxu0 0.0
      %3664 = vmatpush1.msra.mxu0 %v3654
      %3665 = vmatprep.subr.mxu0 0.0
      %3666 = vmatpush1.msra.mxu0 %v3656
      %3667 = vmatprep.subr.mxu0 0.0
      %3668 = vmatpush1.msra.mxu0 0.0
      %3669 = vmatprep.subr.mxu0 0.0
      %3670 = vmatpush1.msra.mxu0 0.0
      %3671 = vmatprep.subr.mxu0 0.0
      %3672 = vmatpush1.msra.mxu0 0.0
      %3673 = vmatprep.subr.mxu0 0.0
      %3674 = vmatpush1.msra.mxu0 0.0
      %3675 = vmatprep.subr.mxu0 0.0
      %3676 = vmatpush1.msra.mxu0 0.0
      %3677 = vmatprep.subr.mxu0 0.0
      %3678 = vmatpush1.msra.mxu0 0.0
      %3679 = vmatprep.subr.mxu0 0.0
      %3680 = vmatpush1.msra.mxu0 0.0
      %3681 = vmatprep.subr.mxu0 0.0
      %3682 = vmatpush1.msra.mxu0 0.0
      %3683 = vmatprep.subr.mxu0 0.0
      %3684 = vmatpush1.msra.mxu0 0.0
      %3685 = vmatprep.subr.mxu0 0.0
      %3686 = vmatpush1.msra.mxu0 0.0
      %3687 = vmatprep.subr.mxu0 0.0
      %3688 = vmatpush1.msra.mxu0 0.0
      %3689 = vmatprep.subr.mxu0 0.0
      %3690 = vmatpush1.msra.mxu0 0.0
      %3691 = vmatprep.subr.mxu0 0.0
      %3692 = vmatpush1.msra.mxu0 0.0
      %3693 = vmatprep.subr.mxu0 0.0
      %3694 = vmatpush1.msra.mxu0 0.0
      %3695 = vmatprep.subr.mxu0 0.0
      %3696 = vmatpush1.msra.mxu0 0.0
      %3697 = vmatprep.subr.mxu0 0.0
      %3698 = vmatpush1.msra.mxu0 0.0
      %3699 = vmatprep.subr.mxu0 0.0
      %3700 = vmatpush1.msra.mxu0 0.0
      %3701 = vmatprep.subr.mxu0 0.0
      %3702 = vmatpush1.msra.mxu0 0.0
      %3703 = vmatprep.subr.mxu0 0.0
      %3704 = vmatpush1.msra.mxu0 0.0
      %3705 = vmatprep.subr.mxu0 0.0
      %3706 = vmatpush1.msra.mxu0 0.0
      %3707 = vmatprep.subr.mxu0 0.0
      %3708 = vmatpush1.msra.mxu0 0.0
      %3709 = vmatprep.subr.mxu0 0.0
      %3710 = vmatpush1.msra.mxu0 0.0
      %3711 = vmatprep.subr.mxu0 0.0
      %3712 = vmatpush1.msra.mxu0 0.0
      %3713 = vmatprep.subr.mxu0 0.0
      %3714 = vmatpush1.msra.mxu0 0.0
      %3715 = vmatprep.subr.mxu0 0.0
      %3716 = vmatpush1.msra.mxu0 0.0
      %3717 = vmatprep.subr.mxu0 0.0
      %3718 = vmatpush1.msra.mxu0 0.0
      %3719 = vmatprep.subr.mxu0 0.0
      %3720 = vmatpush1.msra.mxu0 0.0
      %3721 = vmatprep.subr.mxu0 0.0
      %3722 = vmatpush1.msra.mxu0 0.0
      %3723 = vmatprep.subr.mxu0 0.0
      %3724 = vmatpush1.msra.mxu0 0.0
      %3725 = vmatprep.subr.mxu0 0.0
      %3726 = vmatpush1.msra.mxu0 0.0
      %3727 = vmatprep.mubr.f32.mxu0 0.0
      %3728 = vmatmul.mubr.f32.gmra.mrb[0].mxu0 %v3659
      %v3729 = vpop.f32.mrb[0].mxu0
      %v3730 = vadd.f32 0.0, %v3729
      %v3731 = vpop.f32.mrb[0].mxu0
      %3732 = vmatprep.mubr.f32.mxu0 0.0
      %3733 = vmatmul.mubr.f32.gmra.mrb[0].mxu0 %v3661
      %v3734 = vpop.f32.mrb[0].mxu0
      %v3735 = vadd.f32 0.0, %v3734
      %v3736 = vpop.f32.mrb[0].mxu0
      %3737 = vdwg.mxu0
      %3738 = vset.pattern.permute.xlu0 107
      %3739 = vperm.xlu0 %3738, %v260
      %v3740 = vpop.permute.xlu0 %3739
      %3742 = vset.pattern.permute.xlu0 107
      %3743 = vperm.xlu0 %3742, %v263
      %v3744 = vpop.permute.xlu0 %3743
      %v3746 = vadd.f32 %v3740, %v890
      %v3747 = vadd.f32 %v3744, %v890
      %vm3748 = vcmp.gt.f32.partialorder %v3746, 0.0
      %vm3749 = vcmp.gt.f32.partialorder %v3747, 0.0
      %v3750 = vmul.f32 %v3746, 0.2
      %v3751 = vmul.f32 %v3747, 0.2
      %v3752 = vsel %vm3748, %v3746, %v3750
      %v3753 = vsel %vm3749, %v3747, %v3751
      %3756 = vrot.lane.b32.xlu0 %v3752, 64
      %v3757 = vpop.permute.xlu0 %3756
      %3758 = vrot.lane.b32.xlu0 %v3753, 64
      %v3759 = vpop.permute.xlu0 %3758
      %v3762 = vsel %vm3265, %v3757, -1e+30
      %v3763 = vsel %vm3266, %v3759, -1e+30
      %v3764 = vsel %vm753, %v3762, -inf
      %3765 = vmax.xlane.f32.xlu0 %v3764
      %v3766 = vpop.xlane.xlu0 %3765
      %v3767 = vsel %vm753, %v3763, -inf
      %3768 = vmax.xlane.f32.xlu0 %v3767
      %v3769 = vpop.xlane.xlu0 %3768
      %v3770 = vsub.f32 %v3762, %v3766
      %v3771 = vsub.f32 %v3763, %v3769
      %v3772 = vmul.f32 %v3770, 1.442695
      %v3773 = vpow.pop %v3772
      %v3774 = vmul.f32 %v3771, 1.442695
      %v3775 = vpow.pop %v3774
      %v3776 = vsel %vm3265, %v3773, 0.0
      %v3777 = vsel %vm3266, %v3775, 0.0
      %3780 = vrot.lane.b32.xlu0 %v3776, 16
      %v3781 = vpop.permute.xlu0 %3780
      %3782 = vrot.lane.b32.xlu0 %v3777, 16
      %v3783 = vpop.permute.xlu0 %3782
      %v3786 = vsel %vm442, %v3781, 0.0
      %3787 = vadd.xlane.f32.xlu0 %v3786
      %v3788 = vpop.xlane.xlu0 %3787
      %v3789 = vsel %vm442, %v3783, 0.0
      %3790 = vadd.xlane.f32.xlu0 %v3789
      %v3791 = vpop.xlane.xlu0 %3790
      %v3792 = vmax.f32 %v3788, 1e-30
      %v3793 = vmax.f32 %v3791, 1e-30
      %v3794 = vrcp.pop %v3792
      %v3795 = vrcp.pop %v3793
      %v3796 = vmul.f32 %v3776, %v3794
      %v3797 = vmul.f32 %v3777, %v3795
      %3800 = vrot.lane.b32.xlu0 %v3796, 16
      %v3801 = vpop.permute.xlu0 %3800
      %3802 = vrot.lane.b32.xlu0 %v3797, 16
      %v3803 = vpop.permute.xlu0 %3802
      %3804 = vrot.lane.b32.xlu0 %v260, 80
      %v3805 = vpop.permute.xlu0 %3804
      %3806 = vrot.lane.b32.xlu0 %v263, 80
      %v3807 = vpop.permute.xlu0 %3806
      %v3810 = vsel %vm442, %v3801, 0
      %v3812 = vsel %vm442, %v3803, 0
      %3814 = vmatprep.subr.mxu0 0.0
      %3815 = vmatpush1.msra.mxu0 %v3805
      %3816 = vmatprep.subr.mxu0 0.0
      %3817 = vmatpush1.msra.mxu0 %v3807
      %3818 = vmatprep.subr.mxu0 0.0
      %3819 = vmatpush1.msra.mxu0 0.0
      %3820 = vmatprep.subr.mxu0 0.0
      %3821 = vmatpush1.msra.mxu0 0.0
      %3822 = vmatprep.subr.mxu0 0.0
      %3823 = vmatpush1.msra.mxu0 0.0
      %3824 = vmatprep.subr.mxu0 0.0
      %3825 = vmatpush1.msra.mxu0 0.0
      %3826 = vmatprep.subr.mxu0 0.0
      %3827 = vmatpush1.msra.mxu0 0.0
      %3828 = vmatprep.subr.mxu0 0.0
      %3829 = vmatpush1.msra.mxu0 0.0
      %3830 = vmatprep.subr.mxu0 0.0
      %3831 = vmatpush1.msra.mxu0 0.0
      %3832 = vmatprep.subr.mxu0 0.0
      %3833 = vmatpush1.msra.mxu0 0.0
      %3834 = vmatprep.subr.mxu0 0.0
      %3835 = vmatpush1.msra.mxu0 0.0
      %3836 = vmatprep.subr.mxu0 0.0
      %3837 = vmatpush1.msra.mxu0 0.0
      %3838 = vmatprep.subr.mxu0 0.0
      %3839 = vmatpush1.msra.mxu0 0.0
      %3840 = vmatprep.subr.mxu0 0.0
      %3841 = vmatpush1.msra.mxu0 0.0
      %3842 = vmatprep.subr.mxu0 0.0
      %3843 = vmatpush1.msra.mxu0 0.0
      %3844 = vmatprep.subr.mxu0 0.0
      %3845 = vmatpush1.msra.mxu0 0.0
      %3846 = vmatprep.subr.mxu0 0.0
      %3847 = vmatpush1.msra.mxu0 0.0
      %3848 = vmatprep.subr.mxu0 0.0
      %3849 = vmatpush1.msra.mxu0 0.0
      %3850 = vmatprep.subr.mxu0 0.0
      %3851 = vmatpush1.msra.mxu0 0.0
      %3852 = vmatprep.subr.mxu0 0.0
      %3853 = vmatpush1.msra.mxu0 0.0
      %3854 = vmatprep.subr.mxu0 0.0
      %3855 = vmatpush1.msra.mxu0 0.0
      %3856 = vmatprep.subr.mxu0 0.0
      %3857 = vmatpush1.msra.mxu0 0.0
      %3858 = vmatprep.subr.mxu0 0.0
      %3859 = vmatpush1.msra.mxu0 0.0
      %3860 = vmatprep.subr.mxu0 0.0
      %3861 = vmatpush1.msra.mxu0 0.0
      %3862 = vmatprep.subr.mxu0 0.0
      %3863 = vmatpush1.msra.mxu0 0.0
      %3864 = vmatprep.subr.mxu0 0.0
      %3865 = vmatpush1.msra.mxu0 0.0
      %3866 = vmatprep.subr.mxu0 0.0
      %3867 = vmatpush1.msra.mxu0 0.0
      %3868 = vmatprep.subr.mxu0 0.0
      %3869 = vmatpush1.msra.mxu0 0.0
      %3870 = vmatprep.subr.mxu0 0.0
      %3871 = vmatpush1.msra.mxu0 0.0
      %3872 = vmatprep.subr.mxu0 0.0
      %3873 = vmatpush1.msra.mxu0 0.0
      %3874 = vmatprep.subr.mxu0 0.0
      %3875 = vmatpush1.msra.mxu0 0.0
      %3876 = vmatprep.subr.mxu0 0.0
      %3877 = vmatpush1.msra.mxu0 0.0
      %3878 = vmatprep.mubr.f32.mxu0 0.0
      %3879 = vmatmul.mubr.f32.gmra.mrb[0].mxu0 %v3810
      %v3880 = vpop.f32.mrb[0].mxu0
      %v3881 = vadd.f32 0.0, %v3880
      %v3882 = vpop.f32.mrb[0].mxu0
      %3883 = vmatprep.mubr.f32.mxu0 0.0
      %3884 = vmatmul.mubr.f32.gmra.mrb[0].mxu0 %v3812
      %v3885 = vpop.f32.mrb[0].mxu0
      %v3886 = vadd.f32 0.0, %v3885
      %v3887 = vpop.f32.mrb[0].mxu0
      %3888 = vdwg.mxu0
      %3891 = vrot.lane.b32.xlu0 %v3881, 16
      %v3892 = vpop.permute.xlu0 %3891
      %3893 = vrot.lane.b32.xlu0 %v3886, 16
      %v3894 = vpop.permute.xlu0 %3893
      %v3897 = vsel %vm442, %v3730, %v3892
      %v3898 = vsel %vm442, %v3735, %v3894
      %v3899 = vadd.f32 %v3897, %v1046
      %v3900 = vadd.f32 %v3898, %v1046
      %vm3901 = vcmp.gt.f32.partialorder %v3899, 0.0
      %vm3902 = vcmp.gt.f32.partialorder %v3900, 0.0
      %v3903 = vmin.f32 %v3899, 0.0
      %v3904 = vmin.f32 %v3900, 0.0
      %v3905 = vmul.f32 %v3903, 1.442695
      %v3906 = vpow.pop %v3905
      %v3907 = vmul.f32 %v3904, 1.442695
      %v3908 = vpow.pop %v3907
      %v3909 = vsub.f32 %v3906, 1.0
      %v3910 = vsub.f32 %v3908, 1.0
      %v3911 = vsel %vm3901, %v3899, %v3909
      %v3912 = vsel %vm3902, %v3900, %v3910
      %vm3913 = vcmp.gt.f32.partialorder %v175, 0.0
      %vm3914 = vcmp.gt.f32.partialorder %v177, 0.0
      %3915 = vset.pattern.permute.xlu0 108
      %3916 = vperm.xlu0 %3915, %v260
      %v3917 = vpop.permute.xlu0 %3916
      %3919 = vset.pattern.permute.xlu0 108
      %3920 = vperm.xlu0 %3919, %v263
      %v3921 = vpop.permute.xlu0 %3920
      %v3923 = vadd.f32 %v3917, %v1075
      %v3924 = vadd.f32 %v3921, %v1075
      %vm3925 = vcmp.gt.f32.partialorder %v3923, 0.0
      %vm3926 = vcmp.gt.f32.partialorder %v3924, 0.0
      %v3927 = vmul.f32 %v3923, 0.2
      %v3928 = vmul.f32 %v3924, 0.2
      %v3929 = vsel %vm3925, %v3923, %v3927
      %v3930 = vsel %vm3926, %v3924, %v3928
      %3933 = vrot.lane.b32.xlu0 %v3929, 80
      %v3934 = vpop.permute.xlu0 %3933
      %3935 = vrot.lane.b32.xlu0 %v3930, 80
      %v3936 = vpop.permute.xlu0 %3935
      %v3939 = vsel %vm3913, %v3934, -1e+30
      %v3940 = vsel %vm3914, %v3936, -1e+30
      %v3941 = vsel %vm442, %v3939, -inf
      %3942 = vmax.xlane.f32.xlu0 %v3941
      %v3943 = vpop.xlane.xlu0 %3942
      %v3944 = vsel %vm442, %v3940, -inf
      %3945 = vmax.xlane.f32.xlu0 %v3944
      %v3946 = vpop.xlane.xlu0 %3945
      %v3947 = vsub.f32 %v3939, %v3943
      %v3948 = vsub.f32 %v3940, %v3946
      %v3949 = vmul.f32 %v3947, 1.442695
      %v3950 = vpow.pop %v3949
      %v3951 = vmul.f32 %v3948, 1.442695
      %v3952 = vpow.pop %v3951
      %v3953 = vsel %vm3913, %v3950, 0.0
      %v3954 = vsel %vm3914, %v3952, 0.0
      %v3955 = vsel %vm442, %v3953, 0.0
      %3956 = vadd.xlane.f32.xlu0 %v3955
      %v3957 = vpop.xlane.xlu0 %3956
      %v3958 = vsel %vm442, %v3954, 0.0
      %3959 = vadd.xlane.f32.xlu0 %v3958
      %v3960 = vpop.xlane.xlu0 %3959
      %v3961 = vmax.f32 %v3957, 1e-30
      %v3962 = vmax.f32 %v3960, 1e-30
      %v3963 = vrcp.pop %v3961
      %v3964 = vrcp.pop %v3962
      %v3965 = vmul.f32 %v3953, %v3963
      %v3966 = vmul.f32 %v3954, %v3964
      %3967 = vrot.lane.b32.xlu0 %v260, 64
      %v3968 = vpop.permute.xlu0 %3967
      %3969 = vrot.lane.b32.xlu0 %v263, 64
      %v3970 = vpop.permute.xlu0 %3969
      %v3974 = vsel %vm442, %v3965, 0
      %v3977 = vsel %vm442, %v3966, 0
      %3979 = vmatprep.subr.mxu0 0.0
      %3980 = vmatpush1.msra.mxu0 %v3968
      %3981 = vmatprep.subr.mxu0 0.0
      %3982 = vmatpush1.msra.mxu0 %v3970
      %3983 = vmatprep.subr.mxu0 0.0
      %3984 = vmatpush1.msra.mxu0 0.0
      %3985 = vmatprep.subr.mxu0 0.0
      %3986 = vmatpush1.msra.mxu0 0.0
      %3987 = vmatprep.subr.mxu0 0.0
      %3988 = vmatpush1.msra.mxu0 0.0
      %3989 = vmatprep.subr.mxu0 0.0
      %3990 = vmatpush1.msra.mxu0 0.0
      %3991 = vmatprep.subr.mxu0 0.0
      %3992 = vmatpush1.msra.mxu0 0.0
      %3993 = vmatprep.subr.mxu0 0.0
      %3994 = vmatpush1.msra.mxu0 0.0
      %3995 = vmatprep.subr.mxu0 0.0
      %3996 = vmatpush1.msra.mxu0 0.0
      %3997 = vmatprep.subr.mxu0 0.0
      %3998 = vmatpush1.msra.mxu0 0.0
      %3999 = vmatprep.subr.mxu0 0.0
      %4000 = vmatpush1.msra.mxu0 0.0
      %4001 = vmatprep.subr.mxu0 0.0
      %4002 = vmatpush1.msra.mxu0 0.0
      %4003 = vmatprep.subr.mxu0 0.0
      %4004 = vmatpush1.msra.mxu0 0.0
      %4005 = vmatprep.subr.mxu0 0.0
      %4006 = vmatpush1.msra.mxu0 0.0
      %4007 = vmatprep.subr.mxu0 0.0
      %4008 = vmatpush1.msra.mxu0 0.0
      %4009 = vmatprep.subr.mxu0 0.0
      %4010 = vmatpush1.msra.mxu0 0.0
      %4011 = vmatprep.subr.mxu0 0.0
      %4012 = vmatpush1.msra.mxu0 0.0
      %4013 = vmatprep.subr.mxu0 0.0
      %4014 = vmatpush1.msra.mxu0 0.0
      %4015 = vmatprep.subr.mxu0 0.0
      %4016 = vmatpush1.msra.mxu0 0.0
      %4017 = vmatprep.subr.mxu0 0.0
      %4018 = vmatpush1.msra.mxu0 0.0
      %4019 = vmatprep.subr.mxu0 0.0
      %4020 = vmatpush1.msra.mxu0 0.0
      %4021 = vmatprep.subr.mxu0 0.0
      %4022 = vmatpush1.msra.mxu0 0.0
      %4023 = vmatprep.subr.mxu0 0.0
      %4024 = vmatpush1.msra.mxu0 0.0
      %4025 = vmatprep.subr.mxu0 0.0
      %4026 = vmatpush1.msra.mxu0 0.0
      %4027 = vmatprep.subr.mxu0 0.0
      %4028 = vmatpush1.msra.mxu0 0.0
      %4029 = vmatprep.subr.mxu0 0.0
      %4030 = vmatpush1.msra.mxu0 0.0
      %4031 = vmatprep.subr.mxu0 0.0
      %4032 = vmatpush1.msra.mxu0 0.0
      %4033 = vmatprep.subr.mxu0 0.0
      %4034 = vmatpush1.msra.mxu0 0.0
      %4035 = vmatprep.subr.mxu0 0.0
      %4036 = vmatpush1.msra.mxu0 0.0
      %4037 = vmatprep.subr.mxu0 0.0
      %4038 = vmatpush1.msra.mxu0 0.0
      %4039 = vmatprep.subr.mxu0 0.0
      %4040 = vmatpush1.msra.mxu0 0.0
      %4041 = vmatprep.subr.mxu0 0.0
      %4042 = vmatpush1.msra.mxu0 0.0
      %4043 = vmatprep.mubr.f32.mxu0 0.0
      %4044 = vmatmul.mubr.f32.gmra.mrb[0].mxu0 %v3974
      %v4045 = vpop.f32.mrb[0].mxu0
      %v4046 = vadd.f32 0.0, %v4045
      %v4047 = vpop.f32.mrb[0].mxu0
      %4048 = vmatprep.mubr.f32.mxu0 0.0
      %4049 = vmatmul.mubr.f32.gmra.mrb[0].mxu0 %v3977
      %v4050 = vpop.f32.mrb[0].mxu0
      %v4051 = vadd.f32 0.0, %v4050
      %v4052 = vpop.f32.mrb[0].mxu0
      %4053 = vdwg.mxu0
      %4054 = vset.pattern.permute.xlu0 109
      %4055 = vperm.xlu0 %4054, %v260
      %v4056 = vpop.permute.xlu0 %4055
      %4058 = vset.pattern.permute.xlu0 109
      %4059 = vperm.xlu0 %4058, %v263
      %v4060 = vpop.permute.xlu0 %4059
      %v4062 = vadd.f32 %v4056, %v1210
      %v4063 = vadd.f32 %v4060, %v1210
      %vm4064 = vcmp.gt.f32.partialorder %v4062, 0.0
      %vm4065 = vcmp.gt.f32.partialorder %v4063, 0.0
      %v4066 = vmul.f32 %v4062, 0.2
      %v4067 = vmul.f32 %v4063, 0.2
      %v4068 = vsel %vm4064, %v4062, %v4066
      %v4069 = vsel %vm4065, %v4063, %v4067
      %4072 = vrot.lane.b32.xlu0 %v4068, 80
      %v4073 = vpop.permute.xlu0 %4072
      %4074 = vrot.lane.b32.xlu0 %v4069, 80
      %v4075 = vpop.permute.xlu0 %4074
      %v4078 = vsel %vm3913, %v4073, -1e+30
      %v4079 = vsel %vm3914, %v4075, -1e+30
      %v4080 = vsel %vm442, %v4078, -inf
      %4081 = vmax.xlane.f32.xlu0 %v4080
      %v4082 = vpop.xlane.xlu0 %4081
      %v4083 = vsel %vm442, %v4079, -inf
      %4084 = vmax.xlane.f32.xlu0 %v4083
      %v4085 = vpop.xlane.xlu0 %4084
      %v4086 = vsub.f32 %v4078, %v4082
      %v4087 = vsub.f32 %v4079, %v4085
      %v4088 = vmul.f32 %v4086, 1.442695
      %v4089 = vpow.pop %v4088
      %v4090 = vmul.f32 %v4087, 1.442695
      %v4091 = vpow.pop %v4090
      %v4092 = vsel %vm3913, %v4089, 0.0
      %v4093 = vsel %vm3914, %v4091, 0.0
      %v4094 = vsel %vm442, %v4092, 0.0
      %4095 = vadd.xlane.f32.xlu0 %v4094
      %v4096 = vpop.xlane.xlu0 %4095
      %v4097 = vsel %vm442, %v4093, 0.0
      %4098 = vadd.xlane.f32.xlu0 %v4097
      %v4099 = vpop.xlane.xlu0 %4098
      %v4100 = vmax.f32 %v4096, 1e-30
      %v4101 = vmax.f32 %v4099, 1e-30
      %v4102 = vrcp.pop %v4100
      %v4103 = vrcp.pop %v4101
      %v4104 = vmul.f32 %v4092, %v4102
      %v4105 = vmul.f32 %v4093, %v4103
      %4106 = vrot.lane.b32.xlu0 %v260, 48
      %v4107 = vpop.permute.xlu0 %4106
      %4108 = vrot.lane.b32.xlu0 %v263, 48
      %v4109 = vpop.permute.xlu0 %4108
      %v4113 = vsel %vm442, %v4104, 0
      %v4116 = vsel %vm442, %v4105, 0
      %4118 = vmatprep.subr.mxu0 0.0
      %4119 = vmatpush1.msra.mxu0 %v4107
      %4120 = vmatprep.subr.mxu0 0.0
      %4121 = vmatpush1.msra.mxu0 %v4109
      %4122 = vmatprep.subr.mxu0 0.0
      %4123 = vmatpush1.msra.mxu0 0.0
      %4124 = vmatprep.subr.mxu0 0.0
      %4125 = vmatpush1.msra.mxu0 0.0
      %4126 = vmatprep.subr.mxu0 0.0
      %4127 = vmatpush1.msra.mxu0 0.0
      %4128 = vmatprep.subr.mxu0 0.0
      %4129 = vmatpush1.msra.mxu0 0.0
      %4130 = vmatprep.subr.mxu0 0.0
      %4131 = vmatpush1.msra.mxu0 0.0
      %4132 = vmatprep.subr.mxu0 0.0
      %4133 = vmatpush1.msra.mxu0 0.0
      %4134 = vmatprep.subr.mxu0 0.0
      %4135 = vmatpush1.msra.mxu0 0.0
      %4136 = vmatprep.subr.mxu0 0.0
      %4137 = vmatpush1.msra.mxu0 0.0
      %4138 = vmatprep.subr.mxu0 0.0
      %4139 = vmatpush1.msra.mxu0 0.0
      %4140 = vmatprep.subr.mxu0 0.0
      %4141 = vmatpush1.msra.mxu0 0.0
      %4142 = vmatprep.subr.mxu0 0.0
      %4143 = vmatpush1.msra.mxu0 0.0
      %4144 = vmatprep.subr.mxu0 0.0
      %4145 = vmatpush1.msra.mxu0 0.0
      %4146 = vmatprep.subr.mxu0 0.0
      %4147 = vmatpush1.msra.mxu0 0.0
      %4148 = vmatprep.subr.mxu0 0.0
      %4149 = vmatpush1.msra.mxu0 0.0
      %4150 = vmatprep.subr.mxu0 0.0
      %4151 = vmatpush1.msra.mxu0 0.0
      %4152 = vmatprep.subr.mxu0 0.0
      %4153 = vmatpush1.msra.mxu0 0.0
      %4154 = vmatprep.subr.mxu0 0.0
      %4155 = vmatpush1.msra.mxu0 0.0
      %4156 = vmatprep.subr.mxu0 0.0
      %4157 = vmatpush1.msra.mxu0 0.0
      %4158 = vmatprep.subr.mxu0 0.0
      %4159 = vmatpush1.msra.mxu0 0.0
      %4160 = vmatprep.subr.mxu0 0.0
      %4161 = vmatpush1.msra.mxu0 0.0
      %4162 = vmatprep.subr.mxu0 0.0
      %4163 = vmatpush1.msra.mxu0 0.0
      %4164 = vmatprep.subr.mxu0 0.0
      %4165 = vmatpush1.msra.mxu0 0.0
      %4166 = vmatprep.subr.mxu0 0.0
      %4167 = vmatpush1.msra.mxu0 0.0
      %4168 = vmatprep.subr.mxu0 0.0
      %4169 = vmatpush1.msra.mxu0 0.0
      %4170 = vmatprep.subr.mxu0 0.0
      %4171 = vmatpush1.msra.mxu0 0.0
      %4172 = vmatprep.subr.mxu0 0.0
      %4173 = vmatpush1.msra.mxu0 0.0
      %4174 = vmatprep.subr.mxu0 0.0
      %4175 = vmatpush1.msra.mxu0 0.0
      %4176 = vmatprep.subr.mxu0 0.0
      %4177 = vmatpush1.msra.mxu0 0.0
      %4178 = vmatprep.subr.mxu0 0.0
      %4179 = vmatpush1.msra.mxu0 0.0
      %4180 = vmatprep.subr.mxu0 0.0
      %4181 = vmatpush1.msra.mxu0 0.0
      %4182 = vmatprep.mubr.f32.mxu0 0.0
      %4183 = vmatmul.mubr.f32.gmra.mrb[0].mxu0 %v4113
      %v4184 = vpop.f32.mrb[0].mxu0
      %v4185 = vadd.f32 0.0, %v4184
      %v4186 = vpop.f32.mrb[0].mxu0
      %4187 = vmatprep.mubr.f32.mxu0 0.0
      %4188 = vmatmul.mubr.f32.gmra.mrb[0].mxu0 %v4116
      %v4189 = vpop.f32.mrb[0].mxu0
      %v4190 = vadd.f32 0.0, %v4189
      %v4191 = vpop.f32.mrb[0].mxu0
      %4192 = vdwg.mxu0
      %4195 = vrot.lane.b32.xlu0 %v4185, 16
      %v4196 = vpop.permute.xlu0 %4195
      %4197 = vrot.lane.b32.xlu0 %v4190, 16
      %v4198 = vpop.permute.xlu0 %4197
      %v4201 = vsel %vm442, %v4046, %v4196
      %v4202 = vsel %vm442, %v4051, %v4198
      %v4203 = vadd.f32 %v4201, %v1345
      %v4204 = vadd.f32 %v4202, %v1345
      %vm4205 = vcmp.gt.f32.partialorder %v4203, 0.0
      %vm4206 = vcmp.gt.f32.partialorder %v4204, 0.0
      %v4207 = vmin.f32 %v4203, 0.0
      %v4208 = vmin.f32 %v4204, 0.0
      %v4209 = vmul.f32 %v4207, 1.442695
      %v4210 = vpow.pop %v4209
      %v4211 = vmul.f32 %v4208, 1.442695
      %v4212 = vpow.pop %v4211
      %v4213 = vsub.f32 %v4210, 1.0
      %v4214 = vsub.f32 %v4212, 1.0
      %v4215 = vsel %vm4205, %v4203, %v4213
      %v4216 = vsel %vm4206, %v4204, %v4214
      %v4217 = vpack.c.bf16 %v722, %v721
      %v4218 = vpack.c.bf16 %v1061, %v1060
      %v4219 = vpack.c.bf16 %v1360, %v1359
      %v4220 = vpack.c.bf16 %v1682, %v1681
      %v4221 = vpack.c.bf16 %v2008, %v2007
      %v4222 = vpack.c.bf16 %v2312, %v2311
      %v4223 = vpack.c.bf16 %v2634, %v2633
      %v4224 = vpack.c.bf16 %v2960, %v2959
      %v4225 = vpack.c.bf16 %v3264, %v3263
      %v4226 = vpack.c.bf16 %v3586, %v3585
      %v4227 = vpack.c.bf16 %v3912, %v3911
      %v4228 = vpack.c.bf16 %v4216, %v4215
      %v4229 = vpack.c.bf16 %v158, %v157
      %v4230 = vpack.c.bf16 %v160, %v159
      %v4231 = vlaneseq
      %v4232 = vshrl.u32 %v4231, 7
      %v4233 = vsub.s32 0, %v4232
      %v4234 = vrot.slane %v161, %v4233
      %vm4235 = vcmask 261120
      %v4237 = vsel %vm4235, %v4217, 0
      %v4240 = vsel %vm4235, %v4218, 0
      %v4243 = vsel %vm4235, %v4219, 0
      %v4246 = vsel %vm4235, %v4220, 0
      %v4249 = vsel %vm4235, %v4221, 0
      %v4252 = vsel %vm4235, %v4222, 0
      %v4255 = vsel %vm4235, %v4223, 0
      %v4258 = vsel %vm4235, %v4224, 0
      %v4261 = vsel %vm4235, %v4225, 0
      %v4264 = vsel %vm4235, %v4226, 0
      %v4267 = vsel %vm4235, %v4227, 0
      %v4270 = vsel %vm4235, %v4228, 0
      %4272 = vmatprep.subr.bf16.mxu0 0
      %4273 = vmatpush1.bf16.msra.mxu0 %v4229
      %4274 = vmatprep.subr.bf16.mxu0 0
      %4275 = vmatpush1.bf16.msra.mxu0 %v4230
      %4276 = vmatprep.subr.bf16.mxu0 0
      %4277 = vmatpush1.bf16.msra.mxu0 0
      %4278 = vmatprep.subr.bf16.mxu0 0
      %4279 = vmatpush1.bf16.msra.mxu0 0
      %4280 = vmatprep.subr.bf16.mxu0 0
      %4281 = vmatpush1.bf16.msra.mxu0 0
      %4282 = vmatprep.subr.bf16.mxu0 0
      %4283 = vmatpush1.bf16.msra.mxu0 0
      %4284 = vmatprep.subr.bf16.mxu0 0
      %4285 = vmatpush1.bf16.msra.mxu0 0
      %4286 = vmatprep.subr.bf16.mxu0 0
      %4287 = vmatpush1.bf16.msra.mxu0 0
      %4288 = vmatprep.subr.bf16.mxu0 0
      %4289 = vmatpush1.bf16.msra.mxu0 0
      %4290 = vmatprep.subr.bf16.mxu0 0
      %4291 = vmatpush1.bf16.msra.mxu0 0
      %4292 = vmatprep.subr.bf16.mxu0 0
      %4293 = vmatpush1.bf16.msra.mxu0 0
      %4294 = vmatprep.subr.bf16.mxu0 0
      %4295 = vmatpush1.bf16.msra.mxu0 0
      %4296 = vmatprep.subr.bf16.mxu0 0
      %4297 = vmatpush1.bf16.msra.mxu0 0
      %4298 = vmatprep.subr.bf16.mxu0 0
      %4299 = vmatpush1.bf16.msra.mxu0 0
      %4300 = vmatprep.subr.bf16.mxu0 0
      %4301 = vmatpush1.bf16.msra.mxu0 0
      %4302 = vmatprep.subr.bf16.mxu0 0
      %4303 = vmatpush1.bf16.msra.mxu0 0
      %4304 = vmatprep.mubr.bf16.mxu0 0
      %4305 = vmatmul.mubr.bf16.gmra.mrb[0].mxu0 %v4237
      %v4306 = vpop.f32.mrb[0].mxu0
      %v4307 = vadd.f32 %v4234, %v4306
      %v4308 = vpop.f32.mrb[0].mxu0
      %v4309 = vpop.f32.mrb[0].mxu0
      %v4310 = vadd.f32 %v4234, %v4309
      %v4311 = vpop.f32.mrb[0].mxu0
      %4312 = vmatprep.mubr.bf16.mxu0 0
      %4313 = vmatmul.mubr.bf16.gmra.mrb[0].mxu0 %v4240
      %v4314 = vpop.f32.mrb[0].mxu0
      %v4315 = vadd.f32 %v4234, %v4314
      %v4316 = vpop.f32.mrb[0].mxu0
      %v4317 = vpop.f32.mrb[0].mxu0
      %v4318 = vadd.f32 %v4234, %v4317
      %v4319 = vpop.f32.mrb[0].mxu0
      %4320 = vmatprep.mubr.bf16.mxu0 0
      %4321 = vmatmul.mubr.bf16.gmra.mrb[0].mxu0 %v4243
      %v4322 = vpop.f32.mrb[0].mxu0
      %v4323 = vadd.f32 %v4234, %v4322
      %v4324 = vpop.f32.mrb[0].mxu0
      %v4325 = vpop.f32.mrb[0].mxu0
      %v4326 = vadd.f32 %v4234, %v4325
      %v4327 = vpop.f32.mrb[0].mxu0
      %4328 = vmatprep.mubr.bf16.mxu0 0
      %4329 = vmatmul.mubr.bf16.gmra.mrb[0].mxu0 %v4246
      %v4330 = vpop.f32.mrb[0].mxu0
      %v4331 = vadd.f32 %v4234, %v4330
      %v4332 = vpop.f32.mrb[0].mxu0
      %v4333 = vpop.f32.mrb[0].mxu0
      %v4334 = vadd.f32 %v4234, %v4333
      %v4335 = vpop.f32.mrb[0].mxu0
      %4336 = vmatprep.mubr.bf16.mxu0 0
      %4337 = vmatmul.mubr.bf16.gmra.mrb[0].mxu0 %v4249
      %v4338 = vpop.f32.mrb[0].mxu0
      %v4339 = vadd.f32 %v4234, %v4338
      %v4340 = vpop.f32.mrb[0].mxu0
      %v4341 = vpop.f32.mrb[0].mxu0
      %v4342 = vadd.f32 %v4234, %v4341
      %v4343 = vpop.f32.mrb[0].mxu0
      %4344 = vmatprep.mubr.bf16.mxu0 0
      %4345 = vmatmul.mubr.bf16.gmra.mrb[0].mxu0 %v4252
      %v4346 = vpop.f32.mrb[0].mxu0
      %v4347 = vadd.f32 %v4234, %v4346
      %v4348 = vpop.f32.mrb[0].mxu0
      %v4349 = vpop.f32.mrb[0].mxu0
      %v4350 = vadd.f32 %v4234, %v4349
      %v4351 = vpop.f32.mrb[0].mxu0
      %4352 = vmatprep.mubr.bf16.mxu0 0
      %4353 = vmatmul.mubr.bf16.gmra.mrb[0].mxu0 %v4255
      %v4354 = vpop.f32.mrb[0].mxu0
      %v4355 = vadd.f32 %v4234, %v4354
      %v4356 = vpop.f32.mrb[0].mxu0
      %v4357 = vpop.f32.mrb[0].mxu0
      %v4358 = vadd.f32 %v4234, %v4357
      %v4359 = vpop.f32.mrb[0].mxu0
      %4360 = vmatprep.mubr.bf16.mxu0 0
      %4361 = vmatmul.mubr.bf16.gmra.mrb[0].mxu0 %v4258
      %v4362 = vpop.f32.mrb[0].mxu0
      %v4363 = vadd.f32 %v4234, %v4362
      %v4364 = vpop.f32.mrb[0].mxu0
      %v4365 = vpop.f32.mrb[0].mxu0
      %v4366 = vadd.f32 %v4234, %v4365
      %v4367 = vpop.f32.mrb[0].mxu0
      %4368 = vmatprep.mubr.bf16.mxu0 0
      %4369 = vmatmul.mubr.bf16.gmra.mrb[0].mxu0 %v4261
      %v4370 = vpop.f32.mrb[0].mxu0
      %v4371 = vadd.f32 %v4234, %v4370
      %v4372 = vpop.f32.mrb[0].mxu0
      %v4373 = vpop.f32.mrb[0].mxu0
      %v4374 = vadd.f32 %v4234, %v4373
      %v4375 = vpop.f32.mrb[0].mxu0
      %4376 = vmatprep.mubr.bf16.mxu0 0
      %4377 = vmatmul.mubr.bf16.gmra.mrb[0].mxu0 %v4264
      %v4378 = vpop.f32.mrb[0].mxu0
      %v4379 = vadd.f32 %v4234, %v4378
      %v4380 = vpop.f32.mrb[0].mxu0
      %v4381 = vpop.f32.mrb[0].mxu0
      %v4382 = vadd.f32 %v4234, %v4381
      %v4383 = vpop.f32.mrb[0].mxu0
      %4384 = vmatprep.mubr.bf16.mxu0 0
      %4385 = vmatmul.mubr.bf16.gmra.mrb[0].mxu0 %v4267
      %v4386 = vpop.f32.mrb[0].mxu0
      %v4387 = vadd.f32 %v4234, %v4386
      %v4388 = vpop.f32.mrb[0].mxu0
      %v4389 = vpop.f32.mrb[0].mxu0
      %v4390 = vadd.f32 %v4234, %v4389
      %v4391 = vpop.f32.mrb[0].mxu0
      %4392 = vmatprep.mubr.bf16.mxu0 0
      %4393 = vmatmul.mubr.bf16.gmra.mrb[0].mxu0 %v4270
      %v4394 = vpop.f32.mrb[0].mxu0
      %v4395 = vadd.f32 %v4234, %v4394
      %v4396 = vpop.f32.mrb[0].mxu0
      %v4397 = vpop.f32.mrb[0].mxu0
      %v4398 = vadd.f32 %v4234, %v4397
      %v4399 = vpop.f32.mrb[0].mxu0
      %4400 = vdwg.mxu0
      %v4401 = vtanh.pop %v4307
      %v4402 = vtanh.pop %v4310
      %v4403 = vtanh.pop %v4315
      %v4404 = vtanh.pop %v4318
      %v4405 = vtanh.pop %v4323
      %v4406 = vtanh.pop %v4326
      %v4407 = vtanh.pop %v4331
      %v4408 = vtanh.pop %v4334
      %v4409 = vtanh.pop %v4339
      %v4410 = vtanh.pop %v4342
      %v4411 = vtanh.pop %v4347
      %v4412 = vtanh.pop %v4350
      %v4413 = vtanh.pop %v4355
      %v4414 = vtanh.pop %v4358
      %v4415 = vtanh.pop %v4363
      %v4416 = vtanh.pop %v4366
      %v4417 = vtanh.pop %v4371
      %v4418 = vtanh.pop %v4374
      %v4419 = vtanh.pop %v4379
      %v4420 = vtanh.pop %v4382
      %v4421 = vtanh.pop %v4387
      %v4422 = vtanh.pop %v4390
      %v4423 = vtanh.pop %v4395
      %v4424 = vtanh.pop %v4398
      %v4425 = vlaneseq
      %v4426 = vshrl.u32 %v4425, 7
      %v4427 = vsub.s32 1, %v4426
      %v4428 = vrot.slane %v161, %v4427
      %v4429 = vmul.f32 %v4401, %v4428
      %v4430 = vmul.f32 %v4402, %v4428
      %v4431 = vmul.f32 %v4403, %v4428
      %v4432 = vmul.f32 %v4404, %v4428
      %v4433 = vmul.f32 %v4405, %v4428
      %v4434 = vmul.f32 %v4406, %v4428
      %v4435 = vmul.f32 %v4407, %v4428
      %v4436 = vmul.f32 %v4408, %v4428
      %v4437 = vmul.f32 %v4409, %v4428
      %v4438 = vmul.f32 %v4410, %v4428
      %v4439 = vmul.f32 %v4411, %v4428
      %v4440 = vmul.f32 %v4412, %v4428
      %v4441 = vmul.f32 %v4413, %v4428
      %v4442 = vmul.f32 %v4414, %v4428
      %v4443 = vmul.f32 %v4415, %v4428
      %v4444 = vmul.f32 %v4416, %v4428
      %v4445 = vmul.f32 %v4417, %v4428
      %v4446 = vmul.f32 %v4418, %v4428
      %v4447 = vmul.f32 %v4419, %v4428
      %v4448 = vmul.f32 %v4420, %v4428
      %v4449 = vmul.f32 %v4421, %v4428
      %v4450 = vmul.f32 %v4422, %v4428
      %v4451 = vmul.f32 %v4423, %v4428
      %v4452 = vmul.f32 %v4424, %v4428
      %4453 = vadd.xlane.f32.xlu0 %v4429
      %v4454 = vpop.xlane.xlu0 %4453
      %4455 = vadd.xlane.f32.xlu0 %v4430
      %v4456 = vpop.xlane.xlu0 %4455
      %4457 = vadd.xlane.f32.xlu0 %v4431
      %v4458 = vpop.xlane.xlu0 %4457
      %4459 = vadd.xlane.f32.xlu0 %v4432
      %v4460 = vpop.xlane.xlu0 %4459
      %4461 = vadd.xlane.f32.xlu0 %v4433
      %v4462 = vpop.xlane.xlu0 %4461
      %4463 = vadd.xlane.f32.xlu0 %v4434
      %v4464 = vpop.xlane.xlu0 %4463
      %4465 = vadd.xlane.f32.xlu0 %v4435
      %v4466 = vpop.xlane.xlu0 %4465
      %4467 = vadd.xlane.f32.xlu0 %v4436
      %v4468 = vpop.xlane.xlu0 %4467
      %4469 = vadd.xlane.f32.xlu0 %v4437
      %v4470 = vpop.xlane.xlu0 %4469
      %4471 = vadd.xlane.f32.xlu0 %v4438
      %v4472 = vpop.xlane.xlu0 %4471
      %4473 = vadd.xlane.f32.xlu0 %v4439
      %v4474 = vpop.xlane.xlu0 %4473
      %4475 = vadd.xlane.f32.xlu0 %v4440
      %v4476 = vpop.xlane.xlu0 %4475
      %4477 = vadd.xlane.f32.xlu0 %v4441
      %v4478 = vpop.xlane.xlu0 %4477
      %4479 = vadd.xlane.f32.xlu0 %v4442
      %v4480 = vpop.xlane.xlu0 %4479
      %4481 = vadd.xlane.f32.xlu0 %v4443
      %v4482 = vpop.xlane.xlu0 %4481
      %4483 = vadd.xlane.f32.xlu0 %v4444
      %v4484 = vpop.xlane.xlu0 %4483
      %4485 = vadd.xlane.f32.xlu0 %v4445
      %v4486 = vpop.xlane.xlu0 %4485
      %4487 = vadd.xlane.f32.xlu0 %v4446
      %v4488 = vpop.xlane.xlu0 %4487
      %4489 = vadd.xlane.f32.xlu0 %v4447
      %v4490 = vpop.xlane.xlu0 %4489
      %4491 = vadd.xlane.f32.xlu0 %v4448
      %v4492 = vpop.xlane.xlu0 %4491
      %4493 = vadd.xlane.f32.xlu0 %v4449
      %v4494 = vpop.xlane.xlu0 %4493
      %4495 = vadd.xlane.f32.xlu0 %v4450
      %v4496 = vpop.xlane.xlu0 %4495
      %4497 = vadd.xlane.f32.xlu0 %v4451
      %v4498 = vpop.xlane.xlu0 %4497
      %4499 = vadd.xlane.f32.xlu0 %v4452
      %v4500 = vpop.xlane.xlu0 %4499
      %v4501 = vmul.f32 %v4454, 0.0625
      %v4502 = vmul.f32 %v4456, 0.0625
      %v4503 = vmul.f32 %v4458, 0.0625
      %v4504 = vmul.f32 %v4460, 0.0625
      %v4505 = vmul.f32 %v4462, 0.0625
      %v4506 = vmul.f32 %v4464, 0.0625
      %v4507 = vmul.f32 %v4466, 0.0625
      %v4508 = vmul.f32 %v4468, 0.0625
      %v4509 = vmul.f32 %v4470, 0.0625
      %v4510 = vmul.f32 %v4472, 0.0625
      %v4511 = vmul.f32 %v4474, 0.0625
      %v4512 = vmul.f32 %v4476, 0.0625
      %v4513 = vmul.f32 %v4478, 0.0625
      %v4514 = vmul.f32 %v4480, 0.0625
      %v4515 = vmul.f32 %v4482, 0.0625
      %v4516 = vmul.f32 %v4484, 0.0625
      %v4517 = vmul.f32 %v4486, 0.0625
      %v4518 = vmul.f32 %v4488, 0.0625
      %v4519 = vmul.f32 %v4490, 0.0625
      %v4520 = vmul.f32 %v4492, 0.0625
      %v4521 = vmul.f32 %v4494, 0.0625
      %v4522 = vmul.f32 %v4496, 0.0625
      %v4523 = vmul.f32 %v4498, 0.0625
      %v4524 = vmul.f32 %v4500, 0.0625
      %v4525 = vadd.f32 %v4501, %v4502
      %v4526 = vrot.slane %v4525, 4
      %v4527 = vadd.f32 %v4525, %v4526
      %v4528 = vrot.slane %v4527, 2
      %v4529 = vadd.f32 %v4527, %v4528
      %v4530 = vrot.slane %v4529, 1
      %v4531 = vadd.f32 %v4529, %v4530
      %v4532 = vadd.f32 %v4503, %v4504
      %v4533 = vrot.slane %v4532, 4
      %v4534 = vadd.f32 %v4532, %v4533
      %v4535 = vrot.slane %v4534, 2
      %v4536 = vadd.f32 %v4534, %v4535
      %v4537 = vrot.slane %v4536, 1
      %v4538 = vadd.f32 %v4536, %v4537
      %v4539 = vadd.f32 %v4505, %v4506
      %v4540 = vrot.slane %v4539, 4
      %v4541 = vadd.f32 %v4539, %v4540
      %v4542 = vrot.slane %v4541, 2
      %v4543 = vadd.f32 %v4541, %v4542
      %v4544 = vrot.slane %v4543, 1
      %v4545 = vadd.f32 %v4543, %v4544
      %v4546 = vmax.f32 %v4531, %v4538
      %v4547 = vmax.f32 %v4546, %v4545
      %v4548 = vsub.f32 %v4531, %v4547
      %v4549 = vmul.f32 %v4548, 1.442695
      %v4550 = vpow.pop %v4549
      %v4551 = vsub.f32 %v4538, %v4547
      %v4552 = vmul.f32 %v4551, 1.442695
      %v4553 = vpow.pop %v4552
      %v4554 = vsub.f32 %v4545, %v4547
      %v4555 = vmul.f32 %v4554, 1.442695
      %v4556 = vpow.pop %v4555
      %v4557 = vadd.f32 %v4550, %v4553
      %v4558 = vadd.f32 %v4557, %v4556
      %v4559 = vrcp.pop %v4558
      %v4560 = vmul.f32 %v4550, %v4559
      %v4561 = vmul.f32 %v4560, %v721
      %v4562 = vmul.f32 %v4560, %v722
      %v4563 = vmul.f32 %v4553, %v4559
      %v4564 = vmul.f32 %v4563, %v1060
      %v4565 = vmul.f32 %v4563, %v1061
      %v4566 = vadd.f32 %v4561, %v4564
      %v4567 = vadd.f32 %v4562, %v4565
      %v4568 = vmul.f32 %v4556, %v4559
      %v4569 = vmul.f32 %v4568, %v1359
      %v4570 = vmul.f32 %v4568, %v1360
      %v4571 = vadd.f32 %v4566, %v4569
      %v4572 = vadd.f32 %v4567, %v4570
      %v4573 = vadd.f32 %v4507, %v4508
      %v4574 = vrot.slane %v4573, 4
      %v4575 = vadd.f32 %v4573, %v4574
      %v4576 = vrot.slane %v4575, 2
      %v4577 = vadd.f32 %v4575, %v4576
      %v4578 = vrot.slane %v4577, 1
      %v4579 = vadd.f32 %v4577, %v4578
      %v4580 = vadd.f32 %v4509, %v4510
      %v4581 = vrot.slane %v4580, 4
      %v4582 = vadd.f32 %v4580, %v4581
      %v4583 = vrot.slane %v4582, 2
      %v4584 = vadd.f32 %v4582, %v4583
      %v4585 = vrot.slane %v4584, 1
      %v4586 = vadd.f32 %v4584, %v4585
      %v4587 = vadd.f32 %v4511, %v4512
      %v4588 = vrot.slane %v4587, 4
      %v4589 = vadd.f32 %v4587, %v4588
      %v4590 = vrot.slane %v4589, 2
      %v4591 = vadd.f32 %v4589, %v4590
      %v4592 = vrot.slane %v4591, 1
      %v4593 = vadd.f32 %v4591, %v4592
      %v4594 = vmax.f32 %v4579, %v4586
      %v4595 = vmax.f32 %v4594, %v4593
      %v4596 = vsub.f32 %v4579, %v4595
      %v4597 = vmul.f32 %v4596, 1.442695
      %v4598 = vpow.pop %v4597
      %v4599 = vsub.f32 %v4586, %v4595
      %v4600 = vmul.f32 %v4599, 1.442695
      %v4601 = vpow.pop %v4600
      %v4602 = vsub.f32 %v4593, %v4595
      %v4603 = vmul.f32 %v4602, 1.442695
      %v4604 = vpow.pop %v4603
      %v4605 = vadd.f32 %v4598, %v4601
      %v4606 = vadd.f32 %v4605, %v4604
      %v4607 = vrcp.pop %v4606
      %v4608 = vmul.f32 %v4598, %v4607
      %v4609 = vmul.f32 %v4608, %v1681
      %v4610 = vmul.f32 %v4608, %v1682
      %v4611 = vmul.f32 %v4601, %v4607
      %v4612 = vmul.f32 %v4611, %v2007
      %v4613 = vmul.f32 %v4611, %v2008
      %v4614 = vadd.f32 %v4609, %v4612
      %v4615 = vadd.f32 %v4610, %v4613
      %v4616 = vmul.f32 %v4604, %v4607
      %v4617 = vmul.f32 %v4616, %v2311
      %v4618 = vmul.f32 %v4616, %v2312
      %v4619 = vadd.f32 %v4614, %v4617
      %v4620 = vadd.f32 %v4615, %v4618
      %v4621 = vadd.f32 %v4513, %v4514
      %v4622 = vrot.slane %v4621, 4
      %v4623 = vadd.f32 %v4621, %v4622
      %v4624 = vrot.slane %v4623, 2
      %v4625 = vadd.f32 %v4623, %v4624
      %v4626 = vrot.slane %v4625, 1
      %v4627 = vadd.f32 %v4625, %v4626
      %v4628 = vadd.f32 %v4515, %v4516
      %v4629 = vrot.slane %v4628, 4
      %v4630 = vadd.f32 %v4628, %v4629
      %v4631 = vrot.slane %v4630, 2
      %v4632 = vadd.f32 %v4630, %v4631
      %v4633 = vrot.slane %v4632, 1
      %v4634 = vadd.f32 %v4632, %v4633
      %v4635 = vadd.f32 %v4517, %v4518
      %v4636 = vrot.slane %v4635, 4
      %v4637 = vadd.f32 %v4635, %v4636
      %v4638 = vrot.slane %v4637, 2
      %v4639 = vadd.f32 %v4637, %v4638
      %v4640 = vrot.slane %v4639, 1
      %v4641 = vadd.f32 %v4639, %v4640
      %v4642 = vmax.f32 %v4627, %v4634
      %v4643 = vmax.f32 %v4642, %v4641
      %v4644 = vsub.f32 %v4627, %v4643
      %v4645 = vmul.f32 %v4644, 1.442695
      %v4646 = vpow.pop %v4645
      %v4647 = vsub.f32 %v4634, %v4643
      %v4648 = vmul.f32 %v4647, 1.442695
      %v4649 = vpow.pop %v4648
      %v4650 = vsub.f32 %v4641, %v4643
      %v4651 = vmul.f32 %v4650, 1.442695
      %v4652 = vpow.pop %v4651
      %v4653 = vadd.f32 %v4646, %v4649
      %v4654 = vadd.f32 %v4653, %v4652
      %v4655 = vrcp.pop %v4654
      %v4656 = vmul.f32 %v4646, %v4655
      %v4657 = vmul.f32 %v4656, %v2633
      %v4658 = vmul.f32 %v4656, %v2634
      %v4659 = vmul.f32 %v4649, %v4655
      %v4660 = vmul.f32 %v4659, %v2959
      %v4661 = vmul.f32 %v4659, %v2960
      %v4662 = vadd.f32 %v4657, %v4660
      %v4663 = vadd.f32 %v4658, %v4661
      %v4664 = vmul.f32 %v4652, %v4655
      %v4665 = vmul.f32 %v4664, %v3263
      %v4666 = vmul.f32 %v4664, %v3264
      %v4667 = vadd.f32 %v4662, %v4665
      %v4668 = vadd.f32 %v4663, %v4666
      %v4669 = vadd.f32 %v4519, %v4520
      %v4670 = vrot.slane %v4669, 4
      %v4671 = vadd.f32 %v4669, %v4670
      %v4672 = vrot.slane %v4671, 2
      %v4673 = vadd.f32 %v4671, %v4672
      %v4674 = vrot.slane %v4673, 1
      %v4675 = vadd.f32 %v4673, %v4674
      %v4676 = vadd.f32 %v4521, %v4522
      %v4677 = vrot.slane %v4676, 4
      %v4678 = vadd.f32 %v4676, %v4677
      %v4679 = vrot.slane %v4678, 2
      %v4680 = vadd.f32 %v4678, %v4679
      %v4681 = vrot.slane %v4680, 1
      %v4682 = vadd.f32 %v4680, %v4681
      %v4683 = vadd.f32 %v4523, %v4524
      %v4684 = vrot.slane %v4683, 4
      %v4685 = vadd.f32 %v4683, %v4684
      %v4686 = vrot.slane %v4685, 2
      %v4687 = vadd.f32 %v4685, %v4686
      %v4688 = vrot.slane %v4687, 1
      %v4689 = vadd.f32 %v4687, %v4688
      %v4690 = vmax.f32 %v4675, %v4682
      %v4691 = vmax.f32 %v4690, %v4689
      %v4692 = vsub.f32 %v4675, %v4691
      %v4693 = vmul.f32 %v4692, 1.442695
      %v4694 = vpow.pop %v4693
      %v4695 = vsub.f32 %v4682, %v4691
      %v4696 = vmul.f32 %v4695, 1.442695
      %v4697 = vpow.pop %v4696
      %v4698 = vsub.f32 %v4689, %v4691
      %v4699 = vmul.f32 %v4698, 1.442695
      %v4700 = vpow.pop %v4699
      %v4701 = vadd.f32 %v4694, %v4697
      %v4702 = vadd.f32 %v4701, %v4700
      %v4703 = vrcp.pop %v4702
      %v4704 = vmul.f32 %v4694, %v4703
      %v4705 = vmul.f32 %v4704, %v3585
      %v4706 = vmul.f32 %v4704, %v3586
      %v4707 = vmul.f32 %v4697, %v4703
      %v4708 = vmul.f32 %v4707, %v3911
      %v4709 = vmul.f32 %v4707, %v3912
      %v4710 = vadd.f32 %v4705, %v4708
      %v4711 = vadd.f32 %v4706, %v4709
      %v4712 = vmul.f32 %v4700, %v4703
      %v4713 = vmul.f32 %v4712, %v4215
      %v4714 = vmul.f32 %v4712, %v4216
      %v4715 = vadd.f32 %v4710, %v4713
      %v4716 = vadd.f32 %v4711, %v4714
      %4719 = vrot.lane.b32.xlu0 %v4619, 32
      %v4720 = vpop.permute.xlu0 %4719
      %4721 = vrot.lane.b32.xlu0 %v4620, 32
      %v4722 = vpop.permute.xlu0 %4721
      %4727 = vrot.lane.b32.xlu0 %v4667, 64
      %v4728 = vpop.permute.xlu0 %4727
      %4729 = vrot.lane.b32.xlu0 %v4668, 64
      %v4730 = vpop.permute.xlu0 %4729
      %4735 = vrot.lane.b32.xlu0 %v4715, 96
      %v4736 = vpop.permute.xlu0 %4735
      %4737 = vrot.lane.b32.xlu0 %v4716, 96
      %v4738 = vpop.permute.xlu0 %4737
      %v4741 = vsel %vm4235, %v4571, %v4720
      %v4742 = vsel %vm4235, %v4572, %v4722
      %vm4743 = vcmask 523264
      %v4744 = vsel %vm4743, %v4741, %v4728
      %v4745 = vsel %vm4743, %v4742, %v4730
      %v4746 = vsel %vm188, %v4744, %v4736
      %v4747 = vsel %vm188, %v4745, %v4738
      %4748 = vst [vmem:[%s143] sm:$0xff] %v4746
      %4749 = vst [vmem:[%s143 + $0x8] sm:$0xff] %v4747
      %p4750 = scmp.lt.s32.totalorder %s13, 3
      %s4751 = scalar_select %p4750, %s13, 3
      %s4752 = smul.addr %s4751, 2
      %s4753 = smul.addr %s4752, 8
      %s4754 = scalar_lea.vmem %s2, %s4753
      // Predicated region
      $region29: #{han_layer_batched.1} parent=27 // pred_check
        %p4755 = pneg %p78
      $region30: #{han_layer_batched.1} parent=27 // pred_check_branch
        %4757 = sbr.rel (%p4755) target = $region32
      $region31: #{han_layer_batched.1} parent=27 // pred_region
        _
      $region32: #{han_layer_batched.1} parent=27 // pred_fallthru
        _
    $region28: #{han_layer_batched.1} parent=5 // pred_fallthru
      _
    %p4758 = scmp.le.s32.totalorder 2, %s8
    // Predicated region
    $region33: #{han_layer_batched.1} parent=5 // pred_check
      %p4759 = pneg %p4758
    $region34: #{han_layer_batched.1} parent=5 // pred_check_branch
      %4761 = sbr.rel (%p4759) target = $region36
    $region35: #{han_layer_batched.1} parent=5 // pred_region
      %s4762 = ssub.s32 %s8, 2
      // Predicated region
      $region37: #{han_layer_batched.1} parent=35 // pred_check
        %p4763 = pneg %p84
      $region38: #{han_layer_batched.1} parent=35 // pred_check_branch
        %4765 = sbr.rel (%p4763) target = $region40
      $region39: #{han_layer_batched.1} parent=35 // pred_region
        %p4766 = scmp.lt.s32.totalorder %s14, 3
        %s4767 = scalar_select %p4766, %s14, 3
        %s4768 = smul.addr %s4767, 2
        %s4769 = smul.addr %s4768, 8
        %s4770 = scalar_lea.vmem %s2, %s4769
      $region40: #{han_layer_batched.1} parent=35 // pred_fallthru
        _
    $region36: #{han_layer_batched.1} parent=5 // pred_fallthru
      _
  $region6: #{han_layer_batched.1} parent=0 // loop_footer
    %s12 = sadd.s32 1, %s8
  $region7: #{han_layer_batched.1} parent=0 // loop_footer_branch
    %7 = sbr.rel target = $region3
  $region8: #{han_layer_batched.1} parent=0 // loop_exit
    _

</llo_original>
